<compile_context>
chip_gen: v7x
topology: tpu7x:2x2x1
jax: 0.10.0
libtpu: 0.0.40
codegen_flags: <defaults>
</compile_context>

<pallas_src>
import jax
import jax.numpy as jnp
import numpy as np
from jax.experimental import pallas as pl
from jax.experimental.pallas import tpu as pltpu


def _make_down_kernel(n, H, W, Cin, Cout):
    H2, W2 = H // 2, W // 2
    Wp = W2 + 2                 # padded row width of the flattened layout
    Q = H2 * Wp                 # rows per conv matmul (incl. discarded pad cols)
    base = Wp + 1               # flat row of padded position (1, 1)

    def kernel(*refs):
        x_ref = refs[0]                       # (H, W, Cin)
        param_refs = refs[1:1 + 4 * n]        # per layer: w(9,Cp,Co), b, scale, shift
        o_ref = refs[1 + 4 * n]               # (Q, Cout)
        acts = list(refs[2 + 4 * n:])         # flattened zero-padded activations

        # Zero the padded activation buffers (borders, inter-row gap columns
        # and the junk tail).  Each buffer is only a few KiB in this layout,
        # so a full clear is a handful of vector stores.
        for a in acts:
            a[...] = jnp.zeros(a.shape, jnp.float32)

        # ---------------- MaxPool2d(kernel=2, stride=2) ----------------
        # W-pool via a sublane-strided pair read; H-pool by splitting the
        # leading (row) axis in two and taking an elementwise max.
        w_even = x_ref[:, pl.ds(0, W2, stride=2), :]          # (H, W2, Cin)
        w_odd = x_ref[:, pl.ds(1, W2, stride=2), :]
        wpool = jnp.maximum(w_even, w_odd).reshape(H2, 2, W2, Cin)
        pooled = jnp.maximum(wpool[:, 0], wpool[:, 1])        # (H2, W2, Cin)

        # Scatter the pooled rows into the flattened zero-padded layout:
        # padded (y, x) -> flat row y*Wp + x.
        for h in range(H2):
            acts[0][base + h * Wp:base + h * Wp + W2, :] = pooled[h]

        # -------- n x (Conv3x3 -> bias -> ReLU -> BatchNorm(eval)) --------
        for i in range(n):
            w_ref, b_ref, s_ref, t_ref = param_refs[4 * i:4 * (i + 1)]
            src = acts[i]                     # (R, Cprev) flattened padded image

            # The (dh, dw) tap of the 3x3 conv is a constant shift of
            # dh*Wp + dw rows in the flattened padded layout, so the conv is
            # 9 accumulated (Q, Cprev) x (Cprev, Cout) MXU matmuls.
            acc = jnp.dot(src[0:Q, :], w_ref[0],
                          preferred_element_type=jnp.float32)
            for tap in range(1, 9):
                dh, dw = divmod(tap, 3)
                shift = dh * Wp + dw
                acc = acc + jnp.dot(src[shift:shift + Q, :], w_ref[tap],
                                    preferred_element_type=jnp.float32)

            acc = jnp.maximum(acc + b_ref[...], 0.0)          # conv bias + ReLU
            acc = acc * s_ref[...] + t_ref[...]               # BatchNorm (eval)

            if i == n - 1:
                o_ref[...] = acc.astype(o_ref.dtype)          # single bulk store
            else:
                nxt = acts[i + 1]
                for h in range(H2):                           # write interior rows
                    nxt[base + h * Wp:base + h * Wp + W2, :] = (
                        acc[h * Wp:h * Wp + W2, :])

    return kernel


def down_pallas(x_nchw, params, n):
    """Forward pass of `Down` (NCHW in, NCHW out)."""
    if n not in (2, 3):
        raise ValueError("n must be 2 or 3")
    x = jnp.transpose(x_nchw, (0, 2, 3, 1)).astype(jnp.float32)   # -> NHWC
    N, H, W, Cin = x.shape
    if H % 2 != 0 or W % 2 != 0:
        raise ValueError("MaxPool2d(2,2) path requires even H and W")
    Cout = params[0]["w"].shape[-1]
    H2, W2 = H // 2, W // 2
    Hp, Wp = H2 + 2, W2 + 2
    Q = H2 * Wp
    R = ((Hp * Wp + 2 + 7) // 8) * 8          # rows of each flattened buffer

    kernel = _make_down_kernel(n, H, W, Cin, Cout)

    in_specs = [pl.BlockSpec((None, H, W, Cin), lambda g: (g, 0, 0, 0))]
    flat_args = [x]
    flops = 0
    for p in params:
        Cprev = p["w"].shape[2]
        w = p["w"].reshape(9, Cprev, Cout)    # tap-major (dh*3+dw, Cprev, Cout)
        in_specs += [
            pl.BlockSpec((9, Cprev, Cout), lambda g: (0, 0, 0)),
            pl.BlockSpec((1, Cout), lambda g: (0, 0)),
            pl.BlockSpec((1, Cout), lambda g: (0, 0)),
            pl.BlockSpec((1, Cout), lambda g: (0, 0)),
        ]
        flat_args += [
            w,
            p["b"].reshape(1, Cout),
            p["scale"].reshape(1, Cout),
            p["shift"].reshape(1, Cout),
        ]
        flops += 2 * N * Q * 9 * Cprev * Cout

    scratch_shapes = [pltpu.VMEM((R, Cin), jnp.float32)]
    scratch_shapes += [pltpu.VMEM((R, Cout), jnp.float32) for _ in range(n - 1)]

    bytes_accessed = int(x.size) * 4 + N * Q * Cout * 4
    bytes_accessed += sum(int(a.size) * 4 for a in flat_args[1:])

    out = pl.pallas_call(
        kernel,
        out_shape=jax.ShapeDtypeStruct((N, Q, Cout), jnp.float32),
        grid_spec=pltpu.PrefetchScalarGridSpec(
            num_scalar_prefetch=0,
            grid=(N,),
            in_specs=in_specs,
            out_specs=pl.BlockSpec((None, Q, Cout), lambda g: (g, 0, 0)),
            scratch_shapes=scratch_shapes,
        ),
        compiler_params=pltpu.CompilerParams(
            dimension_semantics=("parallel",),
            vmem_limit_bytes=32 * 1024 * 1024,
        ),
        cost_estimate=pl.CostEstimate(
            flops=int(flops), transcendentals=0,
            bytes_accessed=int(bytes_accessed)),
    )(*flat_args)

    # flat rows q = h*Wp + w; columns w >= W2 are padding garbage -> drop them.
    out = out.reshape(N, H2, Wp, Cout)[:, :, :W2, :]
    return jnp.transpose(out, (0, 3, 1, 2))   # back to NCHW


def init_params(key, n, in_channels, out_channels):
    """Deterministic synthetic parameters for n ConvBlocks (eval-mode BN folded)."""
    params = []
    cin = in_channels
    eps = 1e-5
    for _ in range(n):
        key, k1, k2, k3, k4, k5, k6 = jax.random.split(key, 7)
        fan_in = cin * 9
        w = jax.random.normal(k1, (3, 3, cin, out_channels), jnp.float32) / np.sqrt(fan_in)
        b = 0.1 * jax.random.normal(k2, (out_channels,), jnp.float32)
        gamma = 1.0 + 0.1 * jax.random.normal(k3, (out_channels,), jnp.float32)
        beta = 0.1 * jax.random.normal(k4, (out_channels,), jnp.float32)
        rmean = 0.1 * jax.random.normal(k5, (out_channels,), jnp.float32)
        rvar = jnp.abs(jax.random.normal(k6, (out_channels,), jnp.float32)) + 0.5
        scale = gamma / jnp.sqrt(rvar + eps)
        shift = beta - rmean * scale
        params.append(dict(w=w, b=b, scale=scale, shift=shift))
        cin = out_channels
    return params


def down_ref(x_nchw, params):
    """Pure-JAX reference for correctness checking."""
    x = jnp.transpose(x_nchw, (0, 2, 3, 1))
    x = jax.lax.reduce_window(x, -jnp.inf, jax.lax.max,
                              (1, 2, 2, 1), (1, 2, 2, 1), "VALID")
    for p in params:
        y = jax.lax.conv_general_dilated(
            x, p["w"], window_strides=(1, 1), padding="SAME",
            dimension_numbers=("NHWC", "HWIO", "NHWC")) + p["b"]
        y = jnp.maximum(y, 0.0)
        x = y * p["scale"] + p["shift"]
    return jnp.transpose(x, (0, 3, 1, 2))


if __name__ == "__main__":
    key = jax.random.PRNGKey(0)
    N, Cin, Cout, H, W = 2, 4, 8, 16, 16

    kx, kp2, kp3 = jax.random.split(key, 3)
    x = jax.random.normal(kx, (N, Cin, H, W), jnp.float32)   # PyTorch NCHW input

    # n = 2 (DoubleConvBlock path)
    params2 = init_params(kp2, 2, Cin, Cout)
    out2 = jax.block_until_ready(down_pallas(x, params2, 2))
    ref2 = down_ref(x, params2)
    assert out2.shape == (N, Cout, H // 2, W // 2), out2.shape
    np.testing.assert_allclose(np.asarray(out2), np.asarray(ref2),
                               atol=1e-4, rtol=1e-4)

    # n = 3 (TripleConvBlock path)
    params3 = init_params(kp3, 3, Cin, Cout)
    out3 = jax.block_until_ready(down_pallas(x, params3, 3))
    ref3 = down_ref(x, params3)
    assert out3.shape == (N, Cout, H // 2, W // 2), out3.shape
    np.testing.assert_allclose(np.asarray(out3), np.asarray(ref3),
                               atol=1e-4, rtol=1e-4)

    print("KERNEL_OK")
</pallas_src>

<mosaic_0001>
module attributes {stable_mosaic.version = 11 : i64} {
  func.func @kernel(%arg0: i32, %arg1: memref<1x16x16x4xf32, #tpu.memory_space<vmem>>, %arg2: memref<9x4x8xf32, #tpu.memory_space<vmem>>, %arg3: memref<1x8xf32, #tpu.memory_space<vmem>>, %arg4: memref<1x8xf32, #tpu.memory_space<vmem>>, %arg5: memref<1x8xf32, #tpu.memory_space<vmem>>, %arg6: memref<9x8x8xf32, #tpu.memory_space<vmem>>, %arg7: memref<1x8xf32, #tpu.memory_space<vmem>>, %arg8: memref<1x8xf32, #tpu.memory_space<vmem>>, %arg9: memref<1x8xf32, #tpu.memory_space<vmem>>, %arg10: memref<1x80x8xf32, #tpu.memory_space<vmem>>, %arg11: memref<104x4xf32, #tpu.memory_space<vmem>>, %arg12: memref<104x8xf32, #tpu.memory_space<vmem>>) attributes {dimension_semantics = [#tpu.dimension_semantics<parallel>], iteration_bounds = array<i64: 2>, scalar_prefetch = 0 : i64, scratch_operands = 2 : i64, tpu.core_type = #tpu.core_type<tc>, window_params = [{transform_indices = @transform_0, window_bounds = array<i64: 1, 16, 16, 4>}, {pipeline_mode = #tpu.pipeline_mode<synchronous>, transform_indices = @transform_1, window_bounds = array<i64: 9, 4, 8>}, {pipeline_mode = #tpu.pipeline_mode<synchronous>, transform_indices = @transform_2, window_bounds = array<i64: 1, 8>}, {pipeline_mode = #tpu.pipeline_mode<synchronous>, transform_indices = @transform_3, window_bounds = array<i64: 1, 8>}, {pipeline_mode = #tpu.pipeline_mode<synchronous>, transform_indices = @transform_4, window_bounds = array<i64: 1, 8>}, {pipeline_mode = #tpu.pipeline_mode<synchronous>, transform_indices = @transform_5, window_bounds = array<i64: 9, 8, 8>}, {pipeline_mode = #tpu.pipeline_mode<synchronous>, transform_indices = @transform_6, window_bounds = array<i64: 1, 8>}, {pipeline_mode = #tpu.pipeline_mode<synchronous>, transform_indices = @transform_7, window_bounds = array<i64: 1, 8>}, {pipeline_mode = #tpu.pipeline_mode<synchronous>, transform_indices = @transform_8, window_bounds = array<i64: 1, 8>}, {transform_indices = @transform_9, window_bounds = array<i64: 1, 80, 8>}]} {
    %cst = arith.constant 0.000000e+00 : f32
    %0 = vector.broadcast %cst : f32 to vector<104x4xf32>
    %c0 = arith.constant 0 : index
    %c0_0 = arith.constant 0 : index
    %1 = vector.load %arg11[%c0, %c0_0] : memref<104x4xf32, #tpu.memory_space<vmem>>, vector<104x4xf32>
    tpu.vector_store %arg11[%c0, %c0_0], %0 {strides = array<i32>} : memref<104x4xf32, #tpu.memory_space<vmem>>, vector<104x4xf32>,
    %cst_1 = arith.constant 0.000000e+00 : f32
    %2 = vector.broadcast %cst_1 : f32 to vector<104x8xf32>
    %c0_2 = arith.constant 0 : index
    %c0_3 = arith.constant 0 : index
    %3 = vector.load %arg12[%c0_2, %c0_3] : memref<104x8xf32, #tpu.memory_space<vmem>>, vector<104x8xf32>
    tpu.vector_store %arg12[%c0_2, %c0_3], %2 {strides = array<i32>} : memref<104x8xf32, #tpu.memory_space<vmem>>, vector<104x8xf32>,
    %c0_4 = arith.constant 0 : index
    %c0_5 = arith.constant 0 : index
    %c0_6 = arith.constant 0 : index
    %c0_7 = arith.constant 0 : index
    %4 = tpu.strided_load %arg1[%c0_4, %c0_5, %c0_6, %c0_7] {strides = array<i32: 1, 1, 2, 1>} : memref<1x16x16x4xf32, #tpu.memory_space<vmem>>, vector<1x16x8x4xf32>
    %5 = vector.shape_cast %4 : vector<1x16x8x4xf32> to vector<16x8x4xf32>
    %c0_8 = arith.constant 0 : index
    %c0_9 = arith.constant 0 : index
    %c1 = arith.constant 1 : index
    %c0_10 = arith.constant 0 : index
    %6 = tpu.strided_load %arg1[%c0_8, %c0_9, %c1, %c0_10] {strides = array<i32: 1, 1, 2, 1>} : memref<1x16x16x4xf32, #tpu.memory_space<vmem>>, vector<1x16x8x4xf32>
    %7 = vector.shape_cast %6 : vector<1x16x8x4xf32> to vector<16x8x4xf32>
    %8 = arith.maximumf %5, %7 : vector<16x8x4xf32>
    %9 = vector.shape_cast %8 : vector<16x8x4xf32> to vector<8x2x8x4xf32>
    %10 = vector.extract_strided_slice %9 {offsets = [0, 0, 0, 0], sizes = [8, 1, 8, 4], strides = [1, 1, 1, 1]} : vector<8x2x8x4xf32> to vector<8x1x8x4xf32>
    %11 = vector.shape_cast %10 : vector<8x1x8x4xf32> to vector<8x8x4xf32>
    %12 = vector.extract_strided_slice %9 {offsets = [0, 1, 0, 0], sizes = [8, 1, 8, 4], strides = [1, 1, 1, 1]} : vector<8x2x8x4xf32> to vector<8x1x8x4xf32>
    %13 = vector.shape_cast %12 : vector<8x1x8x4xf32> to vector<8x8x4xf32>
    %14 = arith.maximumf %11, %13 : vector<8x8x4xf32>
    %15 = vector.extract_strided_slice %14 {offsets = [0, 0, 0], sizes = [1, 8, 4], strides = [1, 1, 1]} : vector<8x8x4xf32> to vector<1x8x4xf32>
    %16 = vector.shape_cast %15 : vector<1x8x4xf32> to vector<8x4xf32>
    %c11 = arith.constant 11 : index
    %c0_11 = arith.constant 0 : index
    %17 = vector.load %arg11[%c11, %c0_11] : memref<104x4xf32, #tpu.memory_space<vmem>>, vector<8x4xf32>
    tpu.vector_store %arg11[%c11, %c0_11], %16 {strides = array<i32>} : memref<104x4xf32, #tpu.memory_space<vmem>>, vector<8x4xf32>,
    %18 = vector.extract_strided_slice %14 {offsets = [1, 0, 0], sizes = [1, 8, 4], strides = [1, 1, 1]} : vector<8x8x4xf32> to vector<1x8x4xf32>
    %19 = vector.shape_cast %18 : vector<1x8x4xf32> to vector<8x4xf32>
    %c21 = arith.constant 21 : index
    %c0_12 = arith.constant 0 : index
    %20 = vector.load %arg11[%c21, %c0_12] : memref<104x4xf32, #tpu.memory_space<vmem>>, vector<8x4xf32>
    tpu.vector_store %arg11[%c21, %c0_12], %19 {strides = array<i32>} : memref<104x4xf32, #tpu.memory_space<vmem>>, vector<8x4xf32>,
    %21 = vector.extract_strided_slice %14 {offsets = [2, 0, 0], sizes = [1, 8, 4], strides = [1, 1, 1]} : vector<8x8x4xf32> to vector<1x8x4xf32>
    %22 = vector.shape_cast %21 : vector<1x8x4xf32> to vector<8x4xf32>
    %c31 = arith.constant 31 : index
    %c0_13 = arith.constant 0 : index
    %23 = vector.load %arg11[%c31, %c0_13] : memref<104x4xf32, #tpu.memory_space<vmem>>, vector<8x4xf32>
    tpu.vector_store %arg11[%c31, %c0_13], %22 {strides = array<i32>} : memref<104x4xf32, #tpu.memory_space<vmem>>, vector<8x4xf32>,
    %24 = vector.extract_strided_slice %14 {offsets = [3, 0, 0], sizes = [1, 8, 4], strides = [1, 1, 1]} : vector<8x8x4xf32> to vector<1x8x4xf32>
    %25 = vector.shape_cast %24 : vector<1x8x4xf32> to vector<8x4xf32>
    %c41 = arith.constant 41 : index
    %c0_14 = arith.constant 0 : index
    %26 = vector.load %arg11[%c41, %c0_14] : memref<104x4xf32, #tpu.memory_space<vmem>>, vector<8x4xf32>
    tpu.vector_store %arg11[%c41, %c0_14], %25 {strides = array<i32>} : memref<104x4xf32, #tpu.memory_space<vmem>>, vector<8x4xf32>,
    %27 = vector.extract_strided_slice %14 {offsets = [4, 0, 0], sizes = [1, 8, 4], strides = [1, 1, 1]} : vector<8x8x4xf32> to vector<1x8x4xf32>
    %28 = vector.shape_cast %27 : vector<1x8x4xf32> to vector<8x4xf32>
    %c51 = arith.constant 51 : index
    %c0_15 = arith.constant 0 : index
    %29 = vector.load %arg11[%c51, %c0_15] : memref<104x4xf32, #tpu.memory_space<vmem>>, vector<8x4xf32>
    tpu.vector_store %arg11[%c51, %c0_15], %28 {strides = array<i32>} : memref<104x4xf32, #tpu.memory_space<vmem>>, vector<8x4xf32>,
    %30 = vector.extract_strided_slice %14 {offsets = [5, 0, 0], sizes = [1, 8, 4], strides = [1, 1, 1]} : vector<8x8x4xf32> to vector<1x8x4xf32>
    %31 = vector.shape_cast %30 : vector<1x8x4xf32> to vector<8x4xf32>
    %c61 = arith.constant 61 : index
    %c0_16 = arith.constant 0 : index
    %32 = vector.load %arg11[%c61, %c0_16] : memref<104x4xf32, #tpu.memory_space<vmem>>, vector<8x4xf32>
    tpu.vector_store %arg11[%c61, %c0_16], %31 {strides = array<i32>} : memref<104x4xf32, #tpu.memory_space<vmem>>, vector<8x4xf32>,
    %33 = vector.extract_strided_slice %14 {offsets = [6, 0, 0], sizes = [1, 8, 4], strides = [1, 1, 1]} : vector<8x8x4xf32> to vector<1x8x4xf32>
    %34 = vector.shape_cast %33 : vector<1x8x4xf32> to vector<8x4xf32>
    %c71 = arith.constant 71 : index
    %c0_17 = arith.constant 0 : index
    %35 = vector.load %arg11[%c71, %c0_17] : memref<104x4xf32, #tpu.memory_space<vmem>>, vector<8x4xf32>
    tpu.vector_store %arg11[%c71, %c0_17], %34 {strides = array<i32>} : memref<104x4xf32, #tpu.memory_space<vmem>>, vector<8x4xf32>,
    %36 = vector.extract_strided_slice %14 {offsets = [7, 0, 0], sizes = [1, 8, 4], strides = [1, 1, 1]} : vector<8x8x4xf32> to vector<1x8x4xf32>
    %37 = vector.shape_cast %36 : vector<1x8x4xf32> to vector<8x4xf32>
    %c81 = arith.constant 81 : index
    %c0_18 = arith.constant 0 : index
    %38 = vector.load %arg11[%c81, %c0_18] : memref<104x4xf32, #tpu.memory_space<vmem>>, vector<8x4xf32>
    tpu.vector_store %arg11[%c81, %c0_18], %37 {strides = array<i32>} : memref<104x4xf32, #tpu.memory_space<vmem>>, vector<8x4xf32>,
    %c0_19 = arith.constant 0 : index
    %c0_20 = arith.constant 0 : index
    %39 = vector.load %arg11[%c0_19, %c0_20] : memref<104x4xf32, #tpu.memory_space<vmem>>, vector<80x4xf32>
    %c0_21 = arith.constant 0 : index
    %c0_22 = arith.constant 0 : index
    %c0_23 = arith.constant 0 : index
    %40 = vector.load %arg2[%c0_21, %c0_22, %c0_23] : memref<9x4x8xf32, #tpu.memory_space<vmem>>, vector<1x4x8xf32>
    %41 = vector.shape_cast %40 : vector<1x4x8xf32> to vector<4x8xf32>
    %cst_24 = arith.constant dense<0.000000e+00> : vector<80x8xf32>
    %42 = tpu.matmul %39, %41, %cst_24 {dimension_numbers = #tpu.dot_dimension_numbers<[1], [0], [0], [1], [0, 0, 1, 1], [], []>} : vector<80x4xf32>, vector<4x8xf32>, vector<80x8xf32> -> vector<80x8xf32>
    %c1_25 = arith.constant 1 : index
    %c0_26 = arith.constant 0 : index
    %43 = vector.load %arg11[%c1_25, %c0_26] : memref<104x4xf32, #tpu.memory_space<vmem>>, vector<80x4xf32>
    %c1_27 = arith.constant 1 : index
    %c0_28 = arith.constant 0 : index
    %c0_29 = arith.constant 0 : index
    %44 = vector.load %arg2[%c1_27, %c0_28, %c0_29] : memref<9x4x8xf32, #tpu.memory_space<vmem>>, vector<1x4x8xf32>
    %45 = vector.shape_cast %44 : vector<1x4x8xf32> to vector<4x8xf32>
    %cst_30 = arith.constant dense<0.000000e+00> : vector<80x8xf32>
    %46 = tpu.matmul %43, %45, %cst_30 {dimension_numbers = #tpu.dot_dimension_numbers<[1], [0], [0], [1], [0, 0, 1, 1], [], []>} : vector<80x4xf32>, vector<4x8xf32>, vector<80x8xf32> -> vector<80x8xf32>
    %47 = arith.addf %42, %46 : vector<80x8xf32>
    %c2 = arith.constant 2 : index
    %c0_31 = arith.constant 0 : index
    %48 = vector.load %arg11[%c2, %c0_31] : memref<104x4xf32, #tpu.memory_space<vmem>>, vector<80x4xf32>
    %c2_32 = arith.constant 2 : index
    %c0_33 = arith.constant 0 : index
    %c0_34 = arith.constant 0 : index
    %49 = vector.load %arg2[%c2_32, %c0_33, %c0_34] : memref<9x4x8xf32, #tpu.memory_space<vmem>>, vector<1x4x8xf32>
    %50 = vector.shape_cast %49 : vector<1x4x8xf32> to vector<4x8xf32>
    %cst_35 = arith.constant dense<0.000000e+00> : vector<80x8xf32>
    %51 = tpu.matmul %48, %50, %cst_35 {dimension_numbers = #tpu.dot_dimension_numbers<[1], [0], [0], [1], [0, 0, 1, 1], [], []>} : vector<80x4xf32>, vector<4x8xf32>, vector<80x8xf32> -> vector<80x8xf32>
    %52 = arith.addf %47, %51 : vector<80x8xf32>
    %c10 = arith.constant 10 : index
    %c0_36 = arith.constant 0 : index
    %53 = vector.load %arg11[%c10, %c0_36] : memref<104x4xf32, #tpu.memory_space<vmem>>, vector<80x4xf32>
    %c3 = arith.constant 3 : index
    %c0_37 = arith.constant 0 : index
    %c0_38 = arith.constant 0 : index
    %54 = vector.load %arg2[%c3, %c0_37, %c0_38] : memref<9x4x8xf32, #tpu.memory_space<vmem>>, vector<1x4x8xf32>
    %55 = vector.shape_cast %54 : vector<1x4x8xf32> to vector<4x8xf32>
    %cst_39 = arith.constant dense<0.000000e+00> : vector<80x8xf32>
    %56 = tpu.matmul %53, %55, %cst_39 {dimension_numbers = #tpu.dot_dimension_numbers<[1], [0], [0], [1], [0, 0, 1, 1], [], []>} : vector<80x4xf32>, vector<4x8xf32>, vector<80x8xf32> -> vector<80x8xf32>
    %57 = arith.addf %52, %56 : vector<80x8xf32>
    %c11_40 = arith.constant 11 : index
    %c0_41 = arith.constant 0 : index
    %58 = vector.load %arg11[%c11_40, %c0_41] : memref<104x4xf32, #tpu.memory_space<vmem>>, vector<80x4xf32>
    %c4 = arith.constant 4 : index
    %c0_42 = arith.constant 0 : index
    %c0_43 = arith.constant 0 : index
    %59 = vector.load %arg2[%c4, %c0_42, %c0_43] : memref<9x4x8xf32, #tpu.memory_space<vmem>>, vector<1x4x8xf32>
    %60 = vector.shape_cast %59 : vector<1x4x8xf32> to vector<4x8xf32>
    %cst_44 = arith.constant dense<0.000000e+00> : vector<80x8xf32>
    %61 = tpu.matmul %58, %60, %cst_44 {dimension_numbers = #tpu.dot_dimension_numbers<[1], [0], [0], [1], [0, 0, 1, 1], [], []>} : vector<80x4xf32>, vector<4x8xf32>, vector<80x8xf32> -> vector<80x8xf32>
    %62 = arith.addf %57, %61 : vector<80x8xf32>
    %c12 = arith.constant 12 : index
    %c0_45 = arith.constant 0 : index
    %63 = vector.load %arg11[%c12, %c0_45] : memref<104x4xf32, #tpu.memory_space<vmem>>, vector<80x4xf32>
    %c5 = arith.constant 5 : index
    %c0_46 = arith.constant 0 : index
    %c0_47 = arith.constant 0 : index
    %64 = vector.load %arg2[%c5, %c0_46, %c0_47] : memref<9x4x8xf32, #tpu.memory_space<vmem>>, vector<1x4x8xf32>
    %65 = vector.shape_cast %64 : vector<1x4x8xf32> to vector<4x8xf32>
    %cst_48 = arith.constant dense<0.000000e+00> : vector<80x8xf32>
    %66 = tpu.matmul %63, %65, %cst_48 {dimension_numbers = #tpu.dot_dimension_numbers<[1], [0], [0], [1], [0, 0, 1, 1], [], []>} : vector<80x4xf32>, vector<4x8xf32>, vector<80x8xf32> -> vector<80x8xf32>
    %67 = arith.addf %62, %66 : vector<80x8xf32>
    %c20 = arith.constant 20 : index
    %c0_49 = arith.constant 0 : index
    %68 = vector.load %arg11[%c20, %c0_49] : memref<104x4xf32, #tpu.memory_space<vmem>>, vector<80x4xf32>
    %c6 = arith.constant 6 : index
    %c0_50 = arith.constant 0 : index
    %c0_51 = arith.constant 0 : index
    %69 = vector.load %arg2[%c6, %c0_50, %c0_51] : memref<9x4x8xf32, #tpu.memory_space<vmem>>, vector<1x4x8xf32>
    %70 = vector.shape_cast %69 : vector<1x4x8xf32> to vector<4x8xf32>
    %cst_52 = arith.constant dense<0.000000e+00> : vector<80x8xf32>
    %71 = tpu.matmul %68, %70, %cst_52 {dimension_numbers = #tpu.dot_dimension_numbers<[1], [0], [0], [1], [0, 0, 1, 1], [], []>} : vector<80x4xf32>, vector<4x8xf32>, vector<80x8xf32> -> vector<80x8xf32>
    %72 = arith.addf %67, %71 : vector<80x8xf32>
    %c21_53 = arith.constant 21 : index
    %c0_54 = arith.constant 0 : index
    %73 = vector.load %arg11[%c21_53, %c0_54] : memref<104x4xf32, #tpu.memory_space<vmem>>, vector<80x4xf32>
    %c7 = arith.constant 7 : index
    %c0_55 = arith.constant 0 : index
    %c0_56 = arith.constant 0 : index
    %74 = vector.load %arg2[%c7, %c0_55, %c0_56] : memref<9x4x8xf32, #tpu.memory_space<vmem>>, vector<1x4x8xf32>
    %75 = vector.shape_cast %74 : vector<1x4x8xf32> to vector<4x8xf32>
    %cst_57 = arith.constant dense<0.000000e+00> : vector<80x8xf32>
    %76 = tpu.matmul %73, %75, %cst_57 {dimension_numbers = #tpu.dot_dimension_numbers<[1], [0], [0], [1], [0, 0, 1, 1], [], []>} : vector<80x4xf32>, vector<4x8xf32>, vector<80x8xf32> -> vector<80x8xf32>
    %77 = arith.addf %72, %76 : vector<80x8xf32>
    %c22 = arith.constant 22 : index
    %c0_58 = arith.constant 0 : index
    %78 = vector.load %arg11[%c22, %c0_58] : memref<104x4xf32, #tpu.memory_space<vmem>>, vector<80x4xf32>
    %c8 = arith.constant 8 : index
    %c0_59 = arith.constant 0 : index
    %c0_60 = arith.constant 0 : index
    %79 = vector.load %arg2[%c8, %c0_59, %c0_60] : memref<9x4x8xf32, #tpu.memory_space<vmem>>, vector<1x4x8xf32>
    %80 = vector.shape_cast %79 : vector<1x4x8xf32> to vector<4x8xf32>
    %cst_61 = arith.constant dense<0.000000e+00> : vector<80x8xf32>
    %81 = tpu.matmul %78, %80, %cst_61 {dimension_numbers = #tpu.dot_dimension_numbers<[1], [0], [0], [1], [0, 0, 1, 1], [], []>} : vector<80x4xf32>, vector<4x8xf32>, vector<80x8xf32> -> vector<80x8xf32>
    %82 = arith.addf %77, %81 : vector<80x8xf32>
    %c0_62 = arith.constant 0 : index
    %c0_63 = arith.constant 0 : index
    %83 = vector.load %arg3[%c0_62, %c0_63] : memref<1x8xf32, #tpu.memory_space<vmem>>, vector<1x8xf32>
    %84 = vector.broadcast %83 : vector<1x8xf32> to vector<80x8xf32>
    %85 = arith.addf %82, %84 : vector<80x8xf32>
    %cst_64 = arith.constant 0.000000e+00 : f32
    %86 = vector.broadcast %cst_64 : f32 to vector<80x8xf32>
    %87 = arith.maximumf %85, %86 : vector<80x8xf32>
    %c0_65 = arith.constant 0 : index
    %c0_66 = arith.constant 0 : index
    %88 = vector.load %arg4[%c0_65, %c0_66] : memref<1x8xf32, #tpu.memory_space<vmem>>, vector<1x8xf32>
    %89 = vector.broadcast %88 : vector<1x8xf32> to vector<80x8xf32>
    %90 = arith.mulf %87, %89 : vector<80x8xf32>
    %c0_67 = arith.constant 0 : index
    %c0_68 = arith.constant 0 : index
    %91 = vector.load %arg5[%c0_67, %c0_68] : memref<1x8xf32, #tpu.memory_space<vmem>>, vector<1x8xf32>
    %92 = vector.broadcast %91 : vector<1x8xf32> to vector<80x8xf32>
    %93 = arith.addf %90, %92 : vector<80x8xf32>
    %94 = vector.extract_strided_slice %93 {offsets = [0, 0], sizes = [8, 8], strides = [1, 1]} : vector<80x8xf32> to vector<8x8xf32>
    %c11_69 = arith.constant 11 : index
    %c0_70 = arith.constant 0 : index
    %95 = vector.load %arg12[%c11_69, %c0_70] : memref<104x8xf32, #tpu.memory_space<vmem>>, vector<8x8xf32>
    tpu.vector_store %arg12[%c11_69, %c0_70], %94 {strides = array<i32>} : memref<104x8xf32, #tpu.memory_space<vmem>>, vector<8x8xf32>,
    %96 = vector.extract_strided_slice %93 {offsets = [10, 0], sizes = [8, 8], strides = [1, 1]} : vector<80x8xf32> to vector<8x8xf32>
    %c21_71 = arith.constant 21 : index
    %c0_72 = arith.constant 0 : index
    %97 = vector.load %arg12[%c21_71, %c0_72] : memref<104x8xf32, #tpu.memory_space<vmem>>, vector<8x8xf32>
    tpu.vector_store %arg12[%c21_71, %c0_72], %96 {strides = array<i32>} : memref<104x8xf32, #tpu.memory_space<vmem>>, vector<8x8xf32>,
    %98 = vector.extract_strided_slice %93 {offsets = [20, 0], sizes = [8, 8], strides = [1, 1]} : vector<80x8xf32> to vector<8x8xf32>
    %c31_73 = arith.constant 31 : index
    %c0_74 = arith.constant 0 : index
    %99 = vector.load %arg12[%c31_73, %c0_74] : memref<104x8xf32, #tpu.memory_space<vmem>>, vector<8x8xf32>
    tpu.vector_store %arg12[%c31_73, %c0_74], %98 {strides = array<i32>} : memref<104x8xf32, #tpu.memory_space<vmem>>, vector<8x8xf32>,
    %100 = vector.extract_strided_slice %93 {offsets = [30, 0], sizes = [8, 8], strides = [1, 1]} : vector<80x8xf32> to vector<8x8xf32>
    %c41_75 = arith.constant 41 : index
    %c0_76 = arith.constant 0 : index
    %101 = vector.load %arg12[%c41_75, %c0_76] : memref<104x8xf32, #tpu.memory_space<vmem>>, vector<8x8xf32>
    tpu.vector_store %arg12[%c41_75, %c0_76], %100 {strides = array<i32>} : memref<104x8xf32, #tpu.memory_space<vmem>>, vector<8x8xf32>,
    %102 = vector.extract_strided_slice %93 {offsets = [40, 0], sizes = [8, 8], strides = [1, 1]} : vector<80x8xf32> to vector<8x8xf32>
    %c51_77 = arith.constant 51 : index
    %c0_78 = arith.constant 0 : index
    %103 = vector.load %arg12[%c51_77, %c0_78] : memref<104x8xf32, #tpu.memory_space<vmem>>, vector<8x8xf32>
    tpu.vector_store %arg12[%c51_77, %c0_78], %102 {strides = array<i32>} : memref<104x8xf32, #tpu.memory_space<vmem>>, vector<8x8xf32>,
    %104 = vector.extract_strided_slice %93 {offsets = [50, 0], sizes = [8, 8], strides = [1, 1]} : vector<80x8xf32> to vector<8x8xf32>
    %c61_79 = arith.constant 61 : index
    %c0_80 = arith.constant 0 : index
    %105 = vector.load %arg12[%c61_79, %c0_80] : memref<104x8xf32, #tpu.memory_space<vmem>>, vector<8x8xf32>
    tpu.vector_store %arg12[%c61_79, %c0_80], %104 {strides = array<i32>} : memref<104x8xf32, #tpu.memory_space<vmem>>, vector<8x8xf32>,
    %106 = vector.extract_strided_slice %93 {offsets = [60, 0], sizes = [8, 8], strides = [1, 1]} : vector<80x8xf32> to vector<8x8xf32>
    %c71_81 = arith.constant 71 : index
    %c0_82 = arith.constant 0 : index
    %107 = vector.load %arg12[%c71_81, %c0_82] : memref<104x8xf32, #tpu.memory_space<vmem>>, vector<8x8xf32>
    tpu.vector_store %arg12[%c71_81, %c0_82], %106 {strides = array<i32>} : memref<104x8xf32, #tpu.memory_space<vmem>>, vector<8x8xf32>,
    %108 = vector.extract_strided_slice %93 {offsets = [70, 0], sizes = [8, 8], strides = [1, 1]} : vector<80x8xf32> to vector<8x8xf32>
    %c81_83 = arith.constant 81 : index
    %c0_84 = arith.constant 0 : index
    %109 = vector.load %arg12[%c81_83, %c0_84] : memref<104x8xf32, #tpu.memory_space<vmem>>, vector<8x8xf32>
    tpu.vector_store %arg12[%c81_83, %c0_84], %108 {strides = array<i32>} : memref<104x8xf32, #tpu.memory_space<vmem>>, vector<8x8xf32>,
    %c0_85 = arith.constant 0 : index
    %c0_86 = arith.constant 0 : index
    %110 = vector.load %arg12[%c0_85, %c0_86] : memref<104x8xf32, #tpu.memory_space<vmem>>, vector<80x8xf32>
    %c0_87 = arith.constant 0 : index
    %c0_88 = arith.constant 0 : index
    %c0_89 = arith.constant 0 : index
    %111 = vector.load %arg6[%c0_87, %c0_88, %c0_89] : memref<9x8x8xf32, #tpu.memory_space<vmem>>, vector<1x8x8xf32>
    %112 = vector.shape_cast %111 : vector<1x8x8xf32> to vector<8x8xf32>
    %cst_90 = arith.constant dense<0.000000e+00> : vector<80x8xf32>
    %113 = tpu.matmul %110, %112, %cst_90 {dimension_numbers = #tpu.dot_dimension_numbers<[1], [0], [0], [1], [0, 0, 1, 1], [], []>} : vector<80x8xf32>, vector<8x8xf32>, vector<80x8xf32> -> vector<80x8xf32>
    %c1_91 = arith.constant 1 : index
    %c0_92 = arith.constant 0 : index
    %114 = vector.load %arg12[%c1_91, %c0_92] : memref<104x8xf32, #tpu.memory_space<vmem>>, vector<80x8xf32>
    %c1_93 = arith.constant 1 : index
    %c0_94 = arith.constant 0 : index
    %c0_95 = arith.constant 0 : index
    %115 = vector.load %arg6[%c1_93, %c0_94, %c0_95] : memref<9x8x8xf32, #tpu.memory_space<vmem>>, vector<1x8x8xf32>
    %116 = vector.shape_cast %115 : vector<1x8x8xf32> to vector<8x8xf32>
    %cst_96 = arith.constant dense<0.000000e+00> : vector<80x8xf32>
    %117 = tpu.matmul %114, %116, %cst_96 {dimension_numbers = #tpu.dot_dimension_numbers<[1], [0], [0], [1], [0, 0, 1, 1], [], []>} : vector<80x8xf32>, vector<8x8xf32>, vector<80x8xf32> -> vector<80x8xf32>
    %118 = arith.addf %113, %117 : vector<80x8xf32>
    %c2_97 = arith.constant 2 : index
    %c0_98 = arith.constant 0 : index
    %119 = vector.load %arg12[%c2_97, %c0_98] : memref<104x8xf32, #tpu.memory_space<vmem>>, vector<80x8xf32>
    %c2_99 = arith.constant 2 : index
    %c0_100 = arith.constant 0 : index
    %c0_101 = arith.constant 0 : index
    %120 = vector.load %arg6[%c2_99, %c0_100, %c0_101] : memref<9x8x8xf32, #tpu.memory_space<vmem>>, vector<1x8x8xf32>
    %121 = vector.shape_cast %120 : vector<1x8x8xf32> to vector<8x8xf32>
    %cst_102 = arith.constant dense<0.000000e+00> : vector<80x8xf32>
    %122 = tpu.matmul %119, %121, %cst_102 {dimension_numbers = #tpu.dot_dimension_numbers<[1], [0], [0], [1], [0, 0, 1, 1], [], []>} : vector<80x8xf32>, vector<8x8xf32>, vector<80x8xf32> -> vector<80x8xf32>
    %123 = arith.addf %118, %122 : vector<80x8xf32>
    %c10_103 = arith.constant 10 : index
    %c0_104 = arith.constant 0 : index
    %124 = vector.load %arg12[%c10_103, %c0_104] : memref<104x8xf32, #tpu.memory_space<vmem>>, vector<80x8xf32>
    %c3_105 = arith.constant 3 : index
    %c0_106 = arith.constant 0 : index
    %c0_107 = arith.constant 0 : index
    %125 = vector.load %arg6[%c3_105, %c0_106, %c0_107] : memref<9x8x8xf32, #tpu.memory_space<vmem>>, vector<1x8x8xf32>
    %126 = vector.shape_cast %125 : vector<1x8x8xf32> to vector<8x8xf32>
    %cst_108 = arith.constant dense<0.000000e+00> : vector<80x8xf32>
    %127 = tpu.matmul %124, %126, %cst_108 {dimension_numbers = #tpu.dot_dimension_numbers<[1], [0], [0], [1], [0, 0, 1, 1], [], []>} : vector<80x8xf32>, vector<8x8xf32>, vector<80x8xf32> -> vector<80x8xf32>
    %128 = arith.addf %123, %127 : vector<80x8xf32>
    %c11_109 = arith.constant 11 : index
    %c0_110 = arith.constant 0 : index
    %129 = vector.load %arg12[%c11_109, %c0_110] : memref<104x8xf32, #tpu.memory_space<vmem>>, vector<80x8xf32>
    %c4_111 = arith.constant 4 : index
    %c0_112 = arith.constant 0 : index
    %c0_113 = arith.constant 0 : index
    %130 = vector.load %arg6[%c4_111, %c0_112, %c0_113] : memref<9x8x8xf32, #tpu.memory_space<vmem>>, vector<1x8x8xf32>
    %131 = vector.shape_cast %130 : vector<1x8x8xf32> to vector<8x8xf32>
    %cst_114 = arith.constant dense<0.000000e+00> : vector<80x8xf32>
    %132 = tpu.matmul %129, %131, %cst_114 {dimension_numbers = #tpu.dot_dimension_numbers<[1], [0], [0], [1], [0, 0, 1, 1], [], []>} : vector<80x8xf32>, vector<8x8xf32>, vector<80x8xf32> -> vector<80x8xf32>
    %133 = arith.addf %128, %132 : vector<80x8xf32>
    %c12_115 = arith.constant 12 : index
    %c0_116 = arith.constant 0 : index
    %134 = vector.load %arg12[%c12_115, %c0_116] : memref<104x8xf32, #tpu.memory_space<vmem>>, vector<80x8xf32>
    %c5_117 = arith.constant 5 : index
    %c0_118 = arith.constant 0 : index
    %c0_119 = arith.constant 0 : index
    %135 = vector.load %arg6[%c5_117, %c0_118, %c0_119] : memref<9x8x8xf32, #tpu.memory_space<vmem>>, vector<1x8x8xf32>
    %136 = vector.shape_cast %135 : vector<1x8x8xf32> to vector<8x8xf32>
    %cst_120 = arith.constant dense<0.000000e+00> : vector<80x8xf32>
    %137 = tpu.matmul %134, %136, %cst_120 {dimension_numbers = #tpu.dot_dimension_numbers<[1], [0], [0], [1], [0, 0, 1, 1], [], []>} : vector<80x8xf32>, vector<8x8xf32>, vector<80x8xf32> -> vector<80x8xf32>
    %138 = arith.addf %133, %137 : vector<80x8xf32>
    %c20_121 = arith.constant 20 : index
    %c0_122 = arith.constant 0 : index
    %139 = vector.load %arg12[%c20_121, %c0_122] : memref<104x8xf32, #tpu.memory_space<vmem>>, vector<80x8xf32>
    %c6_123 = arith.constant 6 : index
    %c0_124 = arith.constant 0 : index
    %c0_125 = arith.constant 0 : index
    %140 = vector.load %arg6[%c6_123, %c0_124, %c0_125] : memref<9x8x8xf32, #tpu.memory_space<vmem>>, vector<1x8x8xf32>
    %141 = vector.shape_cast %140 : vector<1x8x8xf32> to vector<8x8xf32>
    %cst_126 = arith.constant dense<0.000000e+00> : vector<80x8xf32>
    %142 = tpu.matmul %139, %141, %cst_126 {dimension_numbers = #tpu.dot_dimension_numbers<[1], [0], [0], [1], [0, 0, 1, 1], [], []>} : vector<80x8xf32>, vector<8x8xf32>, vector<80x8xf32> -> vector<80x8xf32>
    %143 = arith.addf %138, %142 : vector<80x8xf32>
    %c21_127 = arith.constant 21 : index
    %c0_128 = arith.constant 0 : index
    %144 = vector.load %arg12[%c21_127, %c0_128] : memref<104x8xf32, #tpu.memory_space<vmem>>, vector<80x8xf32>
    %c7_129 = arith.constant 7 : index
    %c0_130 = arith.constant 0 : index
    %c0_131 = arith.constant 0 : index
    %145 = vector.load %arg6[%c7_129, %c0_130, %c0_131] : memref<9x8x8xf32, #tpu.memory_space<vmem>>, vector<1x8x8xf32>
    %146 = vector.shape_cast %145 : vector<1x8x8xf32> to vector<8x8xf32>
    %cst_132 = arith.constant dense<0.000000e+00> : vector<80x8xf32>
    %147 = tpu.matmul %144, %146, %cst_132 {dimension_numbers = #tpu.dot_dimension_numbers<[1], [0], [0], [1], [0, 0, 1, 1], [], []>} : vector<80x8xf32>, vector<8x8xf32>, vector<80x8xf32> -> vector<80x8xf32>
    %148 = arith.addf %143, %147 : vector<80x8xf32>
    %c22_133 = arith.constant 22 : index
    %c0_134 = arith.constant 0 : index
    %149 = vector.load %arg12[%c22_133, %c0_134] : memref<104x8xf32, #tpu.memory_space<vmem>>, vector<80x8xf32>
    %c8_135 = arith.constant 8 : index
    %c0_136 = arith.constant 0 : index
    %c0_137 = arith.constant 0 : index
    %150 = vector.load %arg6[%c8_135, %c0_136, %c0_137] : memref<9x8x8xf32, #tpu.memory_space<vmem>>, vector<1x8x8xf32>
    %151 = vector.shape_cast %150 : vector<1x8x8xf32> to vector<8x8xf32>
    %cst_138 = arith.constant dense<0.000000e+00> : vector<80x8xf32>
    %152 = tpu.matmul %149, %151, %cst_138 {dimension_numbers = #tpu.dot_dimension_numbers<[1], [0], [0], [1], [0, 0, 1, 1], [], []>} : vector<80x8xf32>, vector<8x8xf32>, vector<80x8xf32> -> vector<80x8xf32>
    %153 = arith.addf %148, %152 : vector<80x8xf32>
    %c0_139 = arith.constant 0 : index
    %c0_140 = arith.constant 0 : index
    %154 = vector.load %arg7[%c0_139, %c0_140] : memref<1x8xf32, #tpu.memory_space<vmem>>, vector<1x8xf32>
    %155 = vector.broadcast %154 : vector<1x8xf32> to vector<80x8xf32>
    %156 = arith.addf %153, %155 : vector<80x8xf32>
    %cst_141 = arith.constant 0.000000e+00 : f32
    %157 = vector.broadcast %cst_141 : f32 to vector<80x8xf32>
    %158 = arith.maximumf %156, %157 : vector<80x8xf32>
    %c0_142 = arith.constant 0 : index
    %c0_143 = arith.constant 0 : index
    %159 = vector.load %arg8[%c0_142, %c0_143] : memref<1x8xf32, #tpu.memory_space<vmem>>, vector<1x8xf32>
    %160 = vector.broadcast %159 : vector<1x8xf32> to vector<80x8xf32>
    %161 = arith.mulf %158, %160 : vector<80x8xf32>
    %c0_144 = arith.constant 0 : index
    %c0_145 = arith.constant 0 : index
    %162 = vector.load %arg9[%c0_144, %c0_145] : memref<1x8xf32, #tpu.memory_space<vmem>>, vector<1x8xf32>
    %163 = vector.broadcast %162 : vector<1x8xf32> to vector<80x8xf32>
    %164 = arith.addf %161, %163 : vector<80x8xf32>
    %c0_146 = arith.constant 0 : index
    %c0_147 = arith.constant 0 : index
    %c0_148 = arith.constant 0 : index
    %165 = vector.load %arg10[%c0_146, %c0_147, %c0_148] : memref<1x80x8xf32, #tpu.memory_space<vmem>>, vector<1x80x8xf32>
    %166 = vector.shape_cast %165 : vector<1x80x8xf32> to vector<80x8xf32>
    %167 = vector.shape_cast %164 : vector<80x8xf32> to vector<1x80x8xf32>
    tpu.vector_store %arg10[%c0_146, %c0_147, %c0_148], %167 {strides = array<i32>} : memref<1x80x8xf32, #tpu.memory_space<vmem>>, vector<1x80x8xf32>,
    return
  }
  func.func @transform_0(%arg0: i32) -> (i32, i32, i32, i32) {
    %c0_i32 = arith.constant 0 : i32
    %c0_i32_0 = arith.constant 0 : i32
    %c0_i32_1 = arith.constant 0 : i32
    %c0_i32_2 = arith.constant 0 : i32
    return %arg0, %c0_i32, %c0_i32_0, %c0_i32_1 : i32, i32, i32, i32
  }
  func.func @transform_1(%arg0: i32) -> (i32, i32, i32) {
    %c0_i32 = arith.constant 0 : i32
    %c0_i32_0 = arith.constant 0 : i32
    %c0_i32_1 = arith.constant 0 : i32
    %c0_i32_2 = arith.constant 0 : i32
    return %c0_i32, %c0_i32_0, %c0_i32_1 : i32, i32, i32
  }
  func.func @transform_2(%arg0: i32) -> (i32, i32) {
    %c0_i32 = arith.constant 0 : i32
    %c0_i32_0 = arith.constant 0 : i32
    %c0_i32_1 = arith.constant 0 : i32
    return %c0_i32, %c0_i32_0 : i32, i32
  }
  func.func @transform_3(%arg0: i32) -> (i32, i32) {
    %c0_i32 = arith.constant 0 : i32
    %c0_i32_0 = arith.constant 0 : i32
    %c0_i32_1 = arith.constant 0 : i32
    return %c0_i32, %c0_i32_0 : i32, i32
  }
  func.func @transform_4(%arg0: i32) -> (i32, i32) {
    %c0_i32 = arith.constant 0 : i32
    %c0_i32_0 = arith.constant 0 : i32
    %c0_i32_1 = arith.constant 0 : i32
    return %c0_i32, %c0_i32_0 : i32, i32
  }
  func.func @transform_5(%arg0: i32) -> (i32, i32, i32) {
    %c0_i32 = arith.constant 0 : i32
    %c0_i32_0 = arith.constant 0 : i32
    %c0_i32_1 = arith.constant 0 : i32
    %c0_i32_2 = arith.constant 0 : i32
    return %c0_i32, %c0_i32_0, %c0_i32_1 : i32, i32, i32
  }
  func.func @transform_6(%arg0: i32) -> (i32, i32) {
    %c0_i32 = arith.constant 0 : i32
    %c0_i32_0 = arith.constant 0 : i32
    %c0_i32_1 = arith.constant 0 : i32
    return %c0_i32, %c0_i32_0 : i32, i32
  }
  func.func @transform_7(%arg0: i32) -> (i32, i32) {
    %c0_i32 = arith.constant 0 : i32
    %c0_i32_0 = arith.constant 0 : i32
    %c0_i32_1 = arith.constant 0 : i32
    return %c0_i32, %c0_i32_0 : i32, i32
  }
  func.func @transform_8(%arg0: i32) -> (i32, i32) {
    %c0_i32 = arith.constant 0 : i32
    %c0_i32_0 = arith.constant 0 : i32
    %c0_i32_1 = arith.constant 0 : i32
    return %c0_i32, %c0_i32_0 : i32, i32
  }
  func.func @transform_9(%arg0: i32) -> (i32, i32, i32) {
    %c0_i32 = arith.constant 0 : i32
    %c0_i32_0 = arith.constant 0 : i32
    %c0_i32_1 = arith.constant 0 : i32
    return %arg0, %c0_i32, %c0_i32_0 : i32, i32, i32
  }
}

</mosaic_0001>

<llo_original>
// kernel: tpu_custom_call.1
$region0: #{tpu_custom_call.1}
  #allocation0 [shape = 'u32[]', space=smem, size = 0x4, offset = 0x4, fixed_abs, tag = 'smem constant byte address 0x4 - core index']
  #allocation1 [shape = 'u32[144,128]{1,0:T(1,128)}', space=vmem, size = 0x12000, scoped, tag = 'internal scratch']
  #allocation2 [shape = 'f32[104,4]{1,0:T(8,128)}', space=vmem, size = 0xd000, scoped, tag = 'scratch operand']
  #allocation3 [shape = 'f32[104,8]{1,0:T(8,128)}', space=vmem, size = 0xd000, scoped, tag = 'scratch operand']
  %s0 = inlined_call_operand.vmem [shape: f32[2,16,16,4], index: 0, kind: input, shape index: {}]
  %s1 = inlined_call_operand.vmem [shape: f32[9,4,8], index: 1, kind: input, shape index: {}]
  %s2 = inlined_call_operand.vmem [shape: f32[1,8], index: 2, kind: input, shape index: {}]
  %s3 = inlined_call_operand.vmem [shape: f32[1,8], index: 3, kind: input, shape index: {}]
  %s4 = inlined_call_operand.vmem [shape: f32[1,8], index: 4, kind: input, shape index: {}]
  %s5 = inlined_call_operand.vmem [shape: f32[9,8,8], index: 5, kind: input, shape index: {}]
  %s6 = inlined_call_operand.vmem [shape: f32[1,8], index: 6, kind: input, shape index: {}]
  %s7 = inlined_call_operand.vmem [shape: f32[1,8], index: 7, kind: input, shape index: {}]
  %s8 = inlined_call_operand.vmem [shape: f32[1,8], index: 8, kind: input, shape index: {}]
  %s9 = inlined_call_operand.vmem [shape: f32[2,80,8], index: 9, kind: output, shape index: {}]
  %s10 = sld [smem:[#allocation0]]
  $region69: #{tpu_custom_call.1} parent=0
    _
  %s12 = ssub.s32 1, %s10
  %s13 = scalar_select 0, %s12, %s10
  loop: start=0, step=1, limit=4
  $region2: #{tpu_custom_call.1} parent=0 // loop_pre_header
    _
  $region3: #{tpu_custom_call.1} parent=0 // loop_header
    %s15 = sphi 0, %s19
    %p16 = scmp.ge.s32.totalorder %s15, 4
    %s25 = sphi 0, %s27
    %s28 = sphi 0, %s25
    %s29 = sphi 0, %s28
    %s45 = sphi 0, %s29
    %s49 = sphi 0, %s49
    %s51 = sphi 0, %s49
    %s52 = sphi 0, %s51
    %s66 = sphi 0, %s52
    %s70 = sphi 0, %s70
    %s72 = sphi 0, %s70
    %s73 = sphi 0, %s72
    %s87 = sphi 0, %s73
    %s91 = sphi 0, %s91
    %s93 = sphi 0, %s91
    %s94 = sphi 0, %s93
    %s108 = sphi 0, %s94
    %s112 = sphi 0, %s112
    %s114 = sphi 0, %s112
    %s115 = sphi 0, %s114
    %s129 = sphi 0, %s115
    %s133 = sphi 0, %s133
    %s135 = sphi 0, %s133
    %s136 = sphi 0, %s135
    %s150 = sphi 0, %s136
    %s154 = sphi 0, %s154
    %s156 = sphi 0, %s154
    %s157 = sphi 0, %s156
    %s171 = sphi 0, %s157
    %s175 = sphi 0, %s175
    %s177 = sphi 0, %s175
    %s178 = sphi 0, %s177
    %s192 = sphi 0, %s178
    %s196 = sphi 0, %s196
    %s198 = sphi 0, %s196
    %s199 = sphi 0, %s198
    %s213 = sphi 0, %s199
    %s219 = sphi 0, %s221
    %s222 = sphi 0, %s219
    %s223 = sphi 0, %s222
    %s239 = sphi 0, %s223
  $region4: #{tpu_custom_call.1} parent=0 // loop_header_branch
    %18 = sbr.rel (%p16) target = $region8
  $region5: #{tpu_custom_call.1} parent=0 // loop_body
    %s20 = ssub.s32 %s15, 1
    %s21 = ssub.s32 %s15, 2
    %s22 = sadd.s32 %s15, 1
    %s23 = ssub.s32 %s15, %s22
    %p24 = scmp.eq.s32.totalorder %s23, 0
    %s26 = sadd.s32 %s25, 1
    %s27 = scalar_select %p24, %s25, %s26
    %p30 = pneg %p24
    %p31 = scmp.eq.s32.totalorder %s15, 1
    %p32 = por %p30, %p31
    %p33 = scmp.ne.s32.totalorder %s25, %s28
    %p34 = scmp.eq.s32.totalorder %s15, 0
    %p35 = por %p33, %p34
    %p36 = scmp.ne.s32.totalorder %s25, %s28
    %p37 = scmp.eq.s32.totalorder %s20, 1
    %p38 = por %p36, %p37
    %p39 = scmp.ne.s32.totalorder %s28, %s29
    %p40 = scmp.eq.s32.totalorder %s20, 0
    %p41 = por %p39, %p40
    %p42 = scmp.ne.s32.totalorder %s28, %s29
    %p43 = scmp.eq.s32.totalorder %s21, 1
    %p44 = por %p42, %p43
    %p46 = scmp.ne.s32.totalorder %s29, %s45
    %p47 = scmp.eq.s32.totalorder %s21, 0
    %p48 = por %p46, %p47
    %s50 = sadd.s32 %s49, 1
    %p53 = scmp.eq.s32.totalorder %s15, 1
    %p54 = scmp.ne.s32.totalorder %s49, %s51
    %p55 = scmp.eq.s32.totalorder %s15, 0
    %p56 = por %p54, %p55
    %p57 = scmp.ne.s32.totalorder %s49, %s51
    %p58 = scmp.eq.s32.totalorder %s20, 1
    %p59 = por %p57, %p58
    %p60 = scmp.ne.s32.totalorder %s51, %s52
    %p61 = scmp.eq.s32.totalorder %s20, 0
    %p62 = por %p60, %p61
    %p63 = scmp.ne.s32.totalorder %s51, %s52
    %p64 = scmp.eq.s32.totalorder %s21, 1
    %p65 = por %p63, %p64
    %p67 = scmp.ne.s32.totalorder %s52, %s66
    %p68 = scmp.eq.s32.totalorder %s21, 0
    %p69 = por %p67, %p68
    %s71 = sadd.s32 %s70, 1
    %p74 = scmp.eq.s32.totalorder %s15, 1
    %p75 = scmp.ne.s32.totalorder %s70, %s72
    %p76 = scmp.eq.s32.totalorder %s15, 0
    %p77 = por %p75, %p76
    %p78 = scmp.ne.s32.totalorder %s70, %s72
    %p79 = scmp.eq.s32.totalorder %s20, 1
    %p80 = por %p78, %p79
    %p81 = scmp.ne.s32.totalorder %s72, %s73
    %p82 = scmp.eq.s32.totalorder %s20, 0
    %p83 = por %p81, %p82
    %p84 = scmp.ne.s32.totalorder %s72, %s73
    %p85 = scmp.eq.s32.totalorder %s21, 1
    %p86 = por %p84, %p85
    %p88 = scmp.ne.s32.totalorder %s73, %s87
    %p89 = scmp.eq.s32.totalorder %s21, 0
    %p90 = por %p88, %p89
    %s92 = sadd.s32 %s91, 1
    %p95 = scmp.eq.s32.totalorder %s15, 1
    %p96 = scmp.ne.s32.totalorder %s91, %s93
    %p97 = scmp.eq.s32.totalorder %s15, 0
    %p98 = por %p96, %p97
    %p99 = scmp.ne.s32.totalorder %s91, %s93
    %p100 = scmp.eq.s32.totalorder %s20, 1
    %p101 = por %p99, %p100
    %p102 = scmp.ne.s32.totalorder %s93, %s94
    %p103 = scmp.eq.s32.totalorder %s20, 0
    %p104 = por %p102, %p103
    %p105 = scmp.ne.s32.totalorder %s93, %s94
    %p106 = scmp.eq.s32.totalorder %s21, 1
    %p107 = por %p105, %p106
    %p109 = scmp.ne.s32.totalorder %s94, %s108
    %p110 = scmp.eq.s32.totalorder %s21, 0
    %p111 = por %p109, %p110
    %s113 = sadd.s32 %s112, 1
    %p116 = scmp.eq.s32.totalorder %s15, 1
    %p117 = scmp.ne.s32.totalorder %s112, %s114
    %p118 = scmp.eq.s32.totalorder %s15, 0
    %p119 = por %p117, %p118
    %p120 = scmp.ne.s32.totalorder %s112, %s114
    %p121 = scmp.eq.s32.totalorder %s20, 1
    %p122 = por %p120, %p121
    %p123 = scmp.ne.s32.totalorder %s114, %s115
    %p124 = scmp.eq.s32.totalorder %s20, 0
    %p125 = por %p123, %p124
    %p126 = scmp.ne.s32.totalorder %s114, %s115
    %p127 = scmp.eq.s32.totalorder %s21, 1
    %p128 = por %p126, %p127
    %p130 = scmp.ne.s32.totalorder %s115, %s129
    %p131 = scmp.eq.s32.totalorder %s21, 0
    %p132 = por %p130, %p131
    %s134 = sadd.s32 %s133, 1
    %p137 = scmp.eq.s32.totalorder %s15, 1
    %p138 = scmp.ne.s32.totalorder %s133, %s135
    %p139 = scmp.eq.s32.totalorder %s15, 0
    %p140 = por %p138, %p139
    %p141 = scmp.ne.s32.totalorder %s133, %s135
    %p142 = scmp.eq.s32.totalorder %s20, 1
    %p143 = por %p141, %p142
    %p144 = scmp.ne.s32.totalorder %s135, %s136
    %p145 = scmp.eq.s32.totalorder %s20, 0
    %p146 = por %p144, %p145
    %p147 = scmp.ne.s32.totalorder %s135, %s136
    %p148 = scmp.eq.s32.totalorder %s21, 1
    %p149 = por %p147, %p148
    %p151 = scmp.ne.s32.totalorder %s136, %s150
    %p152 = scmp.eq.s32.totalorder %s21, 0
    %p153 = por %p151, %p152
    %s155 = sadd.s32 %s154, 1
    %p158 = scmp.eq.s32.totalorder %s15, 1
    %p159 = scmp.ne.s32.totalorder %s154, %s156
    %p160 = scmp.eq.s32.totalorder %s15, 0
    %p161 = por %p159, %p160
    %p162 = scmp.ne.s32.totalorder %s154, %s156
    %p163 = scmp.eq.s32.totalorder %s20, 1
    %p164 = por %p162, %p163
    %p165 = scmp.ne.s32.totalorder %s156, %s157
    %p166 = scmp.eq.s32.totalorder %s20, 0
    %p167 = por %p165, %p166
    %p168 = scmp.ne.s32.totalorder %s156, %s157
    %p169 = scmp.eq.s32.totalorder %s21, 1
    %p170 = por %p168, %p169
    %p172 = scmp.ne.s32.totalorder %s157, %s171
    %p173 = scmp.eq.s32.totalorder %s21, 0
    %p174 = por %p172, %p173
    %s176 = sadd.s32 %s175, 1
    %p179 = scmp.eq.s32.totalorder %s15, 1
    %p180 = scmp.ne.s32.totalorder %s175, %s177
    %p181 = scmp.eq.s32.totalorder %s15, 0
    %p182 = por %p180, %p181
    %p183 = scmp.ne.s32.totalorder %s175, %s177
    %p184 = scmp.eq.s32.totalorder %s20, 1
    %p185 = por %p183, %p184
    %p186 = scmp.ne.s32.totalorder %s177, %s178
    %p187 = scmp.eq.s32.totalorder %s20, 0
    %p188 = por %p186, %p187
    %p189 = scmp.ne.s32.totalorder %s177, %s178
    %p190 = scmp.eq.s32.totalorder %s21, 1
    %p191 = por %p189, %p190
    %p193 = scmp.ne.s32.totalorder %s178, %s192
    %p194 = scmp.eq.s32.totalorder %s21, 0
    %p195 = por %p193, %p194
    %s197 = sadd.s32 %s196, 1
    %p200 = scmp.eq.s32.totalorder %s15, 1
    %p201 = scmp.ne.s32.totalorder %s196, %s198
    %p202 = scmp.eq.s32.totalorder %s15, 0
    %p203 = por %p201, %p202
    %p204 = scmp.ne.s32.totalorder %s196, %s198
    %p205 = scmp.eq.s32.totalorder %s20, 1
    %p206 = por %p204, %p205
    %p207 = scmp.ne.s32.totalorder %s198, %s199
    %p208 = scmp.eq.s32.totalorder %s20, 0
    %p209 = por %p207, %p208
    %p210 = scmp.ne.s32.totalorder %s198, %s199
    %p211 = scmp.eq.s32.totalorder %s21, 1
    %p212 = por %p210, %p211
    %p214 = scmp.ne.s32.totalorder %s199, %s213
    %p215 = scmp.eq.s32.totalorder %s21, 0
    %p216 = por %p214, %p215
    %s217 = ssub.s32 %s15, %s22
    %p218 = scmp.eq.s32.totalorder %s217, 0
    %s220 = sadd.s32 %s219, 1
    %s221 = scalar_select %p218, %s219, %s220
    %p224 = pneg %p218
    %p225 = scmp.eq.s32.totalorder %s15, 1
    %p226 = por %p224, %p225
    %p227 = scmp.ne.s32.totalorder %s219, %s222
    %p228 = scmp.eq.s32.totalorder %s15, 0
    %p229 = por %p227, %p228
    %p230 = scmp.ne.s32.totalorder %s219, %s222
    %p231 = scmp.eq.s32.totalorder %s20, 1
    %p232 = por %p230, %p231
    %p233 = scmp.ne.s32.totalorder %s222, %s223
    %p234 = scmp.eq.s32.totalorder %s20, 0
    %p235 = por %p233, %p234
    %p236 = scmp.ne.s32.totalorder %s222, %s223
    %p237 = scmp.eq.s32.totalorder %s21, 1
    %p238 = por %p236, %p237
    %p240 = scmp.ne.s32.totalorder %s223, %s239
    %p241 = scmp.eq.s32.totalorder %s21, 0
    %p242 = por %p240, %p241
    %p243 = scmp.le.s32.totalorder 1, %s15
    %p244 = scmp.lt.s32.totalorder %s15, 3
    %p245 = pnand %p243, %p244
    %p246 = pneg %p245
    // Predicated region
    $region9: #{tpu_custom_call.1} parent=5 // pred_check
      _
    $region10: #{tpu_custom_call.1} parent=5 // pred_check_branch
      %248 = sbr.rel (%p245) target = $region12
    $region11: #{tpu_custom_call.1} parent=5 // pred_region
      %s249 = ssub.s32 %s15, 1
      // Predicated region
      $region13: #{tpu_custom_call.1} parent=11 // pred_check
        %p250 = pneg %p62
      $region14: #{tpu_custom_call.1} parent=11 // pred_check_branch
        %252 = sbr.rel (%p250) target = $region16
      $region15: #{tpu_custom_call.1} parent=11 // pred_region
        _
      $region16: #{tpu_custom_call.1} parent=11 // pred_fallthru
        _
      // Predicated region
      $region17: #{tpu_custom_call.1} parent=11 // pred_check
        %p253 = pneg %p83
      $region18: #{tpu_custom_call.1} parent=11 // pred_check_branch
        %255 = sbr.rel (%p253) target = $region20
      $region19: #{tpu_custom_call.1} parent=11 // pred_region
        _
      $region20: #{tpu_custom_call.1} parent=11 // pred_fallthru
        _
      // Predicated region
      $region21: #{tpu_custom_call.1} parent=11 // pred_check
        %p256 = pneg %p104
      $region22: #{tpu_custom_call.1} parent=11 // pred_check_branch
        %258 = sbr.rel (%p256) target = $region24
      $region23: #{tpu_custom_call.1} parent=11 // pred_region
        _
      $region24: #{tpu_custom_call.1} parent=11 // pred_fallthru
        _
      // Predicated region
      $region25: #{tpu_custom_call.1} parent=11 // pred_check
        %p259 = pneg %p125
      $region26: #{tpu_custom_call.1} parent=11 // pred_check_branch
        %261 = sbr.rel (%p259) target = $region28
      $region27: #{tpu_custom_call.1} parent=11 // pred_region
        _
      $region28: #{tpu_custom_call.1} parent=11 // pred_fallthru
        _
      // Predicated region
      $region29: #{tpu_custom_call.1} parent=11 // pred_check
        %p262 = pneg %p146
      $region30: #{tpu_custom_call.1} parent=11 // pred_check_branch
        %264 = sbr.rel (%p262) target = $region32
      $region31: #{tpu_custom_call.1} parent=11 // pred_region
        _
      $region32: #{tpu_custom_call.1} parent=11 // pred_fallthru
        _
      // Predicated region
      $region33: #{tpu_custom_call.1} parent=11 // pred_check
        %p265 = pneg %p167
      $region34: #{tpu_custom_call.1} parent=11 // pred_check_branch
        %267 = sbr.rel (%p265) target = $region36
      $region35: #{tpu_custom_call.1} parent=11 // pred_region
        _
      $region36: #{tpu_custom_call.1} parent=11 // pred_fallthru
        _
      // Predicated region
      $region37: #{tpu_custom_call.1} parent=11 // pred_check
        %p268 = pneg %p188
      $region38: #{tpu_custom_call.1} parent=11 // pred_check_branch
        %270 = sbr.rel (%p268) target = $region40
      $region39: #{tpu_custom_call.1} parent=11 // pred_region
        _
      $region40: #{tpu_custom_call.1} parent=11 // pred_fallthru
        _
      // Predicated region
      $region41: #{tpu_custom_call.1} parent=11 // pred_check
        %p271 = pneg %p209
      $region42: #{tpu_custom_call.1} parent=11 // pred_check_branch
        %273 = sbr.rel (%p271) target = $region44
      $region43: #{tpu_custom_call.1} parent=11 // pred_region
        _
      $region44: #{tpu_custom_call.1} parent=11 // pred_fallthru
        _
    $region12: #{tpu_custom_call.1} parent=5 // pred_fallthru
      _
    %p274 = scmp.lt.s32.totalorder %s15, 2
    // Predicated region
    $region45: #{tpu_custom_call.1} parent=5 // pred_check
      %p275 = pneg %p274
    $region46: #{tpu_custom_call.1} parent=5 // pred_check_branch
      %277 = sbr.rel (%p275) target = $region48
    $region47: #{tpu_custom_call.1} parent=5 // pred_region
      // Predicated region
      $region49: #{tpu_custom_call.1} parent=47 // pred_check
        %p278 = pneg %p35
      $region50: #{tpu_custom_call.1} parent=47 // pred_check_branch
        %280 = sbr.rel (%p278) target = $region52
      $region51: #{tpu_custom_call.1} parent=47 // pred_region
        %p281 = scmp.lt.s32.totalorder %s15, 1
        %s282 = scalar_select %p281, %s15, 1
        %s283 = smul.addr %s282, 32
        %s284 = smul.addr %s283, 8
        %s285 = scalar_lea.vmem %s0, %s284
      $region52: #{tpu_custom_call.1} parent=47 // pred_fallthru
        _
    $region48: #{tpu_custom_call.1} parent=5 // pred_fallthru
      _
    %p286 = scmp.le.s32.totalorder 1, %s15
    %p287 = scmp.lt.s32.totalorder %s15, 3
    %p288 = pnand %p286, %p287
    %p289 = pneg %p288
    // Predicated region
    $region53: #{tpu_custom_call.1} parent=5 // pred_check
      _
    $region54: #{tpu_custom_call.1} parent=5 // pred_check_branch
      %291 = sbr.rel (%p288) target = $region56
    $region55: #{tpu_custom_call.1} parent=5 // pred_region
      %s292 = ssub.s32 %s15, 1
      %p293 = scmp.lt.s32.totalorder %s20, 1
      %s294 = scalar_select %p293, %s20, 1
      %s295 = smul.addr %s294, 32
      %s296 = smul.addr %s295, 8
      %s297 = scalar_lea.vmem %s0, %s296
      %p298 = pneg %p41
      %p299 = pneg %p38
      %p300 = pneg %p62
      %p301 = pneg %p59
      %p302 = pneg %p83
      %p303 = pneg %p80
      %p304 = pneg %p104
      %p305 = pneg %p101
      %p306 = pneg %p125
      %p307 = pneg %p122
      %p308 = pneg %p146
      %p309 = pneg %p143
      %p310 = pneg %p167
      %p311 = pneg %p164
      %p312 = pneg %p188
      %p313 = pneg %p185
      %p314 = pneg %p209
      %p315 = pneg %p206
      %p316 = pneg %p235
      %p317 = pneg %p232
      %p318 = scmp.lt.s32.totalorder %s20, 1
      %s319 = scalar_select %p318, %s20, 1
      %s320 = smul.addr %s319, 10
      %s321 = smul.addr %s320, 8
      %s322 = scalar_lea.vmem %s9, %s321
      %p323 = scmp.lt.s32.totalorder %s20, 1
      %s324 = scalar_select %p323, %s20, 1
      %s325 = smul.addr %s324, 32
      %s326 = smul.addr %s325, 8
      %s327 = scalar_lea.vmem %s0, %s326
      %p328 = scmp.lt.s32.totalorder %s20, 1
      %s329 = scalar_select %p328, %s20, 1
      %s330 = smul.addr %s329, 10
      %s331 = smul.addr %s330, 8
      %s332 = scalar_lea.vmem %s9, %s331
      %vm333 = vcmask 31744
      %334 = vst.msk [vmem:[#allocation2] sm:$0xff] %vm333, 0.0
      %335 = vst.msk [vmem:[#allocation2 + $0x8] sm:$0xff] %vm333, 0.0
      %336 = vst.msk [vmem:[#allocation2 + $0x10] sm:$0xff] %vm333, 0.0
      %337 = vst.msk [vmem:[#allocation2 + $0x18] sm:$0xff] %vm333, 0.0
      %338 = vst.msk [vmem:[#allocation2 + $0x20] sm:$0xff] %vm333, 0.0
      %339 = vst.msk [vmem:[#allocation2 + $0x28] sm:$0xff] %vm333, 0.0
      %340 = vst.msk [vmem:[#allocation2 + $0x30] sm:$0xff] %vm333, 0.0
      %341 = vst.msk [vmem:[#allocation2 + $0x38] sm:$0xff] %vm333, 0.0
      %342 = vst.msk [vmem:[#allocation2 + $0x40] sm:$0xff] %vm333, 0.0
      %343 = vst.msk [vmem:[#allocation2 + $0x48] sm:$0xff] %vm333, 0.0
      %344 = vst.msk [vmem:[#allocation2 + $0x50] sm:$0xff] %vm333, 0.0
      %345 = vst.msk [vmem:[#allocation2 + $0x58] sm:$0xff] %vm333, 0.0
      %346 = vst.msk [vmem:[#allocation2 + $0x60] sm:$0xff] %vm333, 0.0
      %vm347 = vcmask 64512
      %348 = vst.msk [vmem:[#allocation3] sm:$0xff] %vm347, 0.0
      %349 = vst.msk [vmem:[#allocation3 + $0x8] sm:$0xff] %vm347, 0.0
      %350 = vst.msk [vmem:[#allocation3 + $0x10] sm:$0xff] %vm347, 0.0
      %351 = vst.msk [vmem:[#allocation3 + $0x18] sm:$0xff] %vm347, 0.0
      %352 = vst.msk [vmem:[#allocation3 + $0x20] sm:$0xff] %vm347, 0.0
      %353 = vst.msk [vmem:[#allocation3 + $0x28] sm:$0xff] %vm347, 0.0
      %354 = vst.msk [vmem:[#allocation3 + $0x30] sm:$0xff] %vm347, 0.0
      %355 = vst.msk [vmem:[#allocation3 + $0x38] sm:$0xff] %vm347, 0.0
      %356 = vst.msk [vmem:[#allocation3 + $0x40] sm:$0xff] %vm347, 0.0
      %357 = vst.msk [vmem:[#allocation3 + $0x48] sm:$0xff] %vm347, 0.0
      %358 = vst.msk [vmem:[#allocation3 + $0x50] sm:$0xff] %vm347, 0.0
      %359 = vst.msk [vmem:[#allocation3 + $0x58] sm:$0xff] %vm347, 0.0
      %360 = vst.msk [vmem:[#allocation3 + $0x60] sm:$0xff] %vm347, 0.0
      %v361 = vld [vmem:[%s327] ss:$2 sm:$0xff]
      %s362 = scalar_lea.vmem %s327, 16
      %v363 = vld [vmem:[%s362] ss:$2 sm:$0xff]
      %s364 = scalar_lea.vmem %s327, 32
      %v365 = vld [vmem:[%s364] ss:$2 sm:$0xff]
      %s366 = scalar_lea.vmem %s327, 48
      %v367 = vld [vmem:[%s366] ss:$2 sm:$0xff]
      %s368 = scalar_lea.vmem %s327, 64
      %v369 = vld [vmem:[%s368] ss:$2 sm:$0xff]
      %s370 = scalar_lea.vmem %s327, 80
      %v371 = vld [vmem:[%s370] ss:$2 sm:$0xff]
      %s372 = scalar_lea.vmem %s327, 96
      %v373 = vld [vmem:[%s372] ss:$2 sm:$0xff]
      %s374 = scalar_lea.vmem %s327, 112
      %v375 = vld [vmem:[%s374] ss:$2 sm:$0xff]
      %s376 = scalar_lea.vmem %s327, 128
      %v377 = vld [vmem:[%s376] ss:$2 sm:$0xff]
      %s378 = scalar_lea.vmem %s327, 144
      %v379 = vld [vmem:[%s378] ss:$2 sm:$0xff]
      %s380 = scalar_lea.vmem %s327, 160
      %v381 = vld [vmem:[%s380] ss:$2 sm:$0xff]
      %s382 = scalar_lea.vmem %s327, 176
      %v383 = vld [vmem:[%s382] ss:$2 sm:$0xff]
      %s384 = scalar_lea.vmem %s327, 192
      %v385 = vld [vmem:[%s384] ss:$2 sm:$0xff]
      %s386 = scalar_lea.vmem %s327, 208
      %v387 = vld [vmem:[%s386] ss:$2 sm:$0xff]
      %s388 = scalar_lea.vmem %s327, 224
      %v389 = vld [vmem:[%s388] ss:$2 sm:$0xff]
      %s390 = scalar_lea.vmem %s327, 240
      %v391 = vld [vmem:[%s390] ss:$2 sm:$0xff]
      %s392 = scalar_lea.vmem %s327, 1
      %v393 = vld [vmem:[%s392] ss:$2 sm:$0xff]
      %s394 = scalar_lea.vmem %s327, 17
      %v395 = vld [vmem:[%s394] ss:$2 sm:$0xff]
      %s396 = scalar_lea.vmem %s327, 33
      %v397 = vld [vmem:[%s396] ss:$2 sm:$0xff]
      %s398 = scalar_lea.vmem %s327, 49
      %v399 = vld [vmem:[%s398] ss:$2 sm:$0xff]
      %s400 = scalar_lea.vmem %s327, 65
      %v401 = vld [vmem:[%s400] ss:$2 sm:$0xff]
      %s402 = scalar_lea.vmem %s327, 81
      %v403 = vld [vmem:[%s402] ss:$2 sm:$0xff]
      %s404 = scalar_lea.vmem %s327, 97
      %v405 = vld [vmem:[%s404] ss:$2 sm:$0xff]
      %s406 = scalar_lea.vmem %s327, 113
      %v407 = vld [vmem:[%s406] ss:$2 sm:$0xff]
      %s408 = scalar_lea.vmem %s327, 129
      %v409 = vld [vmem:[%s408] ss:$2 sm:$0xff]
      %s410 = scalar_lea.vmem %s327, 145
      %v411 = vld [vmem:[%s410] ss:$2 sm:$0xff]
      %s412 = scalar_lea.vmem %s327, 161
      %v413 = vld [vmem:[%s412] ss:$2 sm:$0xff]
      %s414 = scalar_lea.vmem %s327, 177
      %v415 = vld [vmem:[%s414] ss:$2 sm:$0xff]
      %s416 = scalar_lea.vmem %s327, 193
      %v417 = vld [vmem:[%s416] ss:$2 sm:$0xff]
      %s418 = scalar_lea.vmem %s327, 209
      %v419 = vld [vmem:[%s418] ss:$2 sm:$0xff]
      %s420 = scalar_lea.vmem %s327, 225
      %v421 = vld [vmem:[%s420] ss:$2 sm:$0xff]
      %s422 = scalar_lea.vmem %s327, 241
      %v423 = vld [vmem:[%s422] ss:$2 sm:$0xff]
      %v424 = vmax.f32 %v361, %v393
      %v425 = vmax.f32 %v363, %v395
      %v426 = vmax.f32 %v365, %v397
      %v427 = vmax.f32 %v367, %v399
      %v428 = vmax.f32 %v369, %v401
      %v429 = vmax.f32 %v371, %v403
      %v430 = vmax.f32 %v373, %v405
      %v431 = vmax.f32 %v375, %v407
      %v432 = vmax.f32 %v377, %v409
      %v433 = vmax.f32 %v379, %v411
      %v434 = vmax.f32 %v381, %v413
      %v435 = vmax.f32 %v383, %v415
      %v436 = vmax.f32 %v385, %v417
      %v437 = vmax.f32 %v387, %v419
      %v438 = vmax.f32 %v389, %v421
      %v439 = vmax.f32 %v391, %v423
      %v440 = vmax.f32 %v424, %v425
      %v441 = vmax.f32 %v426, %v427
      %v442 = vmax.f32 %v428, %v429
      %v443 = vmax.f32 %v430, %v431
      %v444 = vmax.f32 %v432, %v433
      %v445 = vmax.f32 %v434, %v435
      %v446 = vmax.f32 %v436, %v437
      %v447 = vmax.f32 %v438, %v439
      %448 = vst.msk [vmem:[#allocation2 + $0xb] sm:$0xff] %vm333, %v440
      %449 = vst.msk [vmem:[#allocation2 + $0x15] sm:$0xff] %vm333, %v441
      %450 = vst.msk [vmem:[#allocation2 + $0x1f] sm:$0xff] %vm333, %v442
      %451 = vst.msk [vmem:[#allocation2 + $0x29] sm:$0xff] %vm333, %v443
      %452 = vst.msk [vmem:[#allocation2 + $0x33] sm:$0xff] %vm333, %v444
      %453 = vst.msk [vmem:[#allocation2 + $0x3d] sm:$0xff] %vm333, %v445
      %454 = vst.msk [vmem:[#allocation2 + $0x47] sm:$0xff] %vm333, %v446
      %455 = vst.msk [vmem:[#allocation2 + $0x51] sm:$0xff] %vm333, %v447
      %v456 = vld [vmem:[#allocation2] sm:$0xff]
      %v457 = vld [vmem:[#allocation2 + $0x8] sm:$0xff]
      %v458 = vld [vmem:[#allocation2 + $0x10] sm:$0xff]
      %v459 = vld [vmem:[#allocation2 + $0x18] sm:$0xff]
      %v460 = vld [vmem:[#allocation2 + $0x20] sm:$0xff]
      %v461 = vld [vmem:[#allocation2 + $0x28] sm:$0xff]
      %v462 = vld [vmem:[#allocation2 + $0x30] sm:$0xff]
      %v463 = vld [vmem:[#allocation2 + $0x38] sm:$0xff]
      %v464 = vld [vmem:[#allocation2 + $0x40] sm:$0xff]
      %v465 = vld [vmem:[#allocation2 + $0x48] sm:$0xff]
      %v466 = vld [vmem:[%s1] sm:$0xf]
      %v467 = vld [vmem:[#allocation2 + $0x1] sm:$0xff]
      %v468 = vld [vmem:[#allocation2 + $0x9] sm:$0xff]
      %v469 = vld [vmem:[#allocation2 + $0x11] sm:$0xff]
      %v470 = vld [vmem:[#allocation2 + $0x19] sm:$0xff]
      %v471 = vld [vmem:[#allocation2 + $0x21] sm:$0xff]
      %v472 = vld [vmem:[#allocation2 + $0x29] sm:$0xff]
      %v473 = vld [vmem:[#allocation2 + $0x31] sm:$0xff]
      %v474 = vld [vmem:[#allocation2 + $0x39] sm:$0xff]
      %v475 = vld [vmem:[#allocation2 + $0x41] sm:$0xff]
      %v476 = vld [vmem:[#allocation2 + $0x49] sm:$0xff]
      %s477 = scalar_lea.vmem %s1, 4
      %v478 = vld [vmem:[%s477] sm:$0xf]
      %v480 = vsel %vm333, %v467, 0
      %v483 = vsel %vm333, %v468, 0
      %v486 = vsel %vm333, %v469, 0
      %v489 = vsel %vm333, %v470, 0
      %v492 = vsel %vm333, %v471, 0
      %v495 = vsel %vm333, %v472, 0
      %v498 = vsel %vm333, %v473, 0
      %v501 = vsel %vm333, %v474, 0
      %v504 = vsel %vm333, %v475, 0
      %v507 = vsel %vm333, %v476, 0
      %vm509 = vcmask 1043456
      %v511 = vsel %vm509, %v478, 0
      %513 = vmatprep.subr.mxu0 0.0
      %514 = vmatpush1.msra.mxu0 %v511
      %515 = vmatprep.subr.mxu0 0.0
      %516 = vmatpush1.msra.mxu0 0.0
      %517 = vmatprep.subr.mxu0 0.0
      %518 = vmatpush1.msra.mxu0 0.0
      %519 = vmatprep.subr.mxu0 0.0
      %520 = vmatpush1.msra.mxu0 0.0
      %521 = vmatprep.subr.mxu0 0.0
      %522 = vmatpush1.msra.mxu0 0.0
      %523 = vmatprep.subr.mxu0 0.0
      %524 = vmatpush1.msra.mxu0 0.0
      %525 = vmatprep.subr.mxu0 0.0
      %526 = vmatpush1.msra.mxu0 0.0
      %527 = vmatprep.subr.mxu0 0.0
      %528 = vmatpush1.msra.mxu0 0.0
      %529 = vmatprep.subr.mxu0 0.0
      %530 = vmatpush1.msra.mxu0 0.0
      %531 = vmatprep.subr.mxu0 0.0
      %532 = vmatpush1.msra.mxu0 0.0
      %533 = vmatprep.subr.mxu0 0.0
      %534 = vmatpush1.msra.mxu0 0.0
      %535 = vmatprep.subr.mxu0 0.0
      %536 = vmatpush1.msra.mxu0 0.0
      %537 = vmatprep.subr.mxu0 0.0
      %538 = vmatpush1.msra.mxu0 0.0
      %539 = vmatprep.subr.mxu0 0.0
      %540 = vmatpush1.msra.mxu0 0.0
      %541 = vmatprep.subr.mxu0 0.0
      %542 = vmatpush1.msra.mxu0 0.0
      %543 = vmatprep.subr.mxu0 0.0
      %544 = vmatpush1.msra.mxu0 0.0
      %545 = vmatprep.subr.mxu0 0.0
      %546 = vmatpush1.msra.mxu0 0.0
      %547 = vmatprep.subr.mxu0 0.0
      %548 = vmatpush1.msra.mxu0 0.0
      %549 = vmatprep.subr.mxu0 0.0
      %550 = vmatpush1.msra.mxu0 0.0
      %551 = vmatprep.subr.mxu0 0.0
      %552 = vmatpush1.msra.mxu0 0.0
      %553 = vmatprep.subr.mxu0 0.0
      %554 = vmatpush1.msra.mxu0 0.0
      %555 = vmatprep.subr.mxu0 0.0
      %556 = vmatpush1.msra.mxu0 0.0
      %557 = vmatprep.subr.mxu0 0.0
      %558 = vmatpush1.msra.mxu0 0.0
      %559 = vmatprep.subr.mxu0 0.0
      %560 = vmatpush1.msra.mxu0 0.0
      %561 = vmatprep.subr.mxu0 0.0
      %562 = vmatpush1.msra.mxu0 0.0
      %563 = vmatprep.subr.mxu0 0.0
      %564 = vmatpush1.msra.mxu0 0.0
      %565 = vmatprep.subr.mxu0 0.0
      %566 = vmatpush1.msra.mxu0 0.0
      %567 = vmatprep.subr.mxu0 0.0
      %568 = vmatpush1.msra.mxu0 0.0
      %569 = vmatprep.subr.mxu0 0.0
      %570 = vmatpush1.msra.mxu0 0.0
      %571 = vmatprep.subr.mxu0 0.0
      %572 = vmatpush1.msra.mxu0 0.0
      %573 = vmatprep.subr.mxu0 0.0
      %574 = vmatpush1.msra.mxu0 0.0
      %575 = vmatprep.subr.mxu0 0.0
      %576 = vmatpush1.msra.mxu0 0.0
      %577 = vmatprep.mubr.f32.mxu0 0.0
      %578 = vmatmul.mubr.f32.gmra.mrb[0].mxu0 %v480
      %v579 = vpop.f32.mrb[0].mxu0
      %v580 = vadd.f32 0.0, %v579
      %v581 = vpop.f32.mrb[0].mxu0
      %582 = vmatprep.mubr.f32.mxu0 0.0
      %583 = vmatmul.mubr.f32.gmra.mrb[0].mxu0 %v483
      %v584 = vpop.f32.mrb[0].mxu0
      %v585 = vadd.f32 0.0, %v584
      %v586 = vpop.f32.mrb[0].mxu0
      %587 = vmatprep.mubr.f32.mxu0 0.0
      %588 = vmatmul.mubr.f32.gmra.mrb[0].mxu0 %v486
      %v589 = vpop.f32.mrb[0].mxu0
      %v590 = vadd.f32 0.0, %v589
      %v591 = vpop.f32.mrb[0].mxu0
      %592 = vmatprep.mubr.f32.mxu0 0.0
      %593 = vmatmul.mubr.f32.gmra.mrb[0].mxu0 %v489
      %v594 = vpop.f32.mrb[0].mxu0
      %v595 = vadd.f32 0.0, %v594
      %v596 = vpop.f32.mrb[0].mxu0
      %597 = vmatprep.mubr.f32.mxu0 0.0
      %598 = vmatmul.mubr.f32.gmra.mrb[0].mxu0 %v492
      %v599 = vpop.f32.mrb[0].mxu0
      %v600 = vadd.f32 0.0, %v599
      %v601 = vpop.f32.mrb[0].mxu0
      %602 = vmatprep.mubr.f32.mxu0 0.0
      %603 = vmatmul.mubr.f32.gmra.mrb[0].mxu0 %v495
      %v604 = vpop.f32.mrb[0].mxu0
      %v605 = vadd.f32 0.0, %v604
      %v606 = vpop.f32.mrb[0].mxu0
      %607 = vmatprep.mubr.f32.mxu0 0.0
      %608 = vmatmul.mubr.f32.gmra.mrb[0].mxu0 %v498
      %v609 = vpop.f32.mrb[0].mxu0
      %v610 = vadd.f32 0.0, %v609
      %v611 = vpop.f32.mrb[0].mxu0
      %612 = vmatprep.mubr.f32.mxu0 0.0
      %613 = vmatmul.mubr.f32.gmra.mrb[0].mxu0 %v501
      %v614 = vpop.f32.mrb[0].mxu0
      %v615 = vadd.f32 0.0, %v614
      %v616 = vpop.f32.mrb[0].mxu0
      %617 = vmatprep.mubr.f32.mxu0 0.0
      %618 = vmatmul.mubr.f32.gmra.mrb[0].mxu0 %v504
      %v619 = vpop.f32.mrb[0].mxu0
      %v620 = vadd.f32 0.0, %v619
      %v621 = vpop.f32.mrb[0].mxu0
      %622 = vmatprep.mubr.f32.mxu0 0.0
      %623 = vmatmul.mubr.f32.gmra.mrb[0].mxu0 %v507
      %v624 = vpop.f32.mrb[0].mxu0
      %v625 = vadd.f32 0.0, %v624
      %v626 = vpop.f32.mrb[0].mxu0
      %627 = vdwg.mxu0
      %v629 = vsel %vm333, %v456, 0
      %v632 = vsel %vm333, %v457, 0
      %v635 = vsel %vm333, %v458, 0
      %v638 = vsel %vm333, %v459, 0
      %v641 = vsel %vm333, %v460, 0
      %v644 = vsel %vm333, %v461, 0
      %v647 = vsel %vm333, %v462, 0
      %v650 = vsel %vm333, %v463, 0
      %v653 = vsel %vm333, %v464, 0
      %v656 = vsel %vm333, %v465, 0
      %v659 = vsel %vm509, %v466, 0
      %661 = vmatprep.subr.mxu0 0.0
      %662 = vmatpush1.msra.mxu0 %v659
      %663 = vmatprep.subr.mxu0 0.0
      %664 = vmatpush1.msra.mxu0 0.0
      %665 = vmatprep.subr.mxu0 0.0
      %666 = vmatpush1.msra.mxu0 0.0
      %667 = vmatprep.subr.mxu0 0.0
      %668 = vmatpush1.msra.mxu0 0.0
      %669 = vmatprep.subr.mxu0 0.0
      %670 = vmatpush1.msra.mxu0 0.0
      %671 = vmatprep.subr.mxu0 0.0
      %672 = vmatpush1.msra.mxu0 0.0
      %673 = vmatprep.subr.mxu0 0.0
      %674 = vmatpush1.msra.mxu0 0.0
      %675 = vmatprep.subr.mxu0 0.0
      %676 = vmatpush1.msra.mxu0 0.0
      %677 = vmatprep.subr.mxu0 0.0
      %678 = vmatpush1.msra.mxu0 0.0
      %679 = vmatprep.subr.mxu0 0.0
      %680 = vmatpush1.msra.mxu0 0.0
      %681 = vmatprep.subr.mxu0 0.0
      %682 = vmatpush1.msra.mxu0 0.0
      %683 = vmatprep.subr.mxu0 0.0
      %684 = vmatpush1.msra.mxu0 0.0
      %685 = vmatprep.subr.mxu0 0.0
      %686 = vmatpush1.msra.mxu0 0.0
      %687 = vmatprep.subr.mxu0 0.0
      %688 = vmatpush1.msra.mxu0 0.0
      %689 = vmatprep.subr.mxu0 0.0
      %690 = vmatpush1.msra.mxu0 0.0
      %691 = vmatprep.subr.mxu0 0.0
      %692 = vmatpush1.msra.mxu0 0.0
      %693 = vmatprep.subr.mxu0 0.0
      %694 = vmatpush1.msra.mxu0 0.0
      %695 = vmatprep.subr.mxu0 0.0
      %696 = vmatpush1.msra.mxu0 0.0
      %697 = vmatprep.subr.mxu0 0.0
      %698 = vmatpush1.msra.mxu0 0.0
      %699 = vmatprep.subr.mxu0 0.0
      %700 = vmatpush1.msra.mxu0 0.0
      %701 = vmatprep.subr.mxu0 0.0
      %702 = vmatpush1.msra.mxu0 0.0
      %703 = vmatprep.subr.mxu0 0.0
      %704 = vmatpush1.msra.mxu0 0.0
      %705 = vmatprep.subr.mxu0 0.0
      %706 = vmatpush1.msra.mxu0 0.0
      %707 = vmatprep.subr.mxu0 0.0
      %708 = vmatpush1.msra.mxu0 0.0
      %709 = vmatprep.subr.mxu0 0.0
      %710 = vmatpush1.msra.mxu0 0.0
      %711 = vmatprep.subr.mxu0 0.0
      %712 = vmatpush1.msra.mxu0 0.0
      %713 = vmatprep.subr.mxu0 0.0
      %714 = vmatpush1.msra.mxu0 0.0
      %715 = vmatprep.subr.mxu0 0.0
      %716 = vmatpush1.msra.mxu0 0.0
      %717 = vmatprep.subr.mxu0 0.0
      %718 = vmatpush1.msra.mxu0 0.0
      %719 = vmatprep.subr.mxu0 0.0
      %720 = vmatpush1.msra.mxu0 0.0
      %721 = vmatprep.subr.mxu0 0.0
      %722 = vmatpush1.msra.mxu0 0.0
      %723 = vmatprep.subr.mxu0 0.0
      %724 = vmatpush1.msra.mxu0 0.0
      %725 = vmatprep.mubr.f32.mxu0 0.0
      %726 = vmatmul.mubr.f32.gmra.mrb[0].mxu0 %v629
      %v727 = vpop.f32.mrb[0].mxu0
      %v728 = vadd.f32 %v580, %v727
      %v729 = vpop.f32.mrb[0].mxu0
      %730 = vmatprep.mubr.f32.mxu0 0.0
      %731 = vmatmul.mubr.f32.gmra.mrb[0].mxu0 %v632
      %v732 = vpop.f32.mrb[0].mxu0
      %v733 = vadd.f32 %v585, %v732
      %v734 = vpop.f32.mrb[0].mxu0
      %735 = vmatprep.mubr.f32.mxu0 0.0
      %736 = vmatmul.mubr.f32.gmra.mrb[0].mxu0 %v635
      %v737 = vpop.f32.mrb[0].mxu0
      %v738 = vadd.f32 %v590, %v737
      %v739 = vpop.f32.mrb[0].mxu0
      %740 = vmatprep.mubr.f32.mxu0 0.0
      %741 = vmatmul.mubr.f32.gmra.mrb[0].mxu0 %v638
      %v742 = vpop.f32.mrb[0].mxu0
      %v743 = vadd.f32 %v595, %v742
      %v744 = vpop.f32.mrb[0].mxu0
      %745 = vmatprep.mubr.f32.mxu0 0.0
      %746 = vmatmul.mubr.f32.gmra.mrb[0].mxu0 %v641
      %v747 = vpop.f32.mrb[0].mxu0
      %v748 = vadd.f32 %v600, %v747
      %v749 = vpop.f32.mrb[0].mxu0
      %750 = vmatprep.mubr.f32.mxu0 0.0
      %751 = vmatmul.mubr.f32.gmra.mrb[0].mxu0 %v644
      %v752 = vpop.f32.mrb[0].mxu0
      %v753 = vadd.f32 %v605, %v752
      %v754 = vpop.f32.mrb[0].mxu0
      %755 = vmatprep.mubr.f32.mxu0 0.0
      %756 = vmatmul.mubr.f32.gmra.mrb[0].mxu0 %v647
      %v757 = vpop.f32.mrb[0].mxu0
      %v758 = vadd.f32 %v610, %v757
      %v759 = vpop.f32.mrb[0].mxu0
      %760 = vmatprep.mubr.f32.mxu0 0.0
      %761 = vmatmul.mubr.f32.gmra.mrb[0].mxu0 %v650
      %v762 = vpop.f32.mrb[0].mxu0
      %v763 = vadd.f32 %v615, %v762
      %v764 = vpop.f32.mrb[0].mxu0
      %765 = vmatprep.mubr.f32.mxu0 0.0
      %766 = vmatmul.mubr.f32.gmra.mrb[0].mxu0 %v653
      %v767 = vpop.f32.mrb[0].mxu0
      %v768 = vadd.f32 %v620, %v767
      %v769 = vpop.f32.mrb[0].mxu0
      %770 = vmatprep.mubr.f32.mxu0 0.0
      %771 = vmatmul.mubr.f32.gmra.mrb[0].mxu0 %v656
      %v772 = vpop.f32.mrb[0].mxu0
      %v773 = vadd.f32 %v625, %v772
      %v774 = vpop.f32.mrb[0].mxu0
      %775 = vdwg.mxu0
      %v776 = vld [vmem:[#allocation2 + $0x2] sm:$0xff]
      %v777 = vld [vmem:[#allocation2 + $0xa] sm:$0xff]
      %v778 = vld [vmem:[#allocation2 + $0x12] sm:$0xff]
      %v779 = vld [vmem:[#allocation2 + $0x1a] sm:$0xff]
      %v780 = vld [vmem:[#allocation2 + $0x22] sm:$0xff]
      %v781 = vld [vmem:[#allocation2 + $0x2a] sm:$0xff]
      %v782 = vld [vmem:[#allocation2 + $0x32] sm:$0xff]
      %v783 = vld [vmem:[#allocation2 + $0x3a] sm:$0xff]
      %v784 = vld [vmem:[#allocation2 + $0x42] sm:$0xff]
      %v785 = vld [vmem:[#allocation2 + $0x4a] sm:$0xff]
      %s786 = scalar_lea.vmem %s1, 8
      %v787 = vld [vmem:[%s786] sm:$0xf]
      %v789 = vsel %vm333, %v776, 0
      %v792 = vsel %vm333, %v777, 0
      %v795 = vsel %vm333, %v778, 0
      %v798 = vsel %vm333, %v779, 0
      %v801 = vsel %vm333, %v780, 0
      %v804 = vsel %vm333, %v781, 0
      %v807 = vsel %vm333, %v782, 0
      %v810 = vsel %vm333, %v783, 0
      %v813 = vsel %vm333, %v784, 0
      %v816 = vsel %vm333, %v785, 0
      %v819 = vsel %vm509, %v787, 0
      %821 = vmatprep.subr.mxu0 0.0
      %822 = vmatpush1.msra.mxu0 %v819
      %823 = vmatprep.subr.mxu0 0.0
      %824 = vmatpush1.msra.mxu0 0.0
      %825 = vmatprep.subr.mxu0 0.0
      %826 = vmatpush1.msra.mxu0 0.0
      %827 = vmatprep.subr.mxu0 0.0
      %828 = vmatpush1.msra.mxu0 0.0
      %829 = vmatprep.subr.mxu0 0.0
      %830 = vmatpush1.msra.mxu0 0.0
      %831 = vmatprep.subr.mxu0 0.0
      %832 = vmatpush1.msra.mxu0 0.0
      %833 = vmatprep.subr.mxu0 0.0
      %834 = vmatpush1.msra.mxu0 0.0
      %835 = vmatprep.subr.mxu0 0.0
      %836 = vmatpush1.msra.mxu0 0.0
      %837 = vmatprep.subr.mxu0 0.0
      %838 = vmatpush1.msra.mxu0 0.0
      %839 = vmatprep.subr.mxu0 0.0
      %840 = vmatpush1.msra.mxu0 0.0
      %841 = vmatprep.subr.mxu0 0.0
      %842 = vmatpush1.msra.mxu0 0.0
      %843 = vmatprep.subr.mxu0 0.0
      %844 = vmatpush1.msra.mxu0 0.0
      %845 = vmatprep.subr.mxu0 0.0
      %846 = vmatpush1.msra.mxu0 0.0
      %847 = vmatprep.subr.mxu0 0.0
      %848 = vmatpush1.msra.mxu0 0.0
      %849 = vmatprep.subr.mxu0 0.0
      %850 = vmatpush1.msra.mxu0 0.0
      %851 = vmatprep.subr.mxu0 0.0
      %852 = vmatpush1.msra.mxu0 0.0
      %853 = vmatprep.subr.mxu0 0.0
      %854 = vmatpush1.msra.mxu0 0.0
      %855 = vmatprep.subr.mxu0 0.0
      %856 = vmatpush1.msra.mxu0 0.0
      %857 = vmatprep.subr.mxu0 0.0
      %858 = vmatpush1.msra.mxu0 0.0
      %859 = vmatprep.subr.mxu0 0.0
      %860 = vmatpush1.msra.mxu0 0.0
      %861 = vmatprep.subr.mxu0 0.0
      %862 = vmatpush1.msra.mxu0 0.0
      %863 = vmatprep.subr.mxu0 0.0
      %864 = vmatpush1.msra.mxu0 0.0
      %865 = vmatprep.subr.mxu0 0.0
      %866 = vmatpush1.msra.mxu0 0.0
      %867 = vmatprep.subr.mxu0 0.0
      %868 = vmatpush1.msra.mxu0 0.0
      %869 = vmatprep.subr.mxu0 0.0
      %870 = vmatpush1.msra.mxu0 0.0
      %871 = vmatprep.subr.mxu0 0.0
      %872 = vmatpush1.msra.mxu0 0.0
      %873 = vmatprep.subr.mxu0 0.0
      %874 = vmatpush1.msra.mxu0 0.0
      %875 = vmatprep.subr.mxu0 0.0
      %876 = vmatpush1.msra.mxu0 0.0
      %877 = vmatprep.subr.mxu0 0.0
      %878 = vmatpush1.msra.mxu0 0.0
      %879 = vmatprep.subr.mxu0 0.0
      %880 = vmatpush1.msra.mxu0 0.0
      %881 = vmatprep.subr.mxu0 0.0
      %882 = vmatpush1.msra.mxu0 0.0
      %883 = vmatprep.subr.mxu0 0.0
      %884 = vmatpush1.msra.mxu0 0.0
      %885 = vmatprep.mubr.f32.mxu0 0.0
      %886 = vmatmul.mubr.f32.gmra.mrb[0].mxu0 %v789
      %v887 = vpop.f32.mrb[0].mxu0
      %v888 = vadd.f32 0.0, %v887
      %v889 = vpop.f32.mrb[0].mxu0
      %890 = vmatprep.mubr.f32.mxu0 0.0
      %891 = vmatmul.mubr.f32.gmra.mrb[0].mxu0 %v792
      %v892 = vpop.f32.mrb[0].mxu0
      %v893 = vadd.f32 0.0, %v892
      %v894 = vpop.f32.mrb[0].mxu0
      %895 = vmatprep.mubr.f32.mxu0 0.0
      %896 = vmatmul.mubr.f32.gmra.mrb[0].mxu0 %v795
      %v897 = vpop.f32.mrb[0].mxu0
      %v898 = vadd.f32 0.0, %v897
      %v899 = vpop.f32.mrb[0].mxu0
      %900 = vmatprep.mubr.f32.mxu0 0.0
      %901 = vmatmul.mubr.f32.gmra.mrb[0].mxu0 %v798
      %v902 = vpop.f32.mrb[0].mxu0
      %v903 = vadd.f32 0.0, %v902
      %v904 = vpop.f32.mrb[0].mxu0
      %905 = vmatprep.mubr.f32.mxu0 0.0
      %906 = vmatmul.mubr.f32.gmra.mrb[0].mxu0 %v801
      %v907 = vpop.f32.mrb[0].mxu0
      %v908 = vadd.f32 0.0, %v907
      %v909 = vpop.f32.mrb[0].mxu0
      %910 = vmatprep.mubr.f32.mxu0 0.0
      %911 = vmatmul.mubr.f32.gmra.mrb[0].mxu0 %v804
      %v912 = vpop.f32.mrb[0].mxu0
      %v913 = vadd.f32 0.0, %v912
      %v914 = vpop.f32.mrb[0].mxu0
      %915 = vmatprep.mubr.f32.mxu0 0.0
      %916 = vmatmul.mubr.f32.gmra.mrb[0].mxu0 %v807
      %v917 = vpop.f32.mrb[0].mxu0
      %v918 = vadd.f32 0.0, %v917
      %v919 = vpop.f32.mrb[0].mxu0
      %920 = vmatprep.mubr.f32.mxu0 0.0
      %921 = vmatmul.mubr.f32.gmra.mrb[0].mxu0 %v810
      %v922 = vpop.f32.mrb[0].mxu0
      %v923 = vadd.f32 0.0, %v922
      %v924 = vpop.f32.mrb[0].mxu0
      %925 = vmatprep.mubr.f32.mxu0 0.0
      %926 = vmatmul.mubr.f32.gmra.mrb[0].mxu0 %v813
      %v927 = vpop.f32.mrb[0].mxu0
      %v928 = vadd.f32 0.0, %v927
      %v929 = vpop.f32.mrb[0].mxu0
      %930 = vmatprep.mubr.f32.mxu0 0.0
      %931 = vmatmul.mubr.f32.gmra.mrb[0].mxu0 %v816
      %v932 = vpop.f32.mrb[0].mxu0
      %v933 = vadd.f32 0.0, %v932
      %v934 = vpop.f32.mrb[0].mxu0
      %935 = vdwg.mxu0
      %v936 = vadd.f32 %v728, %v888
      %v937 = vadd.f32 %v733, %v893
      %v938 = vadd.f32 %v738, %v898
      %v939 = vadd.f32 %v743, %v903
      %v940 = vadd.f32 %v748, %v908
      %v941 = vadd.f32 %v753, %v913
      %v942 = vadd.f32 %v758, %v918
      %v943 = vadd.f32 %v763, %v923
      %v944 = vadd.f32 %v768, %v928
      %v945 = vadd.f32 %v773, %v933
      %v946 = vld [vmem:[#allocation2 + $0xa] sm:$0xff]
      %v947 = vld [vmem:[#allocation2 + $0x12] sm:$0xff]
      %v948 = vld [vmem:[#allocation2 + $0x1a] sm:$0xff]
      %v949 = vld [vmem:[#allocation2 + $0x22] sm:$0xff]
      %v950 = vld [vmem:[#allocation2 + $0x2a] sm:$0xff]
      %v951 = vld [vmem:[#allocation2 + $0x32] sm:$0xff]
      %v952 = vld [vmem:[#allocation2 + $0x3a] sm:$0xff]
      %v953 = vld [vmem:[#allocation2 + $0x42] sm:$0xff]
      %v954 = vld [vmem:[#allocation2 + $0x4a] sm:$0xff]
      %v955 = vld [vmem:[#allocation2 + $0x52] sm:$0xff]
      %s956 = scalar_lea.vmem %s1, 12
      %v957 = vld [vmem:[%s956] sm:$0xf]
      %v959 = vsel %vm333, %v946, 0
      %v962 = vsel %vm333, %v947, 0
      %v965 = vsel %vm333, %v948, 0
      %v968 = vsel %vm333, %v949, 0
      %v971 = vsel %vm333, %v950, 0
      %v974 = vsel %vm333, %v951, 0
      %v977 = vsel %vm333, %v952, 0
      %v980 = vsel %vm333, %v953, 0
      %v983 = vsel %vm333, %v954, 0
      %v986 = vsel %vm333, %v955, 0
      %v989 = vsel %vm509, %v957, 0
      %991 = vmatprep.subr.mxu0 0.0
      %992 = vmatpush1.msra.mxu0 %v989
      %993 = vmatprep.subr.mxu0 0.0
      %994 = vmatpush1.msra.mxu0 0.0
      %995 = vmatprep.subr.mxu0 0.0
      %996 = vmatpush1.msra.mxu0 0.0
      %997 = vmatprep.subr.mxu0 0.0
      %998 = vmatpush1.msra.mxu0 0.0
      %999 = vmatprep.subr.mxu0 0.0
      %1000 = vmatpush1.msra.mxu0 0.0
      %1001 = vmatprep.subr.mxu0 0.0
      %1002 = vmatpush1.msra.mxu0 0.0
      %1003 = vmatprep.subr.mxu0 0.0
      %1004 = vmatpush1.msra.mxu0 0.0
      %1005 = vmatprep.subr.mxu0 0.0
      %1006 = vmatpush1.msra.mxu0 0.0
      %1007 = vmatprep.subr.mxu0 0.0
      %1008 = vmatpush1.msra.mxu0 0.0
      %1009 = vmatprep.subr.mxu0 0.0
      %1010 = vmatpush1.msra.mxu0 0.0
      %1011 = vmatprep.subr.mxu0 0.0
      %1012 = vmatpush1.msra.mxu0 0.0
      %1013 = vmatprep.subr.mxu0 0.0
      %1014 = vmatpush1.msra.mxu0 0.0
      %1015 = vmatprep.subr.mxu0 0.0
      %1016 = vmatpush1.msra.mxu0 0.0
      %1017 = vmatprep.subr.mxu0 0.0
      %1018 = vmatpush1.msra.mxu0 0.0
      %1019 = vmatprep.subr.mxu0 0.0
      %1020 = vmatpush1.msra.mxu0 0.0
      %1021 = vmatprep.subr.mxu0 0.0
      %1022 = vmatpush1.msra.mxu0 0.0
      %1023 = vmatprep.subr.mxu0 0.0
      %1024 = vmatpush1.msra.mxu0 0.0
      %1025 = vmatprep.subr.mxu0 0.0
      %1026 = vmatpush1.msra.mxu0 0.0
      %1027 = vmatprep.subr.mxu0 0.0
      %1028 = vmatpush1.msra.mxu0 0.0
      %1029 = vmatprep.subr.mxu0 0.0
      %1030 = vmatpush1.msra.mxu0 0.0
      %1031 = vmatprep.subr.mxu0 0.0
      %1032 = vmatpush1.msra.mxu0 0.0
      %1033 = vmatprep.subr.mxu0 0.0
      %1034 = vmatpush1.msra.mxu0 0.0
      %1035 = vmatprep.subr.mxu0 0.0
      %1036 = vmatpush1.msra.mxu0 0.0
      %1037 = vmatprep.subr.mxu0 0.0
      %1038 = vmatpush1.msra.mxu0 0.0
      %1039 = vmatprep.subr.mxu0 0.0
      %1040 = vmatpush1.msra.mxu0 0.0
      %1041 = vmatprep.subr.mxu0 0.0
      %1042 = vmatpush1.msra.mxu0 0.0
      %1043 = vmatprep.subr.mxu0 0.0
      %1044 = vmatpush1.msra.mxu0 0.0
      %1045 = vmatprep.subr.mxu0 0.0
      %1046 = vmatpush1.msra.mxu0 0.0
      %1047 = vmatprep.subr.mxu0 0.0
      %1048 = vmatpush1.msra.mxu0 0.0
      %1049 = vmatprep.subr.mxu0 0.0
      %1050 = vmatpush1.msra.mxu0 0.0
      %1051 = vmatprep.subr.mxu0 0.0
      %1052 = vmatpush1.msra.mxu0 0.0
      %1053 = vmatprep.subr.mxu0 0.0
      %1054 = vmatpush1.msra.mxu0 0.0
      %1055 = vmatprep.mubr.f32.mxu0 0.0
      %1056 = vmatmul.mubr.f32.gmra.mrb[0].mxu0 %v959
      %v1057 = vpop.f32.mrb[0].mxu0
      %v1058 = vadd.f32 0.0, %v1057
      %v1059 = vpop.f32.mrb[0].mxu0
      %1060 = vmatprep.mubr.f32.mxu0 0.0
      %1061 = vmatmul.mubr.f32.gmra.mrb[0].mxu0 %v962
      %v1062 = vpop.f32.mrb[0].mxu0
      %v1063 = vadd.f32 0.0, %v1062
      %v1064 = vpop.f32.mrb[0].mxu0
      %1065 = vmatprep.mubr.f32.mxu0 0.0
      %1066 = vmatmul.mubr.f32.gmra.mrb[0].mxu0 %v965
      %v1067 = vpop.f32.mrb[0].mxu0
      %v1068 = vadd.f32 0.0, %v1067
      %v1069 = vpop.f32.mrb[0].mxu0
      %1070 = vmatprep.mubr.f32.mxu0 0.0
      %1071 = vmatmul.mubr.f32.gmra.mrb[0].mxu0 %v968
      %v1072 = vpop.f32.mrb[0].mxu0
      %v1073 = vadd.f32 0.0, %v1072
      %v1074 = vpop.f32.mrb[0].mxu0
      %1075 = vmatprep.mubr.f32.mxu0 0.0
      %1076 = vmatmul.mubr.f32.gmra.mrb[0].mxu0 %v971
      %v1077 = vpop.f32.mrb[0].mxu0
      %v1078 = vadd.f32 0.0, %v1077
      %v1079 = vpop.f32.mrb[0].mxu0
      %1080 = vmatprep.mubr.f32.mxu0 0.0
      %1081 = vmatmul.mubr.f32.gmra.mrb[0].mxu0 %v974
      %v1082 = vpop.f32.mrb[0].mxu0
      %v1083 = vadd.f32 0.0, %v1082
      %v1084 = vpop.f32.mrb[0].mxu0
      %1085 = vmatprep.mubr.f32.mxu0 0.0
      %1086 = vmatmul.mubr.f32.gmra.mrb[0].mxu0 %v977
      %v1087 = vpop.f32.mrb[0].mxu0
      %v1088 = vadd.f32 0.0, %v1087
      %v1089 = vpop.f32.mrb[0].mxu0
      %1090 = vmatprep.mubr.f32.mxu0 0.0
      %1091 = vmatmul.mubr.f32.gmra.mrb[0].mxu0 %v980
      %v1092 = vpop.f32.mrb[0].mxu0
      %v1093 = vadd.f32 0.0, %v1092
      %v1094 = vpop.f32.mrb[0].mxu0
      %1095 = vmatprep.mubr.f32.mxu0 0.0
      %1096 = vmatmul.mubr.f32.gmra.mrb[0].mxu0 %v983
      %v1097 = vpop.f32.mrb[0].mxu0
      %v1098 = vadd.f32 0.0, %v1097
      %v1099 = vpop.f32.mrb[0].mxu0
      %1100 = vmatprep.mubr.f32.mxu0 0.0
      %1101 = vmatmul.mubr.f32.gmra.mrb[0].mxu0 %v986
      %v1102 = vpop.f32.mrb[0].mxu0
      %v1103 = vadd.f32 0.0, %v1102
      %v1104 = vpop.f32.mrb[0].mxu0
      %1105 = vdwg.mxu0
      %v1106 = vadd.f32 %v936, %v1058
      %v1107 = vadd.f32 %v937, %v1063
      %v1108 = vadd.f32 %v938, %v1068
      %v1109 = vadd.f32 %v939, %v1073
      %v1110 = vadd.f32 %v940, %v1078
      %v1111 = vadd.f32 %v941, %v1083
      %v1112 = vadd.f32 %v942, %v1088
      %v1113 = vadd.f32 %v943, %v1093
      %v1114 = vadd.f32 %v944, %v1098
      %v1115 = vadd.f32 %v945, %v1103
      %v1116 = vld [vmem:[#allocation2 + $0xb] sm:$0xff]
      %v1117 = vld [vmem:[#allocation2 + $0x13] sm:$0xff]
      %v1118 = vld [vmem:[#allocation2 + $0x1b] sm:$0xff]
      %v1119 = vld [vmem:[#allocation2 + $0x23] sm:$0xff]
      %v1120 = vld [vmem:[#allocation2 + $0x2b] sm:$0xff]
      %v1121 = vld [vmem:[#allocation2 + $0x33] sm:$0xff]
      %v1122 = vld [vmem:[#allocation2 + $0x3b] sm:$0xff]
      %v1123 = vld [vmem:[#allocation2 + $0x43] sm:$0xff]
      %v1124 = vld [vmem:[#allocation2 + $0x4b] sm:$0xff]
      %v1125 = vld [vmem:[#allocation2 + $0x53] sm:$0xff]
      %s1126 = scalar_lea.vmem %s1, 16
      %v1127 = vld [vmem:[%s1126] sm:$0xf]
      %v1129 = vsel %vm333, %v1116, 0
      %v1132 = vsel %vm333, %v1117, 0
      %v1135 = vsel %vm333, %v1118, 0
      %v1138 = vsel %vm333, %v1119, 0
      %v1141 = vsel %vm333, %v1120, 0
      %v1144 = vsel %vm333, %v1121, 0
      %v1147 = vsel %vm333, %v1122, 0
      %v1150 = vsel %vm333, %v1123, 0
      %v1153 = vsel %vm333, %v1124, 0
      %v1156 = vsel %vm333, %v1125, 0
      %v1159 = vsel %vm509, %v1127, 0
      %1161 = vmatprep.subr.mxu0 0.0
      %1162 = vmatpush1.msra.mxu0 %v1159
      %1163 = vmatprep.subr.mxu0 0.0
      %1164 = vmatpush1.msra.mxu0 0.0
      %1165 = vmatprep.subr.mxu0 0.0
      %1166 = vmatpush1.msra.mxu0 0.0
      %1167 = vmatprep.subr.mxu0 0.0
      %1168 = vmatpush1.msra.mxu0 0.0
      %1169 = vmatprep.subr.mxu0 0.0
      %1170 = vmatpush1.msra.mxu0 0.0
      %1171 = vmatprep.subr.mxu0 0.0
      %1172 = vmatpush1.msra.mxu0 0.0
      %1173 = vmatprep.subr.mxu0 0.0
      %1174 = vmatpush1.msra.mxu0 0.0
      %1175 = vmatprep.subr.mxu0 0.0
      %1176 = vmatpush1.msra.mxu0 0.0
      %1177 = vmatprep.subr.mxu0 0.0
      %1178 = vmatpush1.msra.mxu0 0.0
      %1179 = vmatprep.subr.mxu0 0.0
      %1180 = vmatpush1.msra.mxu0 0.0
      %1181 = vmatprep.subr.mxu0 0.0
      %1182 = vmatpush1.msra.mxu0 0.0
      %1183 = vmatprep.subr.mxu0 0.0
      %1184 = vmatpush1.msra.mxu0 0.0
      %1185 = vmatprep.subr.mxu0 0.0
      %1186 = vmatpush1.msra.mxu0 0.0
      %1187 = vmatprep.subr.mxu0 0.0
      %1188 = vmatpush1.msra.mxu0 0.0
      %1189 = vmatprep.subr.mxu0 0.0
      %1190 = vmatpush1.msra.mxu0 0.0
      %1191 = vmatprep.subr.mxu0 0.0
      %1192 = vmatpush1.msra.mxu0 0.0
      %1193 = vmatprep.subr.mxu0 0.0
      %1194 = vmatpush1.msra.mxu0 0.0
      %1195 = vmatprep.subr.mxu0 0.0
      %1196 = vmatpush1.msra.mxu0 0.0
      %1197 = vmatprep.subr.mxu0 0.0
      %1198 = vmatpush1.msra.mxu0 0.0
      %1199 = vmatprep.subr.mxu0 0.0
      %1200 = vmatpush1.msra.mxu0 0.0
      %1201 = vmatprep.subr.mxu0 0.0
      %1202 = vmatpush1.msra.mxu0 0.0
      %1203 = vmatprep.subr.mxu0 0.0
      %1204 = vmatpush1.msra.mxu0 0.0
      %1205 = vmatprep.subr.mxu0 0.0
      %1206 = vmatpush1.msra.mxu0 0.0
      %1207 = vmatprep.subr.mxu0 0.0
      %1208 = vmatpush1.msra.mxu0 0.0
      %1209 = vmatprep.subr.mxu0 0.0
      %1210 = vmatpush1.msra.mxu0 0.0
      %1211 = vmatprep.subr.mxu0 0.0
      %1212 = vmatpush1.msra.mxu0 0.0
      %1213 = vmatprep.subr.mxu0 0.0
      %1214 = vmatpush1.msra.mxu0 0.0
      %1215 = vmatprep.subr.mxu0 0.0
      %1216 = vmatpush1.msra.mxu0 0.0
      %1217 = vmatprep.subr.mxu0 0.0
      %1218 = vmatpush1.msra.mxu0 0.0
      %1219 = vmatprep.subr.mxu0 0.0
      %1220 = vmatpush1.msra.mxu0 0.0
      %1221 = vmatprep.subr.mxu0 0.0
      %1222 = vmatpush1.msra.mxu0 0.0
      %1223 = vmatprep.subr.mxu0 0.0
      %1224 = vmatpush1.msra.mxu0 0.0
      %1225 = vmatprep.mubr.f32.mxu0 0.0
      %1226 = vmatmul.mubr.f32.gmra.mrb[0].mxu0 %v1129
      %v1227 = vpop.f32.mrb[0].mxu0
      %v1228 = vadd.f32 0.0, %v1227
      %v1229 = vpop.f32.mrb[0].mxu0
      %1230 = vmatprep.mubr.f32.mxu0 0.0
      %1231 = vmatmul.mubr.f32.gmra.mrb[0].mxu0 %v1132
      %v1232 = vpop.f32.mrb[0].mxu0
      %v1233 = vadd.f32 0.0, %v1232
      %v1234 = vpop.f32.mrb[0].mxu0
      %1235 = vmatprep.mubr.f32.mxu0 0.0
      %1236 = vmatmul.mubr.f32.gmra.mrb[0].mxu0 %v1135
      %v1237 = vpop.f32.mrb[0].mxu0
      %v1238 = vadd.f32 0.0, %v1237
      %v1239 = vpop.f32.mrb[0].mxu0
      %1240 = vmatprep.mubr.f32.mxu0 0.0
      %1241 = vmatmul.mubr.f32.gmra.mrb[0].mxu0 %v1138
      %v1242 = vpop.f32.mrb[0].mxu0
      %v1243 = vadd.f32 0.0, %v1242
      %v1244 = vpop.f32.mrb[0].mxu0
      %1245 = vmatprep.mubr.f32.mxu0 0.0
      %1246 = vmatmul.mubr.f32.gmra.mrb[0].mxu0 %v1141
      %v1247 = vpop.f32.mrb[0].mxu0
      %v1248 = vadd.f32 0.0, %v1247
      %v1249 = vpop.f32.mrb[0].mxu0
      %1250 = vmatprep.mubr.f32.mxu0 0.0
      %1251 = vmatmul.mubr.f32.gmra.mrb[0].mxu0 %v1144
      %v1252 = vpop.f32.mrb[0].mxu0
      %v1253 = vadd.f32 0.0, %v1252
      %v1254 = vpop.f32.mrb[0].mxu0
      %1255 = vmatprep.mubr.f32.mxu0 0.0
      %1256 = vmatmul.mubr.f32.gmra.mrb[0].mxu0 %v1147
      %v1257 = vpop.f32.mrb[0].mxu0
      %v1258 = vadd.f32 0.0, %v1257
      %v1259 = vpop.f32.mrb[0].mxu0
      %1260 = vmatprep.mubr.f32.mxu0 0.0
      %1261 = vmatmul.mubr.f32.gmra.mrb[0].mxu0 %v1150
      %v1262 = vpop.f32.mrb[0].mxu0
      %v1263 = vadd.f32 0.0, %v1262
      %v1264 = vpop.f32.mrb[0].mxu0
      %1265 = vmatprep.mubr.f32.mxu0 0.0
      %1266 = vmatmul.mubr.f32.gmra.mrb[0].mxu0 %v1153
      %v1267 = vpop.f32.mrb[0].mxu0
      %v1268 = vadd.f32 0.0, %v1267
      %v1269 = vpop.f32.mrb[0].mxu0
      %1270 = vmatprep.mubr.f32.mxu0 0.0
      %1271 = vmatmul.mubr.f32.gmra.mrb[0].mxu0 %v1156
      %v1272 = vpop.f32.mrb[0].mxu0
      %v1273 = vadd.f32 0.0, %v1272
      %v1274 = vpop.f32.mrb[0].mxu0
      %1275 = vdwg.mxu0
      %v1276 = vadd.f32 %v1106, %v1228
      %v1277 = vadd.f32 %v1107, %v1233
      %v1278 = vadd.f32 %v1108, %v1238
      %v1279 = vadd.f32 %v1109, %v1243
      %v1280 = vadd.f32 %v1110, %v1248
      %v1281 = vadd.f32 %v1111, %v1253
      %v1282 = vadd.f32 %v1112, %v1258
      %v1283 = vadd.f32 %v1113, %v1263
      %v1284 = vadd.f32 %v1114, %v1268
      %v1285 = vadd.f32 %v1115, %v1273
      %v1286 = vld [vmem:[#allocation2 + $0xc] sm:$0xff]
      %v1287 = vld [vmem:[#allocation2 + $0x14] sm:$0xff]
      %v1288 = vld [vmem:[#allocation2 + $0x1c] sm:$0xff]
      %v1289 = vld [vmem:[#allocation2 + $0x24] sm:$0xff]
      %v1290 = vld [vmem:[#allocation2 + $0x2c] sm:$0xff]
      %v1291 = vld [vmem:[#allocation2 + $0x34] sm:$0xff]
      %v1292 = vld [vmem:[#allocation2 + $0x3c] sm:$0xff]
      %v1293 = vld [vmem:[#allocation2 + $0x44] sm:$0xff]
      %v1294 = vld [vmem:[#allocation2 + $0x4c] sm:$0xff]
      %v1295 = vld [vmem:[#allocation2 + $0x54] sm:$0xff]
      %s1296 = scalar_lea.vmem %s1, 20
      %v1297 = vld [vmem:[%s1296] sm:$0xf]
      %v1299 = vsel %vm333, %v1286, 0
      %v1302 = vsel %vm333, %v1287, 0
      %v1305 = vsel %vm333, %v1288, 0
      %v1308 = vsel %vm333, %v1289, 0
      %v1311 = vsel %vm333, %v1290, 0
      %v1314 = vsel %vm333, %v1291, 0
      %v1317 = vsel %vm333, %v1292, 0
      %v1320 = vsel %vm333, %v1293, 0
      %v1323 = vsel %vm333, %v1294, 0
      %v1326 = vsel %vm333, %v1295, 0
      %v1329 = vsel %vm509, %v1297, 0
      %1331 = vmatprep.subr.mxu0 0.0
      %1332 = vmatpush1.msra.mxu0 %v1329
      %1333 = vmatprep.subr.mxu0 0.0
      %1334 = vmatpush1.msra.mxu0 0.0
      %1335 = vmatprep.subr.mxu0 0.0
      %1336 = vmatpush1.msra.mxu0 0.0
      %1337 = vmatprep.subr.mxu0 0.0
      %1338 = vmatpush1.msra.mxu0 0.0
      %1339 = vmatprep.subr.mxu0 0.0
      %1340 = vmatpush1.msra.mxu0 0.0
      %1341 = vmatprep.subr.mxu0 0.0
      %1342 = vmatpush1.msra.mxu0 0.0
      %1343 = vmatprep.subr.mxu0 0.0
      %1344 = vmatpush1.msra.mxu0 0.0
      %1345 = vmatprep.subr.mxu0 0.0
      %1346 = vmatpush1.msra.mxu0 0.0
      %1347 = vmatprep.subr.mxu0 0.0
      %1348 = vmatpush1.msra.mxu0 0.0
      %1349 = vmatprep.subr.mxu0 0.0
      %1350 = vmatpush1.msra.mxu0 0.0
      %1351 = vmatprep.subr.mxu0 0.0
      %1352 = vmatpush1.msra.mxu0 0.0
      %1353 = vmatprep.subr.mxu0 0.0
      %1354 = vmatpush1.msra.mxu0 0.0
      %1355 = vmatprep.subr.mxu0 0.0
      %1356 = vmatpush1.msra.mxu0 0.0
      %1357 = vmatprep.subr.mxu0 0.0
      %1358 = vmatpush1.msra.mxu0 0.0
      %1359 = vmatprep.subr.mxu0 0.0
      %1360 = vmatpush1.msra.mxu0 0.0
      %1361 = vmatprep.subr.mxu0 0.0
      %1362 = vmatpush1.msra.mxu0 0.0
      %1363 = vmatprep.subr.mxu0 0.0
      %1364 = vmatpush1.msra.mxu0 0.0
      %1365 = vmatprep.subr.mxu0 0.0
      %1366 = vmatpush1.msra.mxu0 0.0
      %1367 = vmatprep.subr.mxu0 0.0
      %1368 = vmatpush1.msra.mxu0 0.0
      %1369 = vmatprep.subr.mxu0 0.0
      %1370 = vmatpush1.msra.mxu0 0.0
      %1371 = vmatprep.subr.mxu0 0.0
      %1372 = vmatpush1.msra.mxu0 0.0
      %1373 = vmatprep.subr.mxu0 0.0
      %1374 = vmatpush1.msra.mxu0 0.0
      %1375 = vmatprep.subr.mxu0 0.0
      %1376 = vmatpush1.msra.mxu0 0.0
      %1377 = vmatprep.subr.mxu0 0.0
      %1378 = vmatpush1.msra.mxu0 0.0
      %1379 = vmatprep.subr.mxu0 0.0
      %1380 = vmatpush1.msra.mxu0 0.0
      %1381 = vmatprep.subr.mxu0 0.0
      %1382 = vmatpush1.msra.mxu0 0.0
      %1383 = vmatprep.subr.mxu0 0.0
      %1384 = vmatpush1.msra.mxu0 0.0
      %1385 = vmatprep.subr.mxu0 0.0
      %1386 = vmatpush1.msra.mxu0 0.0
      %1387 = vmatprep.subr.mxu0 0.0
      %1388 = vmatpush1.msra.mxu0 0.0
      %1389 = vmatprep.subr.mxu0 0.0
      %1390 = vmatpush1.msra.mxu0 0.0
      %1391 = vmatprep.subr.mxu0 0.0
      %1392 = vmatpush1.msra.mxu0 0.0
      %1393 = vmatprep.subr.mxu0 0.0
      %1394 = vmatpush1.msra.mxu0 0.0
      %1395 = vmatprep.mubr.f32.mxu0 0.0
      %1396 = vmatmul.mubr.f32.gmra.mrb[0].mxu0 %v1299
      %v1397 = vpop.f32.mrb[0].mxu0
      %v1398 = vadd.f32 0.0, %v1397
      %v1399 = vpop.f32.mrb[0].mxu0
      %1400 = vmatprep.mubr.f32.mxu0 0.0
      %1401 = vmatmul.mubr.f32.gmra.mrb[0].mxu0 %v1302
      %v1402 = vpop.f32.mrb[0].mxu0
      %v1403 = vadd.f32 0.0, %v1402
      %v1404 = vpop.f32.mrb[0].mxu0
      %1405 = vmatprep.mubr.f32.mxu0 0.0
      %1406 = vmatmul.mubr.f32.gmra.mrb[0].mxu0 %v1305
      %v1407 = vpop.f32.mrb[0].mxu0
      %v1408 = vadd.f32 0.0, %v1407
      %v1409 = vpop.f32.mrb[0].mxu0
      %1410 = vmatprep.mubr.f32.mxu0 0.0
      %1411 = vmatmul.mubr.f32.gmra.mrb[0].mxu0 %v1308
      %v1412 = vpop.f32.mrb[0].mxu0
      %v1413 = vadd.f32 0.0, %v1412
      %v1414 = vpop.f32.mrb[0].mxu0
      %1415 = vmatprep.mubr.f32.mxu0 0.0
      %1416 = vmatmul.mubr.f32.gmra.mrb[0].mxu0 %v1311
      %v1417 = vpop.f32.mrb[0].mxu0
      %v1418 = vadd.f32 0.0, %v1417
      %v1419 = vpop.f32.mrb[0].mxu0
      %1420 = vmatprep.mubr.f32.mxu0 0.0
      %1421 = vmatmul.mubr.f32.gmra.mrb[0].mxu0 %v1314
      %v1422 = vpop.f32.mrb[0].mxu0
      %v1423 = vadd.f32 0.0, %v1422
      %v1424 = vpop.f32.mrb[0].mxu0
      %1425 = vmatprep.mubr.f32.mxu0 0.0
      %1426 = vmatmul.mubr.f32.gmra.mrb[0].mxu0 %v1317
      %v1427 = vpop.f32.mrb[0].mxu0
      %v1428 = vadd.f32 0.0, %v1427
      %v1429 = vpop.f32.mrb[0].mxu0
      %1430 = vmatprep.mubr.f32.mxu0 0.0
      %1431 = vmatmul.mubr.f32.gmra.mrb[0].mxu0 %v1320
      %v1432 = vpop.f32.mrb[0].mxu0
      %v1433 = vadd.f32 0.0, %v1432
      %v1434 = vpop.f32.mrb[0].mxu0
      %1435 = vmatprep.mubr.f32.mxu0 0.0
      %1436 = vmatmul.mubr.f32.gmra.mrb[0].mxu0 %v1323
      %v1437 = vpop.f32.mrb[0].mxu0
      %v1438 = vadd.f32 0.0, %v1437
      %v1439 = vpop.f32.mrb[0].mxu0
      %1440 = vmatprep.mubr.f32.mxu0 0.0
      %1441 = vmatmul.mubr.f32.gmra.mrb[0].mxu0 %v1326
      %v1442 = vpop.f32.mrb[0].mxu0
      %v1443 = vadd.f32 0.0, %v1442
      %v1444 = vpop.f32.mrb[0].mxu0
      %1445 = vdwg.mxu0
      %v1446 = vadd.f32 %v1276, %v1398
      %v1447 = vadd.f32 %v1277, %v1403
      %v1448 = vadd.f32 %v1278, %v1408
      %v1449 = vadd.f32 %v1279, %v1413
      %v1450 = vadd.f32 %v1280, %v1418
      %v1451 = vadd.f32 %v1281, %v1423
      %v1452 = vadd.f32 %v1282, %v1428
      %v1453 = vadd.f32 %v1283, %v1433
      %v1454 = vadd.f32 %v1284, %v1438
      %v1455 = vadd.f32 %v1285, %v1443
      %v1456 = vld [vmem:[#allocation2 + $0x14] sm:$0xff]
      %v1457 = vld [vmem:[#allocation2 + $0x1c] sm:$0xff]
      %v1458 = vld [vmem:[#allocation2 + $0x24] sm:$0xff]
      %v1459 = vld [vmem:[#allocation2 + $0x2c] sm:$0xff]
      %v1460 = vld [vmem:[#allocation2 + $0x34] sm:$0xff]
      %v1461 = vld [vmem:[#allocation2 + $0x3c] sm:$0xff]
      %v1462 = vld [vmem:[#allocation2 + $0x44] sm:$0xff]
      %v1463 = vld [vmem:[#allocation2 + $0x4c] sm:$0xff]
      %v1464 = vld [vmem:[#allocation2 + $0x54] sm:$0xff]
      %v1465 = vld [vmem:[#allocation2 + $0x5c] sm:$0xff]
      %s1466 = scalar_lea.vmem %s1, 24
      %v1467 = vld [vmem:[%s1466] sm:$0xf]
      %v1469 = vsel %vm333, %v1456, 0
      %v1472 = vsel %vm333, %v1457, 0
      %v1475 = vsel %vm333, %v1458, 0
      %v1478 = vsel %vm333, %v1459, 0
      %v1481 = vsel %vm333, %v1460, 0
      %v1484 = vsel %vm333, %v1461, 0
      %v1487 = vsel %vm333, %v1462, 0
      %v1490 = vsel %vm333, %v1463, 0
      %v1493 = vsel %vm333, %v1464, 0
      %v1496 = vsel %vm333, %v1465, 0
      %v1499 = vsel %vm509, %v1467, 0
      %1501 = vmatprep.subr.mxu0 0.0
      %1502 = vmatpush1.msra.mxu0 %v1499
      %1503 = vmatprep.subr.mxu0 0.0
      %1504 = vmatpush1.msra.mxu0 0.0
      %1505 = vmatprep.subr.mxu0 0.0
      %1506 = vmatpush1.msra.mxu0 0.0
      %1507 = vmatprep.subr.mxu0 0.0
      %1508 = vmatpush1.msra.mxu0 0.0
      %1509 = vmatprep.subr.mxu0 0.0
      %1510 = vmatpush1.msra.mxu0 0.0
      %1511 = vmatprep.subr.mxu0 0.0
      %1512 = vmatpush1.msra.mxu0 0.0
      %1513 = vmatprep.subr.mxu0 0.0
      %1514 = vmatpush1.msra.mxu0 0.0
      %1515 = vmatprep.subr.mxu0 0.0
      %1516 = vmatpush1.msra.mxu0 0.0
      %1517 = vmatprep.subr.mxu0 0.0
      %1518 = vmatpush1.msra.mxu0 0.0
      %1519 = vmatprep.subr.mxu0 0.0
      %1520 = vmatpush1.msra.mxu0 0.0
      %1521 = vmatprep.subr.mxu0 0.0
      %1522 = vmatpush1.msra.mxu0 0.0
      %1523 = vmatprep.subr.mxu0 0.0
      %1524 = vmatpush1.msra.mxu0 0.0
      %1525 = vmatprep.subr.mxu0 0.0
      %1526 = vmatpush1.msra.mxu0 0.0
      %1527 = vmatprep.subr.mxu0 0.0
      %1528 = vmatpush1.msra.mxu0 0.0
      %1529 = vmatprep.subr.mxu0 0.0
      %1530 = vmatpush1.msra.mxu0 0.0
      %1531 = vmatprep.subr.mxu0 0.0
      %1532 = vmatpush1.msra.mxu0 0.0
      %1533 = vmatprep.subr.mxu0 0.0
      %1534 = vmatpush1.msra.mxu0 0.0
      %1535 = vmatprep.subr.mxu0 0.0
      %1536 = vmatpush1.msra.mxu0 0.0
      %1537 = vmatprep.subr.mxu0 0.0
      %1538 = vmatpush1.msra.mxu0 0.0
      %1539 = vmatprep.subr.mxu0 0.0
      %1540 = vmatpush1.msra.mxu0 0.0
      %1541 = vmatprep.subr.mxu0 0.0
      %1542 = vmatpush1.msra.mxu0 0.0
      %1543 = vmatprep.subr.mxu0 0.0
      %1544 = vmatpush1.msra.mxu0 0.0
      %1545 = vmatprep.subr.mxu0 0.0
      %1546 = vmatpush1.msra.mxu0 0.0
      %1547 = vmatprep.subr.mxu0 0.0
      %1548 = vmatpush1.msra.mxu0 0.0
      %1549 = vmatprep.subr.mxu0 0.0
      %1550 = vmatpush1.msra.mxu0 0.0
      %1551 = vmatprep.subr.mxu0 0.0
      %1552 = vmatpush1.msra.mxu0 0.0
      %1553 = vmatprep.subr.mxu0 0.0
      %1554 = vmatpush1.msra.mxu0 0.0
      %1555 = vmatprep.subr.mxu0 0.0
      %1556 = vmatpush1.msra.mxu0 0.0
      %1557 = vmatprep.subr.mxu0 0.0
      %1558 = vmatpush1.msra.mxu0 0.0
      %1559 = vmatprep.subr.mxu0 0.0
      %1560 = vmatpush1.msra.mxu0 0.0
      %1561 = vmatprep.subr.mxu0 0.0
      %1562 = vmatpush1.msra.mxu0 0.0
      %1563 = vmatprep.subr.mxu0 0.0
      %1564 = vmatpush1.msra.mxu0 0.0
      %1565 = vmatprep.mubr.f32.mxu0 0.0
      %1566 = vmatmul.mubr.f32.gmra.mrb[0].mxu0 %v1469
      %v1567 = vpop.f32.mrb[0].mxu0
      %v1568 = vadd.f32 0.0, %v1567
      %v1569 = vpop.f32.mrb[0].mxu0
      %1570 = vmatprep.mubr.f32.mxu0 0.0
      %1571 = vmatmul.mubr.f32.gmra.mrb[0].mxu0 %v1472
      %v1572 = vpop.f32.mrb[0].mxu0
      %v1573 = vadd.f32 0.0, %v1572
      %v1574 = vpop.f32.mrb[0].mxu0
      %1575 = vmatprep.mubr.f32.mxu0 0.0
      %1576 = vmatmul.mubr.f32.gmra.mrb[0].mxu0 %v1475
      %v1577 = vpop.f32.mrb[0].mxu0
      %v1578 = vadd.f32 0.0, %v1577
      %v1579 = vpop.f32.mrb[0].mxu0
      %1580 = vmatprep.mubr.f32.mxu0 0.0
      %1581 = vmatmul.mubr.f32.gmra.mrb[0].mxu0 %v1478
      %v1582 = vpop.f32.mrb[0].mxu0
      %v1583 = vadd.f32 0.0, %v1582
      %v1584 = vpop.f32.mrb[0].mxu0
      %1585 = vmatprep.mubr.f32.mxu0 0.0
      %1586 = vmatmul.mubr.f32.gmra.mrb[0].mxu0 %v1481
      %v1587 = vpop.f32.mrb[0].mxu0
      %v1588 = vadd.f32 0.0, %v1587
      %v1589 = vpop.f32.mrb[0].mxu0
      %1590 = vmatprep.mubr.f32.mxu0 0.0
      %1591 = vmatmul.mubr.f32.gmra.mrb[0].mxu0 %v1484
      %v1592 = vpop.f32.mrb[0].mxu0
      %v1593 = vadd.f32 0.0, %v1592
      %v1594 = vpop.f32.mrb[0].mxu0
      %1595 = vmatprep.mubr.f32.mxu0 0.0
      %1596 = vmatmul.mubr.f32.gmra.mrb[0].mxu0 %v1487
      %v1597 = vpop.f32.mrb[0].mxu0
      %v1598 = vadd.f32 0.0, %v1597
      %v1599 = vpop.f32.mrb[0].mxu0
      %1600 = vmatprep.mubr.f32.mxu0 0.0
      %1601 = vmatmul.mubr.f32.gmra.mrb[0].mxu0 %v1490
      %v1602 = vpop.f32.mrb[0].mxu0
      %v1603 = vadd.f32 0.0, %v1602
      %v1604 = vpop.f32.mrb[0].mxu0
      %1605 = vmatprep.mubr.f32.mxu0 0.0
      %1606 = vmatmul.mubr.f32.gmra.mrb[0].mxu0 %v1493
      %v1607 = vpop.f32.mrb[0].mxu0
      %v1608 = vadd.f32 0.0, %v1607
      %v1609 = vpop.f32.mrb[0].mxu0
      %1610 = vmatprep.mubr.f32.mxu0 0.0
      %1611 = vmatmul.mubr.f32.gmra.mrb[0].mxu0 %v1496
      %v1612 = vpop.f32.mrb[0].mxu0
      %v1613 = vadd.f32 0.0, %v1612
      %v1614 = vpop.f32.mrb[0].mxu0
      %1615 = vdwg.mxu0
      %v1616 = vadd.f32 %v1446, %v1568
      %v1617 = vadd.f32 %v1447, %v1573
      %v1618 = vadd.f32 %v1448, %v1578
      %v1619 = vadd.f32 %v1449, %v1583
      %v1620 = vadd.f32 %v1450, %v1588
      %v1621 = vadd.f32 %v1451, %v1593
      %v1622 = vadd.f32 %v1452, %v1598
      %v1623 = vadd.f32 %v1453, %v1603
      %v1624 = vadd.f32 %v1454, %v1608
      %v1625 = vadd.f32 %v1455, %v1613
      %v1626 = vld [vmem:[#allocation2 + $0x15] sm:$0xff]
      %v1627 = vld [vmem:[#allocation2 + $0x1d] sm:$0xff]
      %v1628 = vld [vmem:[#allocation2 + $0x25] sm:$0xff]
      %v1629 = vld [vmem:[#allocation2 + $0x2d] sm:$0xff]
      %v1630 = vld [vmem:[#allocation2 + $0x35] sm:$0xff]
      %v1631 = vld [vmem:[#allocation2 + $0x3d] sm:$0xff]
      %v1632 = vld [vmem:[#allocation2 + $0x45] sm:$0xff]
      %v1633 = vld [vmem:[#allocation2 + $0x4d] sm:$0xff]
      %v1634 = vld [vmem:[#allocation2 + $0x55] sm:$0xff]
      %v1635 = vld [vmem:[#allocation2 + $0x5d] sm:$0xff]
      %s1636 = scalar_lea.vmem %s1, 28
      %v1637 = vld [vmem:[%s1636] sm:$0xf]
      %v1639 = vsel %vm333, %v1626, 0
      %v1642 = vsel %vm333, %v1627, 0
      %v1645 = vsel %vm333, %v1628, 0
      %v1648 = vsel %vm333, %v1629, 0
      %v1651 = vsel %vm333, %v1630, 0
      %v1654 = vsel %vm333, %v1631, 0
      %v1657 = vsel %vm333, %v1632, 0
      %v1660 = vsel %vm333, %v1633, 0
      %v1663 = vsel %vm333, %v1634, 0
      %v1666 = vsel %vm333, %v1635, 0
      %v1669 = vsel %vm509, %v1637, 0
      %1671 = vmatprep.subr.mxu0 0.0
      %1672 = vmatpush1.msra.mxu0 %v1669
      %1673 = vmatprep.subr.mxu0 0.0
      %1674 = vmatpush1.msra.mxu0 0.0
      %1675 = vmatprep.subr.mxu0 0.0
      %1676 = vmatpush1.msra.mxu0 0.0
      %1677 = vmatprep.subr.mxu0 0.0
      %1678 = vmatpush1.msra.mxu0 0.0
      %1679 = vmatprep.subr.mxu0 0.0
      %1680 = vmatpush1.msra.mxu0 0.0
      %1681 = vmatprep.subr.mxu0 0.0
      %1682 = vmatpush1.msra.mxu0 0.0
      %1683 = vmatprep.subr.mxu0 0.0
      %1684 = vmatpush1.msra.mxu0 0.0
      %1685 = vmatprep.subr.mxu0 0.0
      %1686 = vmatpush1.msra.mxu0 0.0
      %1687 = vmatprep.subr.mxu0 0.0
      %1688 = vmatpush1.msra.mxu0 0.0
      %1689 = vmatprep.subr.mxu0 0.0
      %1690 = vmatpush1.msra.mxu0 0.0
      %1691 = vmatprep.subr.mxu0 0.0
      %1692 = vmatpush1.msra.mxu0 0.0
      %1693 = vmatprep.subr.mxu0 0.0
      %1694 = vmatpush1.msra.mxu0 0.0
      %1695 = vmatprep.subr.mxu0 0.0
      %1696 = vmatpush1.msra.mxu0 0.0
      %1697 = vmatprep.subr.mxu0 0.0
      %1698 = vmatpush1.msra.mxu0 0.0
      %1699 = vmatprep.subr.mxu0 0.0
      %1700 = vmatpush1.msra.mxu0 0.0
      %1701 = vmatprep.subr.mxu0 0.0
      %1702 = vmatpush1.msra.mxu0 0.0
      %1703 = vmatprep.subr.mxu0 0.0
      %1704 = vmatpush1.msra.mxu0 0.0
      %1705 = vmatprep.subr.mxu0 0.0
      %1706 = vmatpush1.msra.mxu0 0.0
      %1707 = vmatprep.subr.mxu0 0.0
      %1708 = vmatpush1.msra.mxu0 0.0
      %1709 = vmatprep.subr.mxu0 0.0
      %1710 = vmatpush1.msra.mxu0 0.0
      %1711 = vmatprep.subr.mxu0 0.0
      %1712 = vmatpush1.msra.mxu0 0.0
      %1713 = vmatprep.subr.mxu0 0.0
      %1714 = vmatpush1.msra.mxu0 0.0
      %1715 = vmatprep.subr.mxu0 0.0
      %1716 = vmatpush1.msra.mxu0 0.0
      %1717 = vmatprep.subr.mxu0 0.0
      %1718 = vmatpush1.msra.mxu0 0.0
      %1719 = vmatprep.subr.mxu0 0.0
      %1720 = vmatpush1.msra.mxu0 0.0
      %1721 = vmatprep.subr.mxu0 0.0
      %1722 = vmatpush1.msra.mxu0 0.0
      %1723 = vmatprep.subr.mxu0 0.0
      %1724 = vmatpush1.msra.mxu0 0.0
      %1725 = vmatprep.subr.mxu0 0.0
      %1726 = vmatpush1.msra.mxu0 0.0
      %1727 = vmatprep.subr.mxu0 0.0
      %1728 = vmatpush1.msra.mxu0 0.0
      %1729 = vmatprep.subr.mxu0 0.0
      %1730 = vmatpush1.msra.mxu0 0.0
      %1731 = vmatprep.subr.mxu0 0.0
      %1732 = vmatpush1.msra.mxu0 0.0
      %1733 = vmatprep.subr.mxu0 0.0
      %1734 = vmatpush1.msra.mxu0 0.0
      %1735 = vmatprep.mubr.f32.mxu0 0.0
      %1736 = vmatmul.mubr.f32.gmra.mrb[0].mxu0 %v1639
      %v1737 = vpop.f32.mrb[0].mxu0
      %v1738 = vadd.f32 0.0, %v1737
      %v1739 = vpop.f32.mrb[0].mxu0
      %1740 = vmatprep.mubr.f32.mxu0 0.0
      %1741 = vmatmul.mubr.f32.gmra.mrb[0].mxu0 %v1642
      %v1742 = vpop.f32.mrb[0].mxu0
      %v1743 = vadd.f32 0.0, %v1742
      %v1744 = vpop.f32.mrb[0].mxu0
      %1745 = vmatprep.mubr.f32.mxu0 0.0
      %1746 = vmatmul.mubr.f32.gmra.mrb[0].mxu0 %v1645
      %v1747 = vpop.f32.mrb[0].mxu0
      %v1748 = vadd.f32 0.0, %v1747
      %v1749 = vpop.f32.mrb[0].mxu0
      %1750 = vmatprep.mubr.f32.mxu0 0.0
      %1751 = vmatmul.mubr.f32.gmra.mrb[0].mxu0 %v1648
      %v1752 = vpop.f32.mrb[0].mxu0
      %v1753 = vadd.f32 0.0, %v1752
      %v1754 = vpop.f32.mrb[0].mxu0
      %1755 = vmatprep.mubr.f32.mxu0 0.0
      %1756 = vmatmul.mubr.f32.gmra.mrb[0].mxu0 %v1651
      %v1757 = vpop.f32.mrb[0].mxu0
      %v1758 = vadd.f32 0.0, %v1757
      %v1759 = vpop.f32.mrb[0].mxu0
      %1760 = vmatprep.mubr.f32.mxu0 0.0
      %1761 = vmatmul.mubr.f32.gmra.mrb[0].mxu0 %v1654
      %v1762 = vpop.f32.mrb[0].mxu0
      %v1763 = vadd.f32 0.0, %v1762
      %v1764 = vpop.f32.mrb[0].mxu0
      %1765 = vmatprep.mubr.f32.mxu0 0.0
      %1766 = vmatmul.mubr.f32.gmra.mrb[0].mxu0 %v1657
      %v1767 = vpop.f32.mrb[0].mxu0
      %v1768 = vadd.f32 0.0, %v1767
      %v1769 = vpop.f32.mrb[0].mxu0
      %1770 = vmatprep.mubr.f32.mxu0 0.0
      %1771 = vmatmul.mubr.f32.gmra.mrb[0].mxu0 %v1660
      %v1772 = vpop.f32.mrb[0].mxu0
      %v1773 = vadd.f32 0.0, %v1772
      %v1774 = vpop.f32.mrb[0].mxu0
      %1775 = vmatprep.mubr.f32.mxu0 0.0
      %1776 = vmatmul.mubr.f32.gmra.mrb[0].mxu0 %v1663
      %v1777 = vpop.f32.mrb[0].mxu0
      %v1778 = vadd.f32 0.0, %v1777
      %v1779 = vpop.f32.mrb[0].mxu0
      %1780 = vmatprep.mubr.f32.mxu0 0.0
      %1781 = vmatmul.mubr.f32.gmra.mrb[0].mxu0 %v1666
      %v1782 = vpop.f32.mrb[0].mxu0
      %v1783 = vadd.f32 0.0, %v1782
      %v1784 = vpop.f32.mrb[0].mxu0
      %1785 = vdwg.mxu0
      %v1786 = vadd.f32 %v1616, %v1738
      %v1787 = vadd.f32 %v1617, %v1743
      %v1788 = vadd.f32 %v1618, %v1748
      %v1789 = vadd.f32 %v1619, %v1753
      %v1790 = vadd.f32 %v1620, %v1758
      %v1791 = vadd.f32 %v1621, %v1763
      %v1792 = vadd.f32 %v1622, %v1768
      %v1793 = vadd.f32 %v1623, %v1773
      %v1794 = vadd.f32 %v1624, %v1778
      %v1795 = vadd.f32 %v1625, %v1783
      %v1796 = vld [vmem:[#allocation2 + $0x16] sm:$0xff]
      %v1797 = vld [vmem:[#allocation2 + $0x1e] sm:$0xff]
      %v1798 = vld [vmem:[#allocation2 + $0x26] sm:$0xff]
      %v1799 = vld [vmem:[#allocation2 + $0x2e] sm:$0xff]
      %v1800 = vld [vmem:[#allocation2 + $0x36] sm:$0xff]
      %v1801 = vld [vmem:[#allocation2 + $0x3e] sm:$0xff]
      %v1802 = vld [vmem:[#allocation2 + $0x46] sm:$0xff]
      %v1803 = vld [vmem:[#allocation2 + $0x4e] sm:$0xff]
      %v1804 = vld [vmem:[#allocation2 + $0x56] sm:$0xff]
      %v1805 = vld [vmem:[#allocation2 + $0x5e] sm:$0xff]
      %s1806 = scalar_lea.vmem %s1, 32
      %v1807 = vld [vmem:[%s1806] sm:$0xf]
      %v1809 = vsel %vm333, %v1796, 0
      %v1812 = vsel %vm333, %v1797, 0
      %v1815 = vsel %vm333, %v1798, 0
      %v1818 = vsel %vm333, %v1799, 0
      %v1821 = vsel %vm333, %v1800, 0
      %v1824 = vsel %vm333, %v1801, 0
      %v1827 = vsel %vm333, %v1802, 0
      %v1830 = vsel %vm333, %v1803, 0
      %v1833 = vsel %vm333, %v1804, 0
      %v1836 = vsel %vm333, %v1805, 0
      %v1839 = vsel %vm509, %v1807, 0
      %1841 = vmatprep.subr.mxu0 0.0
      %1842 = vmatpush1.msra.mxu0 %v1839
      %1843 = vmatprep.subr.mxu0 0.0
      %1844 = vmatpush1.msra.mxu0 0.0
      %1845 = vmatprep.subr.mxu0 0.0
      %1846 = vmatpush1.msra.mxu0 0.0
      %1847 = vmatprep.subr.mxu0 0.0
      %1848 = vmatpush1.msra.mxu0 0.0
      %1849 = vmatprep.subr.mxu0 0.0
      %1850 = vmatpush1.msra.mxu0 0.0
      %1851 = vmatprep.subr.mxu0 0.0
      %1852 = vmatpush1.msra.mxu0 0.0
      %1853 = vmatprep.subr.mxu0 0.0
      %1854 = vmatpush1.msra.mxu0 0.0
      %1855 = vmatprep.subr.mxu0 0.0
      %1856 = vmatpush1.msra.mxu0 0.0
      %1857 = vmatprep.subr.mxu0 0.0
      %1858 = vmatpush1.msra.mxu0 0.0
      %1859 = vmatprep.subr.mxu0 0.0
      %1860 = vmatpush1.msra.mxu0 0.0
      %1861 = vmatprep.subr.mxu0 0.0
      %1862 = vmatpush1.msra.mxu0 0.0
      %1863 = vmatprep.subr.mxu0 0.0
      %1864 = vmatpush1.msra.mxu0 0.0
      %1865 = vmatprep.subr.mxu0 0.0
      %1866 = vmatpush1.msra.mxu0 0.0
      %1867 = vmatprep.subr.mxu0 0.0
      %1868 = vmatpush1.msra.mxu0 0.0
      %1869 = vmatprep.subr.mxu0 0.0
      %1870 = vmatpush1.msra.mxu0 0.0
      %1871 = vmatprep.subr.mxu0 0.0
      %1872 = vmatpush1.msra.mxu0 0.0
      %1873 = vmatprep.subr.mxu0 0.0
      %1874 = vmatpush1.msra.mxu0 0.0
      %1875 = vmatprep.subr.mxu0 0.0
      %1876 = vmatpush1.msra.mxu0 0.0
      %1877 = vmatprep.subr.mxu0 0.0
      %1878 = vmatpush1.msra.mxu0 0.0
      %1879 = vmatprep.subr.mxu0 0.0
      %1880 = vmatpush1.msra.mxu0 0.0
      %1881 = vmatprep.subr.mxu0 0.0
      %1882 = vmatpush1.msra.mxu0 0.0
      %1883 = vmatprep.subr.mxu0 0.0
      %1884 = vmatpush1.msra.mxu0 0.0
      %1885 = vmatprep.subr.mxu0 0.0
      %1886 = vmatpush1.msra.mxu0 0.0
      %1887 = vmatprep.subr.mxu0 0.0
      %1888 = vmatpush1.msra.mxu0 0.0
      %1889 = vmatprep.subr.mxu0 0.0
      %1890 = vmatpush1.msra.mxu0 0.0
      %1891 = vmatprep.subr.mxu0 0.0
      %1892 = vmatpush1.msra.mxu0 0.0
      %1893 = vmatprep.subr.mxu0 0.0
      %1894 = vmatpush1.msra.mxu0 0.0
      %1895 = vmatprep.subr.mxu0 0.0
      %1896 = vmatpush1.msra.mxu0 0.0
      %1897 = vmatprep.subr.mxu0 0.0
      %1898 = vmatpush1.msra.mxu0 0.0
      %1899 = vmatprep.subr.mxu0 0.0
      %1900 = vmatpush1.msra.mxu0 0.0
      %1901 = vmatprep.subr.mxu0 0.0
      %1902 = vmatpush1.msra.mxu0 0.0
      %1903 = vmatprep.subr.mxu0 0.0
      %1904 = vmatpush1.msra.mxu0 0.0
      %1905 = vmatprep.mubr.f32.mxu0 0.0
      %1906 = vmatmul.mubr.f32.gmra.mrb[0].mxu0 %v1809
      %v1907 = vpop.f32.mrb[0].mxu0
      %v1908 = vadd.f32 0.0, %v1907
      %v1909 = vpop.f32.mrb[0].mxu0
      %1910 = vmatprep.mubr.f32.mxu0 0.0
      %1911 = vmatmul.mubr.f32.gmra.mrb[0].mxu0 %v1812
      %v1912 = vpop.f32.mrb[0].mxu0
      %v1913 = vadd.f32 0.0, %v1912
      %v1914 = vpop.f32.mrb[0].mxu0
      %1915 = vmatprep.mubr.f32.mxu0 0.0
      %1916 = vmatmul.mubr.f32.gmra.mrb[0].mxu0 %v1815
      %v1917 = vpop.f32.mrb[0].mxu0
      %v1918 = vadd.f32 0.0, %v1917
      %v1919 = vpop.f32.mrb[0].mxu0
      %1920 = vmatprep.mubr.f32.mxu0 0.0
      %1921 = vmatmul.mubr.f32.gmra.mrb[0].mxu0 %v1818
      %v1922 = vpop.f32.mrb[0].mxu0
      %v1923 = vadd.f32 0.0, %v1922
      %v1924 = vpop.f32.mrb[0].mxu0
      %1925 = vmatprep.mubr.f32.mxu0 0.0
      %1926 = vmatmul.mubr.f32.gmra.mrb[0].mxu0 %v1821
      %v1927 = vpop.f32.mrb[0].mxu0
      %v1928 = vadd.f32 0.0, %v1927
      %v1929 = vpop.f32.mrb[0].mxu0
      %1930 = vmatprep.mubr.f32.mxu0 0.0
      %1931 = vmatmul.mubr.f32.gmra.mrb[0].mxu0 %v1824
      %v1932 = vpop.f32.mrb[0].mxu0
      %v1933 = vadd.f32 0.0, %v1932
      %v1934 = vpop.f32.mrb[0].mxu0
      %1935 = vmatprep.mubr.f32.mxu0 0.0
      %1936 = vmatmul.mubr.f32.gmra.mrb[0].mxu0 %v1827
      %v1937 = vpop.f32.mrb[0].mxu0
      %v1938 = vadd.f32 0.0, %v1937
      %v1939 = vpop.f32.mrb[0].mxu0
      %1940 = vmatprep.mubr.f32.mxu0 0.0
      %1941 = vmatmul.mubr.f32.gmra.mrb[0].mxu0 %v1830
      %v1942 = vpop.f32.mrb[0].mxu0
      %v1943 = vadd.f32 0.0, %v1942
      %v1944 = vpop.f32.mrb[0].mxu0
      %1945 = vmatprep.mubr.f32.mxu0 0.0
      %1946 = vmatmul.mubr.f32.gmra.mrb[0].mxu0 %v1833
      %v1947 = vpop.f32.mrb[0].mxu0
      %v1948 = vadd.f32 0.0, %v1947
      %v1949 = vpop.f32.mrb[0].mxu0
      %1950 = vmatprep.mubr.f32.mxu0 0.0
      %1951 = vmatmul.mubr.f32.gmra.mrb[0].mxu0 %v1836
      %v1952 = vpop.f32.mrb[0].mxu0
      %v1953 = vadd.f32 0.0, %v1952
      %v1954 = vpop.f32.mrb[0].mxu0
      %1955 = vdwg.mxu0
      %v1956 = vadd.f32 %v1786, %v1908
      %v1957 = vadd.f32 %v1787, %v1913
      %v1958 = vadd.f32 %v1788, %v1918
      %v1959 = vadd.f32 %v1789, %v1923
      %v1960 = vadd.f32 %v1790, %v1928
      %v1961 = vadd.f32 %v1791, %v1933
      %v1962 = vadd.f32 %v1792, %v1938
      %v1963 = vadd.f32 %v1793, %v1943
      %v1964 = vadd.f32 %v1794, %v1948
      %v1965 = vadd.f32 %v1795, %v1953
      %v1966 = vld [vmem:[%s2] sm:$0x1]
      %v1968 = vlaneseq
      %v1969 = vshrl.u32 %v1968, 7
      %v1970 = vsub.s32 0, %v1969
      %v1971 = vrot.slane %v1966, %v1970
      %v1973 = vadd.f32 %v1956, %v1971
      %v1974 = vadd.f32 %v1957, %v1971
      %v1975 = vadd.f32 %v1958, %v1971
      %v1976 = vadd.f32 %v1959, %v1971
      %v1977 = vadd.f32 %v1960, %v1971
      %v1978 = vadd.f32 %v1961, %v1971
      %v1979 = vadd.f32 %v1962, %v1971
      %v1980 = vadd.f32 %v1963, %v1971
      %v1981 = vadd.f32 %v1964, %v1971
      %v1982 = vadd.f32 %v1965, %v1971
      %v1983 = vmax.f32 %v1973, 0.0
      %v1984 = vmax.f32 %v1974, 0.0
      %v1985 = vmax.f32 %v1975, 0.0
      %v1986 = vmax.f32 %v1976, 0.0
      %v1987 = vmax.f32 %v1977, 0.0
      %v1988 = vmax.f32 %v1978, 0.0
      %v1989 = vmax.f32 %v1979, 0.0
      %v1990 = vmax.f32 %v1980, 0.0
      %v1991 = vmax.f32 %v1981, 0.0
      %v1992 = vmax.f32 %v1982, 0.0
      %v1993 = vld [vmem:[%s3] sm:$0x1]
      %v1995 = vlaneseq
      %v1996 = vshrl.u32 %v1995, 7
      %v1997 = vsub.s32 0, %v1996
      %v1998 = vrot.slane %v1993, %v1997
      %v2000 = vmul.f32 %v1983, %v1998
      %v2001 = vmul.f32 %v1984, %v1998
      %v2002 = vmul.f32 %v1985, %v1998
      %v2003 = vmul.f32 %v1986, %v1998
      %v2004 = vmul.f32 %v1987, %v1998
      %v2005 = vmul.f32 %v1988, %v1998
      %v2006 = vmul.f32 %v1989, %v1998
      %v2007 = vmul.f32 %v1990, %v1998
      %v2008 = vmul.f32 %v1991, %v1998
      %v2009 = vmul.f32 %v1992, %v1998
      %v2010 = vld [vmem:[%s4] sm:$0x1]
      %v2012 = vlaneseq
      %v2013 = vshrl.u32 %v2012, 7
      %v2014 = vsub.s32 0, %v2013
      %v2015 = vrot.slane %v2010, %v2014
      %v2017 = vadd.f32 %v2000, %v2015
      %v2018 = vadd.f32 %v2001, %v2015
      %v2019 = vadd.f32 %v2002, %v2015
      %v2020 = vadd.f32 %v2003, %v2015
      %v2021 = vadd.f32 %v2004, %v2015
      %v2022 = vadd.f32 %v2005, %v2015
      %v2023 = vadd.f32 %v2006, %v2015
      %v2024 = vadd.f32 %v2007, %v2015
      %v2025 = vadd.f32 %v2008, %v2015
      %v2026 = vadd.f32 %v2009, %v2015
      %2027 = vst.msk [vmem:[#allocation3 + $0xb] sm:$0xff] %vm347, %v2017
      %vm2028 = vcmask 64514
      %2029 = vst.msk [vmem:[#allocation3 + $0x13] sm:$0xfc] %vm2028, %v2018
      %vm2030 = vcmask 58368
      %2031 = vst.msk [vmem:[#allocation3 + $0x1b] sm:$0x3] %vm2030, %v2019
      %vm2032 = vcmask 64516
      %2033 = vst.msk [vmem:[#allocation3 + $0x1b] sm:$0xf0] %vm2032, %v2019
      %vm2034 = vcmask 60416
      %2035 = vst.msk [vmem:[#allocation3 + $0x23] sm:$0xf] %vm2034, %v2020
      %vm2036 = vcmask 64518
      %2037 = vst.msk [vmem:[#allocation3 + $0x23] sm:$0xc0] %vm2036, %v2020
      %vm2038 = vcmask 62464
      %2039 = vst.msk [vmem:[#allocation3 + $0x2b] sm:$0x3f] %vm2038, %v2021
      %2040 = vst.msk [vmem:[#allocation3 + $0x33] sm:$0xff] %vm347, %v2022
      %2041 = vst.msk [vmem:[#allocation3 + $0x3b] sm:$0xfc] %vm2028, %v2023
      %2042 = vst.msk [vmem:[#allocation3 + $0x43] sm:$0x3] %vm2030, %v2024
      %2043 = vst.msk [vmem:[#allocation3 + $0x43] sm:$0xf0] %vm2032, %v2024
      %2044 = vst.msk [vmem:[#allocation3 + $0x4b] sm:$0xf] %vm2034, %v2025
      %2045 = vst.msk [vmem:[#allocation3 + $0x4b] sm:$0xc0] %vm2036, %v2025
      %2046 = vst.msk [vmem:[#allocation3 + $0x53] sm:$0x3f] %vm2038, %v2026
      %v2047 = vld [vmem:[#allocation3] sm:$0xff]
      %v2048 = vld [vmem:[#allocation3 + $0x8] sm:$0xff]
      %v2049 = vld [vmem:[#allocation3 + $0x10] sm:$0xff]
      %v2050 = vld [vmem:[#allocation3 + $0x18] sm:$0xff]
      %v2051 = vld [vmem:[#allocation3 + $0x20] sm:$0xff]
      %v2052 = vld [vmem:[#allocation3 + $0x28] sm:$0xff]
      %v2053 = vld [vmem:[#allocation3 + $0x30] sm:$0xff]
      %v2054 = vld [vmem:[#allocation3 + $0x38] sm:$0xff]
      %v2055 = vld [vmem:[#allocation3 + $0x40] sm:$0xff]
      %v2056 = vld [vmem:[#allocation3 + $0x48] sm:$0xff]
      %v2057 = vld [vmem:[%s5] sm:$0xff]
      %v2058 = vld [vmem:[#allocation3 + $0x1] sm:$0xff]
      %v2059 = vld [vmem:[#allocation3 + $0x9] sm:$0xff]
      %v2060 = vld [vmem:[#allocation3 + $0x11] sm:$0xff]
      %v2061 = vld [vmem:[#allocation3 + $0x19] sm:$0xff]
      %v2062 = vld [vmem:[#allocation3 + $0x21] sm:$0xff]
      %v2063 = vld [vmem:[#allocation3 + $0x29] sm:$0xff]
      %v2064 = vld [vmem:[#allocation3 + $0x31] sm:$0xff]
      %v2065 = vld [vmem:[#allocation3 + $0x39] sm:$0xff]
      %v2066 = vld [vmem:[#allocation3 + $0x41] sm:$0xff]
      %v2067 = vld [vmem:[#allocation3 + $0x49] sm:$0xff]
      %s2068 = scalar_lea.vmem %s5, 8
      %v2069 = vld [vmem:[%s2068] sm:$0xff]
      %v2071 = vsel %vm347, %v2058, 0
      %v2074 = vsel %vm347, %v2059, 0
      %v2077 = vsel %vm347, %v2060, 0
      %v2080 = vsel %vm347, %v2061, 0
      %v2083 = vsel %vm347, %v2062, 0
      %v2086 = vsel %vm347, %v2063, 0
      %v2089 = vsel %vm347, %v2064, 0
      %v2092 = vsel %vm347, %v2065, 0
      %v2095 = vsel %vm347, %v2066, 0
      %v2098 = vsel %vm347, %v2067, 0
      %2100 = vmatprep.subr.mxu0 0.0
      %2101 = vmatpush1.msra.mxu0 %v2069
      %2102 = vmatprep.subr.mxu0 0.0
      %2103 = vmatpush1.msra.mxu0 0.0
      %2104 = vmatprep.subr.mxu0 0.0
      %2105 = vmatpush1.msra.mxu0 0.0
      %2106 = vmatprep.subr.mxu0 0.0
      %2107 = vmatpush1.msra.mxu0 0.0
      %2108 = vmatprep.subr.mxu0 0.0
      %2109 = vmatpush1.msra.mxu0 0.0
      %2110 = vmatprep.subr.mxu0 0.0
      %2111 = vmatpush1.msra.mxu0 0.0
      %2112 = vmatprep.subr.mxu0 0.0
      %2113 = vmatpush1.msra.mxu0 0.0
      %2114 = vmatprep.subr.mxu0 0.0
      %2115 = vmatpush1.msra.mxu0 0.0
      %2116 = vmatprep.subr.mxu0 0.0
      %2117 = vmatpush1.msra.mxu0 0.0
      %2118 = vmatprep.subr.mxu0 0.0
      %2119 = vmatpush1.msra.mxu0 0.0
      %2120 = vmatprep.subr.mxu0 0.0
      %2121 = vmatpush1.msra.mxu0 0.0
      %2122 = vmatprep.subr.mxu0 0.0
      %2123 = vmatpush1.msra.mxu0 0.0
      %2124 = vmatprep.subr.mxu0 0.0
      %2125 = vmatpush1.msra.mxu0 0.0
      %2126 = vmatprep.subr.mxu0 0.0
      %2127 = vmatpush1.msra.mxu0 0.0
      %2128 = vmatprep.subr.mxu0 0.0
      %2129 = vmatpush1.msra.mxu0 0.0
      %2130 = vmatprep.subr.mxu0 0.0
      %2131 = vmatpush1.msra.mxu0 0.0
      %2132 = vmatprep.subr.mxu0 0.0
      %2133 = vmatpush1.msra.mxu0 0.0
      %2134 = vmatprep.subr.mxu0 0.0
      %2135 = vmatpush1.msra.mxu0 0.0
      %2136 = vmatprep.subr.mxu0 0.0
      %2137 = vmatpush1.msra.mxu0 0.0
      %2138 = vmatprep.subr.mxu0 0.0
      %2139 = vmatpush1.msra.mxu0 0.0
      %2140 = vmatprep.subr.mxu0 0.0
      %2141 = vmatpush1.msra.mxu0 0.0
      %2142 = vmatprep.subr.mxu0 0.0
      %2143 = vmatpush1.msra.mxu0 0.0
      %2144 = vmatprep.subr.mxu0 0.0
      %2145 = vmatpush1.msra.mxu0 0.0
      %2146 = vmatprep.subr.mxu0 0.0
      %2147 = vmatpush1.msra.mxu0 0.0
      %2148 = vmatprep.subr.mxu0 0.0
      %2149 = vmatpush1.msra.mxu0 0.0
      %2150 = vmatprep.subr.mxu0 0.0
      %2151 = vmatpush1.msra.mxu0 0.0
      %2152 = vmatprep.subr.mxu0 0.0
      %2153 = vmatpush1.msra.mxu0 0.0
      %2154 = vmatprep.subr.mxu0 0.0
      %2155 = vmatpush1.msra.mxu0 0.0
      %2156 = vmatprep.subr.mxu0 0.0
      %2157 = vmatpush1.msra.mxu0 0.0
      %2158 = vmatprep.subr.mxu0 0.0
      %2159 = vmatpush1.msra.mxu0 0.0
      %2160 = vmatprep.subr.mxu0 0.0
      %2161 = vmatpush1.msra.mxu0 0.0
      %2162 = vmatprep.subr.mxu0 0.0
      %2163 = vmatpush1.msra.mxu0 0.0
      %2164 = vmatprep.mubr.f32.mxu0 0.0
      %2165 = vmatmul.mubr.f32.gmra.mrb[0].mxu0 %v2071
      %v2166 = vpop.f32.mrb[0].mxu0
      %v2167 = vadd.f32 0.0, %v2166
      %v2168 = vpop.f32.mrb[0].mxu0
      %2169 = vmatprep.mubr.f32.mxu0 0.0
      %2170 = vmatmul.mubr.f32.gmra.mrb[0].mxu0 %v2074
      %v2171 = vpop.f32.mrb[0].mxu0
      %v2172 = vadd.f32 0.0, %v2171
      %v2173 = vpop.f32.mrb[0].mxu0
      %2174 = vmatprep.mubr.f32.mxu0 0.0
      %2175 = vmatmul.mubr.f32.gmra.mrb[0].mxu0 %v2077
      %v2176 = vpop.f32.mrb[0].mxu0
      %v2177 = vadd.f32 0.0, %v2176
      %v2178 = vpop.f32.mrb[0].mxu0
      %2179 = vmatprep.mubr.f32.mxu0 0.0
      %2180 = vmatmul.mubr.f32.gmra.mrb[0].mxu0 %v2080
      %v2181 = vpop.f32.mrb[0].mxu0
      %v2182 = vadd.f32 0.0, %v2181
      %v2183 = vpop.f32.mrb[0].mxu0
      %2184 = vmatprep.mubr.f32.mxu0 0.0
      %2185 = vmatmul.mubr.f32.gmra.mrb[0].mxu0 %v2083
      %v2186 = vpop.f32.mrb[0].mxu0
      %v2187 = vadd.f32 0.0, %v2186
      %v2188 = vpop.f32.mrb[0].mxu0
      %2189 = vmatprep.mubr.f32.mxu0 0.0
      %2190 = vmatmul.mubr.f32.gmra.mrb[0].mxu0 %v2086
      %v2191 = vpop.f32.mrb[0].mxu0
      %v2192 = vadd.f32 0.0, %v2191
      %v2193 = vpop.f32.mrb[0].mxu0
      %2194 = vmatprep.mubr.f32.mxu0 0.0
      %2195 = vmatmul.mubr.f32.gmra.mrb[0].mxu0 %v2089
      %v2196 = vpop.f32.mrb[0].mxu0
      %v2197 = vadd.f32 0.0, %v2196
      %v2198 = vpop.f32.mrb[0].mxu0
      %2199 = vmatprep.mubr.f32.mxu0 0.0
      %2200 = vmatmul.mubr.f32.gmra.mrb[0].mxu0 %v2092
      %v2201 = vpop.f32.mrb[0].mxu0
      %v2202 = vadd.f32 0.0, %v2201
      %v2203 = vpop.f32.mrb[0].mxu0
      %2204 = vmatprep.mubr.f32.mxu0 0.0
      %2205 = vmatmul.mubr.f32.gmra.mrb[0].mxu0 %v2095
      %v2206 = vpop.f32.mrb[0].mxu0
      %v2207 = vadd.f32 0.0, %v2206
      %v2208 = vpop.f32.mrb[0].mxu0
      %2209 = vmatprep.mubr.f32.mxu0 0.0
      %2210 = vmatmul.mubr.f32.gmra.mrb[0].mxu0 %v2098
      %v2211 = vpop.f32.mrb[0].mxu0
      %v2212 = vadd.f32 0.0, %v2211
      %v2213 = vpop.f32.mrb[0].mxu0
      %2214 = vdwg.mxu0
      %v2216 = vsel %vm347, %v2047, 0
      %v2219 = vsel %vm347, %v2048, 0
      %v2222 = vsel %vm347, %v2049, 0
      %v2225 = vsel %vm347, %v2050, 0
      %v2228 = vsel %vm347, %v2051, 0
      %v2231 = vsel %vm347, %v2052, 0
      %v2234 = vsel %vm347, %v2053, 0
      %v2237 = vsel %vm347, %v2054, 0
      %v2240 = vsel %vm347, %v2055, 0
      %v2243 = vsel %vm347, %v2056, 0
      %2245 = vmatprep.subr.mxu0 0.0
      %2246 = vmatpush1.msra.mxu0 %v2057
      %2247 = vmatprep.subr.mxu0 0.0
      %2248 = vmatpush1.msra.mxu0 0.0
      %2249 = vmatprep.subr.mxu0 0.0
      %2250 = vmatpush1.msra.mxu0 0.0
      %2251 = vmatprep.subr.mxu0 0.0
      %2252 = vmatpush1.msra.mxu0 0.0
      %2253 = vmatprep.subr.mxu0 0.0
      %2254 = vmatpush1.msra.mxu0 0.0
      %2255 = vmatprep.subr.mxu0 0.0
      %2256 = vmatpush1.msra.mxu0 0.0
      %2257 = vmatprep.subr.mxu0 0.0
      %2258 = vmatpush1.msra.mxu0 0.0
      %2259 = vmatprep.subr.mxu0 0.0
      %2260 = vmatpush1.msra.mxu0 0.0
      %2261 = vmatprep.subr.mxu0 0.0
      %2262 = vmatpush1.msra.mxu0 0.0
      %2263 = vmatprep.subr.mxu0 0.0
      %2264 = vmatpush1.msra.mxu0 0.0
      %2265 = vmatprep.subr.mxu0 0.0
      %2266 = vmatpush1.msra.mxu0 0.0
      %2267 = vmatprep.subr.mxu0 0.0
      %2268 = vmatpush1.msra.mxu0 0.0
      %2269 = vmatprep.subr.mxu0 0.0
      %2270 = vmatpush1.msra.mxu0 0.0
      %2271 = vmatprep.subr.mxu0 0.0
      %2272 = vmatpush1.msra.mxu0 0.0
      %2273 = vmatprep.subr.mxu0 0.0
      %2274 = vmatpush1.msra.mxu0 0.0
      %2275 = vmatprep.subr.mxu0 0.0
      %2276 = vmatpush1.msra.mxu0 0.0
      %2277 = vmatprep.subr.mxu0 0.0
      %2278 = vmatpush1.msra.mxu0 0.0
      %2279 = vmatprep.subr.mxu0 0.0
      %2280 = vmatpush1.msra.mxu0 0.0
      %2281 = vmatprep.subr.mxu0 0.0
      %2282 = vmatpush1.msra.mxu0 0.0
      %2283 = vmatprep.subr.mxu0 0.0
      %2284 = vmatpush1.msra.mxu0 0.0
      %2285 = vmatprep.subr.mxu0 0.0
      %2286 = vmatpush1.msra.mxu0 0.0
      %2287 = vmatprep.subr.mxu0 0.0
      %2288 = vmatpush1.msra.mxu0 0.0
      %2289 = vmatprep.subr.mxu0 0.0
      %2290 = vmatpush1.msra.mxu0 0.0
      %2291 = vmatprep.subr.mxu0 0.0
      %2292 = vmatpush1.msra.mxu0 0.0
      %2293 = vmatprep.subr.mxu0 0.0
      %2294 = vmatpush1.msra.mxu0 0.0
      %2295 = vmatprep.subr.mxu0 0.0
      %2296 = vmatpush1.msra.mxu0 0.0
      %2297 = vmatprep.subr.mxu0 0.0
      %2298 = vmatpush1.msra.mxu0 0.0
      %2299 = vmatprep.subr.mxu0 0.0
      %2300 = vmatpush1.msra.mxu0 0.0
      %2301 = vmatprep.subr.mxu0 0.0
      %2302 = vmatpush1.msra.mxu0 0.0
      %2303 = vmatprep.subr.mxu0 0.0
      %2304 = vmatpush1.msra.mxu0 0.0
      %2305 = vmatprep.subr.mxu0 0.0
      %2306 = vmatpush1.msra.mxu0 0.0
      %2307 = vmatprep.subr.mxu0 0.0
      %2308 = vmatpush1.msra.mxu0 0.0
      %2309 = vmatprep.mubr.f32.mxu0 0.0
      %2310 = vmatmul.mubr.f32.gmra.mrb[0].mxu0 %v2216
      %v2311 = vpop.f32.mrb[0].mxu0
      %v2312 = vadd.f32 %v2167, %v2311
      %v2313 = vpop.f32.mrb[0].mxu0
      %2314 = vmatprep.mubr.f32.mxu0 0.0
      %2315 = vmatmul.mubr.f32.gmra.mrb[0].mxu0 %v2219
      %v2316 = vpop.f32.mrb[0].mxu0
      %v2317 = vadd.f32 %v2172, %v2316
      %v2318 = vpop.f32.mrb[0].mxu0
      %2319 = vmatprep.mubr.f32.mxu0 0.0
      %2320 = vmatmul.mubr.f32.gmra.mrb[0].mxu0 %v2222
      %v2321 = vpop.f32.mrb[0].mxu0
      %v2322 = vadd.f32 %v2177, %v2321
      %v2323 = vpop.f32.mrb[0].mxu0
      %2324 = vmatprep.mubr.f32.mxu0 0.0
      %2325 = vmatmul.mubr.f32.gmra.mrb[0].mxu0 %v2225
      %v2326 = vpop.f32.mrb[0].mxu0
      %v2327 = vadd.f32 %v2182, %v2326
      %v2328 = vpop.f32.mrb[0].mxu0
      %2329 = vmatprep.mubr.f32.mxu0 0.0
      %2330 = vmatmul.mubr.f32.gmra.mrb[0].mxu0 %v2228
      %v2331 = vpop.f32.mrb[0].mxu0
      %v2332 = vadd.f32 %v2187, %v2331
      %v2333 = vpop.f32.mrb[0].mxu0
      %2334 = vmatprep.mubr.f32.mxu0 0.0
      %2335 = vmatmul.mubr.f32.gmra.mrb[0].mxu0 %v2231
      %v2336 = vpop.f32.mrb[0].mxu0
      %v2337 = vadd.f32 %v2192, %v2336
      %v2338 = vpop.f32.mrb[0].mxu0
      %2339 = vmatprep.mubr.f32.mxu0 0.0
      %2340 = vmatmul.mubr.f32.gmra.mrb[0].mxu0 %v2234
      %v2341 = vpop.f32.mrb[0].mxu0
      %v2342 = vadd.f32 %v2197, %v2341
      %v2343 = vpop.f32.mrb[0].mxu0
      %2344 = vmatprep.mubr.f32.mxu0 0.0
      %2345 = vmatmul.mubr.f32.gmra.mrb[0].mxu0 %v2237
      %v2346 = vpop.f32.mrb[0].mxu0
      %v2347 = vadd.f32 %v2202, %v2346
      %v2348 = vpop.f32.mrb[0].mxu0
      %2349 = vmatprep.mubr.f32.mxu0 0.0
      %2350 = vmatmul.mubr.f32.gmra.mrb[0].mxu0 %v2240
      %v2351 = vpop.f32.mrb[0].mxu0
      %v2352 = vadd.f32 %v2207, %v2351
      %v2353 = vpop.f32.mrb[0].mxu0
      %2354 = vmatprep.mubr.f32.mxu0 0.0
      %2355 = vmatmul.mubr.f32.gmra.mrb[0].mxu0 %v2243
      %v2356 = vpop.f32.mrb[0].mxu0
      %v2357 = vadd.f32 %v2212, %v2356
      %v2358 = vpop.f32.mrb[0].mxu0
      %2359 = vdwg.mxu0
      %v2360 = vld [vmem:[#allocation3 + $0x2] sm:$0xff]
      %v2361 = vld [vmem:[#allocation3 + $0xa] sm:$0xff]
      %v2362 = vld [vmem:[#allocation3 + $0x12] sm:$0xff]
      %v2363 = vld [vmem:[#allocation3 + $0x1a] sm:$0xff]
      %v2364 = vld [vmem:[#allocation3 + $0x22] sm:$0xff]
      %v2365 = vld [vmem:[#allocation3 + $0x2a] sm:$0xff]
      %v2366 = vld [vmem:[#allocation3 + $0x32] sm:$0xff]
      %v2367 = vld [vmem:[#allocation3 + $0x3a] sm:$0xff]
      %v2368 = vld [vmem:[#allocation3 + $0x42] sm:$0xff]
      %v2369 = vld [vmem:[#allocation3 + $0x4a] sm:$0xff]
      %s2370 = scalar_lea.vmem %s5, 16
      %v2371 = vld [vmem:[%s2370] sm:$0xff]
      %v2373 = vsel %vm347, %v2360, 0
      %v2376 = vsel %vm347, %v2361, 0
      %v2379 = vsel %vm347, %v2362, 0
      %v2382 = vsel %vm347, %v2363, 0
      %v2385 = vsel %vm347, %v2364, 0
      %v2388 = vsel %vm347, %v2365, 0
      %v2391 = vsel %vm347, %v2366, 0
      %v2394 = vsel %vm347, %v2367, 0
      %v2397 = vsel %vm347, %v2368, 0
      %v2400 = vsel %vm347, %v2369, 0
      %2402 = vmatprep.subr.mxu0 0.0
      %2403 = vmatpush1.msra.mxu0 %v2371
      %2404 = vmatprep.subr.mxu0 0.0
      %2405 = vmatpush1.msra.mxu0 0.0
      %2406 = vmatprep.subr.mxu0 0.0
      %2407 = vmatpush1.msra.mxu0 0.0
      %2408 = vmatprep.subr.mxu0 0.0
      %2409 = vmatpush1.msra.mxu0 0.0
      %2410 = vmatprep.subr.mxu0 0.0
      %2411 = vmatpush1.msra.mxu0 0.0
      %2412 = vmatprep.subr.mxu0 0.0
      %2413 = vmatpush1.msra.mxu0 0.0
      %2414 = vmatprep.subr.mxu0 0.0
      %2415 = vmatpush1.msra.mxu0 0.0
      %2416 = vmatprep.subr.mxu0 0.0
      %2417 = vmatpush1.msra.mxu0 0.0
      %2418 = vmatprep.subr.mxu0 0.0
      %2419 = vmatpush1.msra.mxu0 0.0
      %2420 = vmatprep.subr.mxu0 0.0
      %2421 = vmatpush1.msra.mxu0 0.0
      %2422 = vmatprep.subr.mxu0 0.0
      %2423 = vmatpush1.msra.mxu0 0.0
      %2424 = vmatprep.subr.mxu0 0.0
      %2425 = vmatpush1.msra.mxu0 0.0
      %2426 = vmatprep.subr.mxu0 0.0
      %2427 = vmatpush1.msra.mxu0 0.0
      %2428 = vmatprep.subr.mxu0 0.0
      %2429 = vmatpush1.msra.mxu0 0.0
      %2430 = vmatprep.subr.mxu0 0.0
      %2431 = vmatpush1.msra.mxu0 0.0
      %2432 = vmatprep.subr.mxu0 0.0
      %2433 = vmatpush1.msra.mxu0 0.0
      %2434 = vmatprep.subr.mxu0 0.0
      %2435 = vmatpush1.msra.mxu0 0.0
      %2436 = vmatprep.subr.mxu0 0.0
      %2437 = vmatpush1.msra.mxu0 0.0
      %2438 = vmatprep.subr.mxu0 0.0
      %2439 = vmatpush1.msra.mxu0 0.0
      %2440 = vmatprep.subr.mxu0 0.0
      %2441 = vmatpush1.msra.mxu0 0.0
      %2442 = vmatprep.subr.mxu0 0.0
      %2443 = vmatpush1.msra.mxu0 0.0
      %2444 = vmatprep.subr.mxu0 0.0
      %2445 = vmatpush1.msra.mxu0 0.0
      %2446 = vmatprep.subr.mxu0 0.0
      %2447 = vmatpush1.msra.mxu0 0.0
      %2448 = vmatprep.subr.mxu0 0.0
      %2449 = vmatpush1.msra.mxu0 0.0
      %2450 = vmatprep.subr.mxu0 0.0
      %2451 = vmatpush1.msra.mxu0 0.0
      %2452 = vmatprep.subr.mxu0 0.0
      %2453 = vmatpush1.msra.mxu0 0.0
      %2454 = vmatprep.subr.mxu0 0.0
      %2455 = vmatpush1.msra.mxu0 0.0
      %2456 = vmatprep.subr.mxu0 0.0
      %2457 = vmatpush1.msra.mxu0 0.0
      %2458 = vmatprep.subr.mxu0 0.0
      %2459 = vmatpush1.msra.mxu0 0.0
      %2460 = vmatprep.subr.mxu0 0.0
      %2461 = vmatpush1.msra.mxu0 0.0
      %2462 = vmatprep.subr.mxu0 0.0
      %2463 = vmatpush1.msra.mxu0 0.0
      %2464 = vmatprep.subr.mxu0 0.0
      %2465 = vmatpush1.msra.mxu0 0.0
      %2466 = vmatprep.mubr.f32.mxu0 0.0
      %2467 = vmatmul.mubr.f32.gmra.mrb[0].mxu0 %v2373
      %v2468 = vpop.f32.mrb[0].mxu0
      %v2469 = vadd.f32 0.0, %v2468
      %v2470 = vpop.f32.mrb[0].mxu0
      %2471 = vmatprep.mubr.f32.mxu0 0.0
      %2472 = vmatmul.mubr.f32.gmra.mrb[0].mxu0 %v2376
      %v2473 = vpop.f32.mrb[0].mxu0
      %v2474 = vadd.f32 0.0, %v2473
      %v2475 = vpop.f32.mrb[0].mxu0
      %2476 = vmatprep.mubr.f32.mxu0 0.0
      %2477 = vmatmul.mubr.f32.gmra.mrb[0].mxu0 %v2379
      %v2478 = vpop.f32.mrb[0].mxu0
      %v2479 = vadd.f32 0.0, %v2478
      %v2480 = vpop.f32.mrb[0].mxu0
      %2481 = vmatprep.mubr.f32.mxu0 0.0
      %2482 = vmatmul.mubr.f32.gmra.mrb[0].mxu0 %v2382
      %v2483 = vpop.f32.mrb[0].mxu0
      %v2484 = vadd.f32 0.0, %v2483
      %v2485 = vpop.f32.mrb[0].mxu0
      %2486 = vmatprep.mubr.f32.mxu0 0.0
      %2487 = vmatmul.mubr.f32.gmra.mrb[0].mxu0 %v2385
      %v2488 = vpop.f32.mrb[0].mxu0
      %v2489 = vadd.f32 0.0, %v2488
      %v2490 = vpop.f32.mrb[0].mxu0
      %2491 = vmatprep.mubr.f32.mxu0 0.0
      %2492 = vmatmul.mubr.f32.gmra.mrb[0].mxu0 %v2388
      %v2493 = vpop.f32.mrb[0].mxu0
      %v2494 = vadd.f32 0.0, %v2493
      %v2495 = vpop.f32.mrb[0].mxu0
      %2496 = vmatprep.mubr.f32.mxu0 0.0
      %2497 = vmatmul.mubr.f32.gmra.mrb[0].mxu0 %v2391
      %v2498 = vpop.f32.mrb[0].mxu0
      %v2499 = vadd.f32 0.0, %v2498
      %v2500 = vpop.f32.mrb[0].mxu0
      %2501 = vmatprep.mubr.f32.mxu0 0.0
      %2502 = vmatmul.mubr.f32.gmra.mrb[0].mxu0 %v2394
      %v2503 = vpop.f32.mrb[0].mxu0
      %v2504 = vadd.f32 0.0, %v2503
      %v2505 = vpop.f32.mrb[0].mxu0
      %2506 = vmatprep.mubr.f32.mxu0 0.0
      %2507 = vmatmul.mubr.f32.gmra.mrb[0].mxu0 %v2397
      %v2508 = vpop.f32.mrb[0].mxu0
      %v2509 = vadd.f32 0.0, %v2508
      %v2510 = vpop.f32.mrb[0].mxu0
      %2511 = vmatprep.mubr.f32.mxu0 0.0
      %2512 = vmatmul.mubr.f32.gmra.mrb[0].mxu0 %v2400
      %v2513 = vpop.f32.mrb[0].mxu0
      %v2514 = vadd.f32 0.0, %v2513
      %v2515 = vpop.f32.mrb[0].mxu0
      %2516 = vdwg.mxu0
      %v2517 = vadd.f32 %v2312, %v2469
      %v2518 = vadd.f32 %v2317, %v2474
      %v2519 = vadd.f32 %v2322, %v2479
      %v2520 = vadd.f32 %v2327, %v2484
      %v2521 = vadd.f32 %v2332, %v2489
      %v2522 = vadd.f32 %v2337, %v2494
      %v2523 = vadd.f32 %v2342, %v2499
      %v2524 = vadd.f32 %v2347, %v2504
      %v2525 = vadd.f32 %v2352, %v2509
      %v2526 = vadd.f32 %v2357, %v2514
      %v2527 = vld [vmem:[#allocation3 + $0xa] sm:$0xff]
      %v2528 = vld [vmem:[#allocation3 + $0x12] sm:$0xff]
      %v2529 = vld [vmem:[#allocation3 + $0x1a] sm:$0xff]
      %v2530 = vld [vmem:[#allocation3 + $0x22] sm:$0xff]
      %v2531 = vld [vmem:[#allocation3 + $0x2a] sm:$0xff]
      %v2532 = vld [vmem:[#allocation3 + $0x32] sm:$0xff]
      %v2533 = vld [vmem:[#allocation3 + $0x3a] sm:$0xff]
      %v2534 = vld [vmem:[#allocation3 + $0x42] sm:$0xff]
      %v2535 = vld [vmem:[#allocation3 + $0x4a] sm:$0xff]
      %v2536 = vld [vmem:[#allocation3 + $0x52] sm:$0xff]
      %s2537 = scalar_lea.vmem %s5, 24
      %v2538 = vld [vmem:[%s2537] sm:$0xff]
      %v2540 = vsel %vm347, %v2527, 0
      %v2543 = vsel %vm347, %v2528, 0
      %v2546 = vsel %vm347, %v2529, 0
      %v2549 = vsel %vm347, %v2530, 0
      %v2552 = vsel %vm347, %v2531, 0
      %v2555 = vsel %vm347, %v2532, 0
      %v2558 = vsel %vm347, %v2533, 0
      %v2561 = vsel %vm347, %v2534, 0
      %v2564 = vsel %vm347, %v2535, 0
      %v2567 = vsel %vm347, %v2536, 0
      %2569 = vmatprep.subr.mxu0 0.0
      %2570 = vmatpush1.msra.mxu0 %v2538
      %2571 = vmatprep.subr.mxu0 0.0
      %2572 = vmatpush1.msra.mxu0 0.0
      %2573 = vmatprep.subr.mxu0 0.0
      %2574 = vmatpush1.msra.mxu0 0.0
      %2575 = vmatprep.subr.mxu0 0.0
      %2576 = vmatpush1.msra.mxu0 0.0
      %2577 = vmatprep.subr.mxu0 0.0
      %2578 = vmatpush1.msra.mxu0 0.0
      %2579 = vmatprep.subr.mxu0 0.0
      %2580 = vmatpush1.msra.mxu0 0.0
      %2581 = vmatprep.subr.mxu0 0.0
      %2582 = vmatpush1.msra.mxu0 0.0
      %2583 = vmatprep.subr.mxu0 0.0
      %2584 = vmatpush1.msra.mxu0 0.0
      %2585 = vmatprep.subr.mxu0 0.0
      %2586 = vmatpush1.msra.mxu0 0.0
      %2587 = vmatprep.subr.mxu0 0.0
      %2588 = vmatpush1.msra.mxu0 0.0
      %2589 = vmatprep.subr.mxu0 0.0
      %2590 = vmatpush1.msra.mxu0 0.0
      %2591 = vmatprep.subr.mxu0 0.0
      %2592 = vmatpush1.msra.mxu0 0.0
      %2593 = vmatprep.subr.mxu0 0.0
      %2594 = vmatpush1.msra.mxu0 0.0
      %2595 = vmatprep.subr.mxu0 0.0
      %2596 = vmatpush1.msra.mxu0 0.0
      %2597 = vmatprep.subr.mxu0 0.0
      %2598 = vmatpush1.msra.mxu0 0.0
      %2599 = vmatprep.subr.mxu0 0.0
      %2600 = vmatpush1.msra.mxu0 0.0
      %2601 = vmatprep.subr.mxu0 0.0
      %2602 = vmatpush1.msra.mxu0 0.0
      %2603 = vmatprep.subr.mxu0 0.0
      %2604 = vmatpush1.msra.mxu0 0.0
      %2605 = vmatprep.subr.mxu0 0.0
      %2606 = vmatpush1.msra.mxu0 0.0
      %2607 = vmatprep.subr.mxu0 0.0
      %2608 = vmatpush1.msra.mxu0 0.0
      %2609 = vmatprep.subr.mxu0 0.0
      %2610 = vmatpush1.msra.mxu0 0.0
      %2611 = vmatprep.subr.mxu0 0.0
      %2612 = vmatpush1.msra.mxu0 0.0
      %2613 = vmatprep.subr.mxu0 0.0
      %2614 = vmatpush1.msra.mxu0 0.0
      %2615 = vmatprep.subr.mxu0 0.0
      %2616 = vmatpush1.msra.mxu0 0.0
      %2617 = vmatprep.subr.mxu0 0.0
      %2618 = vmatpush1.msra.mxu0 0.0
      %2619 = vmatprep.subr.mxu0 0.0
      %2620 = vmatpush1.msra.mxu0 0.0
      %2621 = vmatprep.subr.mxu0 0.0
      %2622 = vmatpush1.msra.mxu0 0.0
      %2623 = vmatprep.subr.mxu0 0.0
      %2624 = vmatpush1.msra.mxu0 0.0
      %2625 = vmatprep.subr.mxu0 0.0
      %2626 = vmatpush1.msra.mxu0 0.0
      %2627 = vmatprep.subr.mxu0 0.0
      %2628 = vmatpush1.msra.mxu0 0.0
      %2629 = vmatprep.subr.mxu0 0.0
      %2630 = vmatpush1.msra.mxu0 0.0
      %2631 = vmatprep.subr.mxu0 0.0
      %2632 = vmatpush1.msra.mxu0 0.0
      %2633 = vmatprep.mubr.f32.mxu0 0.0
      %2634 = vmatmul.mubr.f32.gmra.mrb[0].mxu0 %v2540
      %v2635 = vpop.f32.mrb[0].mxu0
      %v2636 = vadd.f32 0.0, %v2635
      %v2637 = vpop.f32.mrb[0].mxu0
      %2638 = vmatprep.mubr.f32.mxu0 0.0
      %2639 = vmatmul.mubr.f32.gmra.mrb[0].mxu0 %v2543
      %v2640 = vpop.f32.mrb[0].mxu0
      %v2641 = vadd.f32 0.0, %v2640
      %v2642 = vpop.f32.mrb[0].mxu0
      %2643 = vmatprep.mubr.f32.mxu0 0.0
      %2644 = vmatmul.mubr.f32.gmra.mrb[0].mxu0 %v2546
      %v2645 = vpop.f32.mrb[0].mxu0
      %v2646 = vadd.f32 0.0, %v2645
      %v2647 = vpop.f32.mrb[0].mxu0
      %2648 = vmatprep.mubr.f32.mxu0 0.0
      %2649 = vmatmul.mubr.f32.gmra.mrb[0].mxu0 %v2549
      %v2650 = vpop.f32.mrb[0].mxu0
      %v2651 = vadd.f32 0.0, %v2650
      %v2652 = vpop.f32.mrb[0].mxu0
      %2653 = vmatprep.mubr.f32.mxu0 0.0
      %2654 = vmatmul.mubr.f32.gmra.mrb[0].mxu0 %v2552
      %v2655 = vpop.f32.mrb[0].mxu0
      %v2656 = vadd.f32 0.0, %v2655
      %v2657 = vpop.f32.mrb[0].mxu0
      %2658 = vmatprep.mubr.f32.mxu0 0.0
      %2659 = vmatmul.mubr.f32.gmra.mrb[0].mxu0 %v2555
      %v2660 = vpop.f32.mrb[0].mxu0
      %v2661 = vadd.f32 0.0, %v2660
      %v2662 = vpop.f32.mrb[0].mxu0
      %2663 = vmatprep.mubr.f32.mxu0 0.0
      %2664 = vmatmul.mubr.f32.gmra.mrb[0].mxu0 %v2558
      %v2665 = vpop.f32.mrb[0].mxu0
      %v2666 = vadd.f32 0.0, %v2665
      %v2667 = vpop.f32.mrb[0].mxu0
      %2668 = vmatprep.mubr.f32.mxu0 0.0
      %2669 = vmatmul.mubr.f32.gmra.mrb[0].mxu0 %v2561
      %v2670 = vpop.f32.mrb[0].mxu0
      %v2671 = vadd.f32 0.0, %v2670
      %v2672 = vpop.f32.mrb[0].mxu0
      %2673 = vmatprep.mubr.f32.mxu0 0.0
      %2674 = vmatmul.mubr.f32.gmra.mrb[0].mxu0 %v2564
      %v2675 = vpop.f32.mrb[0].mxu0
      %v2676 = vadd.f32 0.0, %v2675
      %v2677 = vpop.f32.mrb[0].mxu0
      %2678 = vmatprep.mubr.f32.mxu0 0.0
      %2679 = vmatmul.mubr.f32.gmra.mrb[0].mxu0 %v2567
      %v2680 = vpop.f32.mrb[0].mxu0
      %v2681 = vadd.f32 0.0, %v2680
      %v2682 = vpop.f32.mrb[0].mxu0
      %2683 = vdwg.mxu0
      %v2684 = vadd.f32 %v2517, %v2636
      %v2685 = vadd.f32 %v2518, %v2641
      %v2686 = vadd.f32 %v2519, %v2646
      %v2687 = vadd.f32 %v2520, %v2651
      %v2688 = vadd.f32 %v2521, %v2656
      %v2689 = vadd.f32 %v2522, %v2661
      %v2690 = vadd.f32 %v2523, %v2666
      %v2691 = vadd.f32 %v2524, %v2671
      %v2692 = vadd.f32 %v2525, %v2676
      %v2693 = vadd.f32 %v2526, %v2681
      %v2694 = vld [vmem:[#allocation3 + $0xb] sm:$0xff]
      %v2695 = vld [vmem:[#allocation3 + $0x13] sm:$0xff]
      %v2696 = vld [vmem:[#allocation3 + $0x1b] sm:$0xff]
      %v2697 = vld [vmem:[#allocation3 + $0x23] sm:$0xff]
      %v2698 = vld [vmem:[#allocation3 + $0x2b] sm:$0xff]
      %v2699 = vld [vmem:[#allocation3 + $0x33] sm:$0xff]
      %v2700 = vld [vmem:[#allocation3 + $0x3b] sm:$0xff]
      %v2701 = vld [vmem:[#allocation3 + $0x43] sm:$0xff]
      %v2702 = vld [vmem:[#allocation3 + $0x4b] sm:$0xff]
      %v2703 = vld [vmem:[#allocation3 + $0x53] sm:$0xff]
      %s2704 = scalar_lea.vmem %s5, 32
      %v2705 = vld [vmem:[%s2704] sm:$0xff]
      %v2707 = vsel %vm347, %v2694, 0
      %v2710 = vsel %vm347, %v2695, 0
      %v2713 = vsel %vm347, %v2696, 0
      %v2716 = vsel %vm347, %v2697, 0
      %v2719 = vsel %vm347, %v2698, 0
      %v2722 = vsel %vm347, %v2699, 0
      %v2725 = vsel %vm347, %v2700, 0
      %v2728 = vsel %vm347, %v2701, 0
      %v2731 = vsel %vm347, %v2702, 0
      %v2734 = vsel %vm347, %v2703, 0
      %2736 = vmatprep.subr.mxu0 0.0
      %2737 = vmatpush1.msra.mxu0 %v2705
      %2738 = vmatprep.subr.mxu0 0.0
      %2739 = vmatpush1.msra.mxu0 0.0
      %2740 = vmatprep.subr.mxu0 0.0
      %2741 = vmatpush1.msra.mxu0 0.0
      %2742 = vmatprep.subr.mxu0 0.0
      %2743 = vmatpush1.msra.mxu0 0.0
      %2744 = vmatprep.subr.mxu0 0.0
      %2745 = vmatpush1.msra.mxu0 0.0
      %2746 = vmatprep.subr.mxu0 0.0
      %2747 = vmatpush1.msra.mxu0 0.0
      %2748 = vmatprep.subr.mxu0 0.0
      %2749 = vmatpush1.msra.mxu0 0.0
      %2750 = vmatprep.subr.mxu0 0.0
      %2751 = vmatpush1.msra.mxu0 0.0
      %2752 = vmatprep.subr.mxu0 0.0
      %2753 = vmatpush1.msra.mxu0 0.0
      %2754 = vmatprep.subr.mxu0 0.0
      %2755 = vmatpush1.msra.mxu0 0.0
      %2756 = vmatprep.subr.mxu0 0.0
      %2757 = vmatpush1.msra.mxu0 0.0
      %2758 = vmatprep.subr.mxu0 0.0
      %2759 = vmatpush1.msra.mxu0 0.0
      %2760 = vmatprep.subr.mxu0 0.0
      %2761 = vmatpush1.msra.mxu0 0.0
      %2762 = vmatprep.subr.mxu0 0.0
      %2763 = vmatpush1.msra.mxu0 0.0
      %2764 = vmatprep.subr.mxu0 0.0
      %2765 = vmatpush1.msra.mxu0 0.0
      %2766 = vmatprep.subr.mxu0 0.0
      %2767 = vmatpush1.msra.mxu0 0.0
      %2768 = vmatprep.subr.mxu0 0.0
      %2769 = vmatpush1.msra.mxu0 0.0
      %2770 = vmatprep.subr.mxu0 0.0
      %2771 = vmatpush1.msra.mxu0 0.0
      %2772 = vmatprep.subr.mxu0 0.0
      %2773 = vmatpush1.msra.mxu0 0.0
      %2774 = vmatprep.subr.mxu0 0.0
      %2775 = vmatpush1.msra.mxu0 0.0
      %2776 = vmatprep.subr.mxu0 0.0
      %2777 = vmatpush1.msra.mxu0 0.0
      %2778 = vmatprep.subr.mxu0 0.0
      %2779 = vmatpush1.msra.mxu0 0.0
      %2780 = vmatprep.subr.mxu0 0.0
      %2781 = vmatpush1.msra.mxu0 0.0
      %2782 = vmatprep.subr.mxu0 0.0
      %2783 = vmatpush1.msra.mxu0 0.0
      %2784 = vmatprep.subr.mxu0 0.0
      %2785 = vmatpush1.msra.mxu0 0.0
      %2786 = vmatprep.subr.mxu0 0.0
      %2787 = vmatpush1.msra.mxu0 0.0
      %2788 = vmatprep.subr.mxu0 0.0
      %2789 = vmatpush1.msra.mxu0 0.0
      %2790 = vmatprep.subr.mxu0 0.0
      %2791 = vmatpush1.msra.mxu0 0.0
      %2792 = vmatprep.subr.mxu0 0.0
      %2793 = vmatpush1.msra.mxu0 0.0
      %2794 = vmatprep.subr.mxu0 0.0
      %2795 = vmatpush1.msra.mxu0 0.0
      %2796 = vmatprep.subr.mxu0 0.0
      %2797 = vmatpush1.msra.mxu0 0.0
      %2798 = vmatprep.subr.mxu0 0.0
      %2799 = vmatpush1.msra.mxu0 0.0
      %2800 = vmatprep.mubr.f32.mxu0 0.0
      %2801 = vmatmul.mubr.f32.gmra.mrb[0].mxu0 %v2707
      %v2802 = vpop.f32.mrb[0].mxu0
      %v2803 = vadd.f32 0.0, %v2802
      %v2804 = vpop.f32.mrb[0].mxu0
      %2805 = vmatprep.mubr.f32.mxu0 0.0
      %2806 = vmatmul.mubr.f32.gmra.mrb[0].mxu0 %v2710
      %v2807 = vpop.f32.mrb[0].mxu0
      %v2808 = vadd.f32 0.0, %v2807
      %v2809 = vpop.f32.mrb[0].mxu0
      %2810 = vmatprep.mubr.f32.mxu0 0.0
      %2811 = vmatmul.mubr.f32.gmra.mrb[0].mxu0 %v2713
      %v2812 = vpop.f32.mrb[0].mxu0
      %v2813 = vadd.f32 0.0, %v2812
      %v2814 = vpop.f32.mrb[0].mxu0
      %2815 = vmatprep.mubr.f32.mxu0 0.0
      %2816 = vmatmul.mubr.f32.gmra.mrb[0].mxu0 %v2716
      %v2817 = vpop.f32.mrb[0].mxu0
      %v2818 = vadd.f32 0.0, %v2817
      %v2819 = vpop.f32.mrb[0].mxu0
      %2820 = vmatprep.mubr.f32.mxu0 0.0
      %2821 = vmatmul.mubr.f32.gmra.mrb[0].mxu0 %v2719
      %v2822 = vpop.f32.mrb[0].mxu0
      %v2823 = vadd.f32 0.0, %v2822
      %v2824 = vpop.f32.mrb[0].mxu0
      %2825 = vmatprep.mubr.f32.mxu0 0.0
      %2826 = vmatmul.mubr.f32.gmra.mrb[0].mxu0 %v2722
      %v2827 = vpop.f32.mrb[0].mxu0
      %v2828 = vadd.f32 0.0, %v2827
      %v2829 = vpop.f32.mrb[0].mxu0
      %2830 = vmatprep.mubr.f32.mxu0 0.0
      %2831 = vmatmul.mubr.f32.gmra.mrb[0].mxu0 %v2725
      %v2832 = vpop.f32.mrb[0].mxu0
      %v2833 = vadd.f32 0.0, %v2832
      %v2834 = vpop.f32.mrb[0].mxu0
      %2835 = vmatprep.mubr.f32.mxu0 0.0
      %2836 = vmatmul.mubr.f32.gmra.mrb[0].mxu0 %v2728
      %v2837 = vpop.f32.mrb[0].mxu0
      %v2838 = vadd.f32 0.0, %v2837
      %v2839 = vpop.f32.mrb[0].mxu0
      %2840 = vmatprep.mubr.f32.mxu0 0.0
      %2841 = vmatmul.mubr.f32.gmra.mrb[0].mxu0 %v2731
      %v2842 = vpop.f32.mrb[0].mxu0
      %v2843 = vadd.f32 0.0, %v2842
      %v2844 = vpop.f32.mrb[0].mxu0
      %2845 = vmatprep.mubr.f32.mxu0 0.0
      %2846 = vmatmul.mubr.f32.gmra.mrb[0].mxu0 %v2734
      %v2847 = vpop.f32.mrb[0].mxu0
      %v2848 = vadd.f32 0.0, %v2847
      %v2849 = vpop.f32.mrb[0].mxu0
      %2850 = vdwg.mxu0
      %v2851 = vadd.f32 %v2684, %v2803
      %v2852 = vadd.f32 %v2685, %v2808
      %v2853 = vadd.f32 %v2686, %v2813
      %v2854 = vadd.f32 %v2687, %v2818
      %v2855 = vadd.f32 %v2688, %v2823
      %v2856 = vadd.f32 %v2689, %v2828
      %v2857 = vadd.f32 %v2690, %v2833
      %v2858 = vadd.f32 %v2691, %v2838
      %v2859 = vadd.f32 %v2692, %v2843
      %v2860 = vadd.f32 %v2693, %v2848
      %v2861 = vld [vmem:[#allocation3 + $0xc] sm:$0xff]
      %v2862 = vld [vmem:[#allocation3 + $0x14] sm:$0xff]
      %v2863 = vld [vmem:[#allocation3 + $0x1c] sm:$0xff]
      %v2864 = vld [vmem:[#allocation3 + $0x24] sm:$0xff]
      %v2865 = vld [vmem:[#allocation3 + $0x2c] sm:$0xff]
      %v2866 = vld [vmem:[#allocation3 + $0x34] sm:$0xff]
      %v2867 = vld [vmem:[#allocation3 + $0x3c] sm:$0xff]
      %v2868 = vld [vmem:[#allocation3 + $0x44] sm:$0xff]
      %v2869 = vld [vmem:[#allocation3 + $0x4c] sm:$0xff]
      %v2870 = vld [vmem:[#allocation3 + $0x54] sm:$0xff]
      %s2871 = scalar_lea.vmem %s5, 40
      %v2872 = vld [vmem:[%s2871] sm:$0xff]
      %v2874 = vsel %vm347, %v2861, 0
      %v2877 = vsel %vm347, %v2862, 0
      %v2880 = vsel %vm347, %v2863, 0
      %v2883 = vsel %vm347, %v2864, 0
      %v2886 = vsel %vm347, %v2865, 0
      %v2889 = vsel %vm347, %v2866, 0
      %v2892 = vsel %vm347, %v2867, 0
      %v2895 = vsel %vm347, %v2868, 0
      %v2898 = vsel %vm347, %v2869, 0
      %v2901 = vsel %vm347, %v2870, 0
      %2903 = vmatprep.subr.mxu0 0.0
      %2904 = vmatpush1.msra.mxu0 %v2872
      %2905 = vmatprep.subr.mxu0 0.0
      %2906 = vmatpush1.msra.mxu0 0.0
      %2907 = vmatprep.subr.mxu0 0.0
      %2908 = vmatpush1.msra.mxu0 0.0
      %2909 = vmatprep.subr.mxu0 0.0
      %2910 = vmatpush1.msra.mxu0 0.0
      %2911 = vmatprep.subr.mxu0 0.0
      %2912 = vmatpush1.msra.mxu0 0.0
      %2913 = vmatprep.subr.mxu0 0.0
      %2914 = vmatpush1.msra.mxu0 0.0
      %2915 = vmatprep.subr.mxu0 0.0
      %2916 = vmatpush1.msra.mxu0 0.0
      %2917 = vmatprep.subr.mxu0 0.0
      %2918 = vmatpush1.msra.mxu0 0.0
      %2919 = vmatprep.subr.mxu0 0.0
      %2920 = vmatpush1.msra.mxu0 0.0
      %2921 = vmatprep.subr.mxu0 0.0
      %2922 = vmatpush1.msra.mxu0 0.0
      %2923 = vmatprep.subr.mxu0 0.0
      %2924 = vmatpush1.msra.mxu0 0.0
      %2925 = vmatprep.subr.mxu0 0.0
      %2926 = vmatpush1.msra.mxu0 0.0
      %2927 = vmatprep.subr.mxu0 0.0
      %2928 = vmatpush1.msra.mxu0 0.0
      %2929 = vmatprep.subr.mxu0 0.0
      %2930 = vmatpush1.msra.mxu0 0.0
      %2931 = vmatprep.subr.mxu0 0.0
      %2932 = vmatpush1.msra.mxu0 0.0
      %2933 = vmatprep.subr.mxu0 0.0
      %2934 = vmatpush1.msra.mxu0 0.0
      %2935 = vmatprep.subr.mxu0 0.0
      %2936 = vmatpush1.msra.mxu0 0.0
      %2937 = vmatprep.subr.mxu0 0.0
      %2938 = vmatpush1.msra.mxu0 0.0
      %2939 = vmatprep.subr.mxu0 0.0
      %2940 = vmatpush1.msra.mxu0 0.0
      %2941 = vmatprep.subr.mxu0 0.0
      %2942 = vmatpush1.msra.mxu0 0.0
      %2943 = vmatprep.subr.mxu0 0.0
      %2944 = vmatpush1.msra.mxu0 0.0
      %2945 = vmatprep.subr.mxu0 0.0
      %2946 = vmatpush1.msra.mxu0 0.0
      %2947 = vmatprep.subr.mxu0 0.0
      %2948 = vmatpush1.msra.mxu0 0.0
      %2949 = vmatprep.subr.mxu0 0.0
      %2950 = vmatpush1.msra.mxu0 0.0
      %2951 = vmatprep.subr.mxu0 0.0
      %2952 = vmatpush1.msra.mxu0 0.0
      %2953 = vmatprep.subr.mxu0 0.0
      %2954 = vmatpush1.msra.mxu0 0.0
      %2955 = vmatprep.subr.mxu0 0.0
      %2956 = vmatpush1.msra.mxu0 0.0
      %2957 = vmatprep.subr.mxu0 0.0
      %2958 = vmatpush1.msra.mxu0 0.0
      %2959 = vmatprep.subr.mxu0 0.0
      %2960 = vmatpush1.msra.mxu0 0.0
      %2961 = vmatprep.subr.mxu0 0.0
      %2962 = vmatpush1.msra.mxu0 0.0
      %2963 = vmatprep.subr.mxu0 0.0
      %2964 = vmatpush1.msra.mxu0 0.0
      %2965 = vmatprep.subr.mxu0 0.0
      %2966 = vmatpush1.msra.mxu0 0.0
      %2967 = vmatprep.mubr.f32.mxu0 0.0
      %2968 = vmatmul.mubr.f32.gmra.mrb[0].mxu0 %v2874
      %v2969 = vpop.f32.mrb[0].mxu0
      %v2970 = vadd.f32 0.0, %v2969
      %v2971 = vpop.f32.mrb[0].mxu0
      %2972 = vmatprep.mubr.f32.mxu0 0.0
      %2973 = vmatmul.mubr.f32.gmra.mrb[0].mxu0 %v2877
      %v2974 = vpop.f32.mrb[0].mxu0
      %v2975 = vadd.f32 0.0, %v2974
      %v2976 = vpop.f32.mrb[0].mxu0
      %2977 = vmatprep.mubr.f32.mxu0 0.0
      %2978 = vmatmul.mubr.f32.gmra.mrb[0].mxu0 %v2880
      %v2979 = vpop.f32.mrb[0].mxu0
      %v2980 = vadd.f32 0.0, %v2979
      %v2981 = vpop.f32.mrb[0].mxu0
      %2982 = vmatprep.mubr.f32.mxu0 0.0
      %2983 = vmatmul.mubr.f32.gmra.mrb[0].mxu0 %v2883
      %v2984 = vpop.f32.mrb[0].mxu0
      %v2985 = vadd.f32 0.0, %v2984
      %v2986 = vpop.f32.mrb[0].mxu0
      %2987 = vmatprep.mubr.f32.mxu0 0.0
      %2988 = vmatmul.mubr.f32.gmra.mrb[0].mxu0 %v2886
      %v2989 = vpop.f32.mrb[0].mxu0
      %v2990 = vadd.f32 0.0, %v2989
      %v2991 = vpop.f32.mrb[0].mxu0
      %2992 = vmatprep.mubr.f32.mxu0 0.0
      %2993 = vmatmul.mubr.f32.gmra.mrb[0].mxu0 %v2889
      %v2994 = vpop.f32.mrb[0].mxu0
      %v2995 = vadd.f32 0.0, %v2994
      %v2996 = vpop.f32.mrb[0].mxu0
      %2997 = vmatprep.mubr.f32.mxu0 0.0
      %2998 = vmatmul.mubr.f32.gmra.mrb[0].mxu0 %v2892
      %v2999 = vpop.f32.mrb[0].mxu0
      %v3000 = vadd.f32 0.0, %v2999
      %v3001 = vpop.f32.mrb[0].mxu0
      %3002 = vmatprep.mubr.f32.mxu0 0.0
      %3003 = vmatmul.mubr.f32.gmra.mrb[0].mxu0 %v2895
      %v3004 = vpop.f32.mrb[0].mxu0
      %v3005 = vadd.f32 0.0, %v3004
      %v3006 = vpop.f32.mrb[0].mxu0
      %3007 = vmatprep.mubr.f32.mxu0 0.0
      %3008 = vmatmul.mubr.f32.gmra.mrb[0].mxu0 %v2898
      %v3009 = vpop.f32.mrb[0].mxu0
      %v3010 = vadd.f32 0.0, %v3009
      %v3011 = vpop.f32.mrb[0].mxu0
      %3012 = vmatprep.mubr.f32.mxu0 0.0
      %3013 = vmatmul.mubr.f32.gmra.mrb[0].mxu0 %v2901
      %v3014 = vpop.f32.mrb[0].mxu0
      %v3015 = vadd.f32 0.0, %v3014
      %v3016 = vpop.f32.mrb[0].mxu0
      %3017 = vdwg.mxu0
      %v3018 = vadd.f32 %v2851, %v2970
      %v3019 = vadd.f32 %v2852, %v2975
      %v3020 = vadd.f32 %v2853, %v2980
      %v3021 = vadd.f32 %v2854, %v2985
      %v3022 = vadd.f32 %v2855, %v2990
      %v3023 = vadd.f32 %v2856, %v2995
      %v3024 = vadd.f32 %v2857, %v3000
      %v3025 = vadd.f32 %v2858, %v3005
      %v3026 = vadd.f32 %v2859, %v3010
      %v3027 = vadd.f32 %v2860, %v3015
      %v3028 = vld [vmem:[#allocation3 + $0x14] sm:$0xff]
      %v3029 = vld [vmem:[#allocation3 + $0x1c] sm:$0xff]
      %v3030 = vld [vmem:[#allocation3 + $0x24] sm:$0xff]
      %v3031 = vld [vmem:[#allocation3 + $0x2c] sm:$0xff]
      %v3032 = vld [vmem:[#allocation3 + $0x34] sm:$0xff]
      %v3033 = vld [vmem:[#allocation3 + $0x3c] sm:$0xff]
      %v3034 = vld [vmem:[#allocation3 + $0x44] sm:$0xff]
      %v3035 = vld [vmem:[#allocation3 + $0x4c] sm:$0xff]
      %v3036 = vld [vmem:[#allocation3 + $0x54] sm:$0xff]
      %v3037 = vld [vmem:[#allocation3 + $0x5c] sm:$0xff]
      %s3038 = scalar_lea.vmem %s5, 48
      %v3039 = vld [vmem:[%s3038] sm:$0xff]
      %v3041 = vsel %vm347, %v3028, 0
      %v3044 = vsel %vm347, %v3029, 0
      %v3047 = vsel %vm347, %v3030, 0
      %v3050 = vsel %vm347, %v3031, 0
      %v3053 = vsel %vm347, %v3032, 0
      %v3056 = vsel %vm347, %v3033, 0
      %v3059 = vsel %vm347, %v3034, 0
      %v3062 = vsel %vm347, %v3035, 0
      %v3065 = vsel %vm347, %v3036, 0
      %v3068 = vsel %vm347, %v3037, 0
      %3070 = vmatprep.subr.mxu0 0.0
      %3071 = vmatpush1.msra.mxu0 %v3039
      %3072 = vmatprep.subr.mxu0 0.0
      %3073 = vmatpush1.msra.mxu0 0.0
      %3074 = vmatprep.subr.mxu0 0.0
      %3075 = vmatpush1.msra.mxu0 0.0
      %3076 = vmatprep.subr.mxu0 0.0
      %3077 = vmatpush1.msra.mxu0 0.0
      %3078 = vmatprep.subr.mxu0 0.0
      %3079 = vmatpush1.msra.mxu0 0.0
      %3080 = vmatprep.subr.mxu0 0.0
      %3081 = vmatpush1.msra.mxu0 0.0
      %3082 = vmatprep.subr.mxu0 0.0
      %3083 = vmatpush1.msra.mxu0 0.0
      %3084 = vmatprep.subr.mxu0 0.0
      %3085 = vmatpush1.msra.mxu0 0.0
      %3086 = vmatprep.subr.mxu0 0.0
      %3087 = vmatpush1.msra.mxu0 0.0
      %3088 = vmatprep.subr.mxu0 0.0
      %3089 = vmatpush1.msra.mxu0 0.0
      %3090 = vmatprep.subr.mxu0 0.0
      %3091 = vmatpush1.msra.mxu0 0.0
      %3092 = vmatprep.subr.mxu0 0.0
      %3093 = vmatpush1.msra.mxu0 0.0
      %3094 = vmatprep.subr.mxu0 0.0
      %3095 = vmatpush1.msra.mxu0 0.0
      %3096 = vmatprep.subr.mxu0 0.0
      %3097 = vmatpush1.msra.mxu0 0.0
      %3098 = vmatprep.subr.mxu0 0.0
      %3099 = vmatpush1.msra.mxu0 0.0
      %3100 = vmatprep.subr.mxu0 0.0
      %3101 = vmatpush1.msra.mxu0 0.0
      %3102 = vmatprep.subr.mxu0 0.0
      %3103 = vmatpush1.msra.mxu0 0.0
      %3104 = vmatprep.subr.mxu0 0.0
      %3105 = vmatpush1.msra.mxu0 0.0
      %3106 = vmatprep.subr.mxu0 0.0
      %3107 = vmatpush1.msra.mxu0 0.0
      %3108 = vmatprep.subr.mxu0 0.0
      %3109 = vmatpush1.msra.mxu0 0.0
      %3110 = vmatprep.subr.mxu0 0.0
      %3111 = vmatpush1.msra.mxu0 0.0
      %3112 = vmatprep.subr.mxu0 0.0
      %3113 = vmatpush1.msra.mxu0 0.0
      %3114 = vmatprep.subr.mxu0 0.0
      %3115 = vmatpush1.msra.mxu0 0.0
      %3116 = vmatprep.subr.mxu0 0.0
      %3117 = vmatpush1.msra.mxu0 0.0
      %3118 = vmatprep.subr.mxu0 0.0
      %3119 = vmatpush1.msra.mxu0 0.0
      %3120 = vmatprep.subr.mxu0 0.0
      %3121 = vmatpush1.msra.mxu0 0.0
      %3122 = vmatprep.subr.mxu0 0.0
      %3123 = vmatpush1.msra.mxu0 0.0
      %3124 = vmatprep.subr.mxu0 0.0
      %3125 = vmatpush1.msra.mxu0 0.0
      %3126 = vmatprep.subr.mxu0 0.0
      %3127 = vmatpush1.msra.mxu0 0.0
      %3128 = vmatprep.subr.mxu0 0.0
      %3129 = vmatpush1.msra.mxu0 0.0
      %3130 = vmatprep.subr.mxu0 0.0
      %3131 = vmatpush1.msra.mxu0 0.0
      %3132 = vmatprep.subr.mxu0 0.0
      %3133 = vmatpush1.msra.mxu0 0.0
      %3134 = vmatprep.mubr.f32.mxu0 0.0
      %3135 = vmatmul.mubr.f32.gmra.mrb[0].mxu0 %v3041
      %v3136 = vpop.f32.mrb[0].mxu0
      %v3137 = vadd.f32 0.0, %v3136
      %v3138 = vpop.f32.mrb[0].mxu0
      %3139 = vmatprep.mubr.f32.mxu0 0.0
      %3140 = vmatmul.mubr.f32.gmra.mrb[0].mxu0 %v3044
      %v3141 = vpop.f32.mrb[0].mxu0
      %v3142 = vadd.f32 0.0, %v3141
      %v3143 = vpop.f32.mrb[0].mxu0
      %3144 = vmatprep.mubr.f32.mxu0 0.0
      %3145 = vmatmul.mubr.f32.gmra.mrb[0].mxu0 %v3047
      %v3146 = vpop.f32.mrb[0].mxu0
      %v3147 = vadd.f32 0.0, %v3146
      %v3148 = vpop.f32.mrb[0].mxu0
      %3149 = vmatprep.mubr.f32.mxu0 0.0
      %3150 = vmatmul.mubr.f32.gmra.mrb[0].mxu0 %v3050
      %v3151 = vpop.f32.mrb[0].mxu0
      %v3152 = vadd.f32 0.0, %v3151
      %v3153 = vpop.f32.mrb[0].mxu0
      %3154 = vmatprep.mubr.f32.mxu0 0.0
      %3155 = vmatmul.mubr.f32.gmra.mrb[0].mxu0 %v3053
      %v3156 = vpop.f32.mrb[0].mxu0
      %v3157 = vadd.f32 0.0, %v3156
      %v3158 = vpop.f32.mrb[0].mxu0
      %3159 = vmatprep.mubr.f32.mxu0 0.0
      %3160 = vmatmul.mubr.f32.gmra.mrb[0].mxu0 %v3056
      %v3161 = vpop.f32.mrb[0].mxu0
      %v3162 = vadd.f32 0.0, %v3161
      %v3163 = vpop.f32.mrb[0].mxu0
      %3164 = vmatprep.mubr.f32.mxu0 0.0
      %3165 = vmatmul.mubr.f32.gmra.mrb[0].mxu0 %v3059
      %v3166 = vpop.f32.mrb[0].mxu0
      %v3167 = vadd.f32 0.0, %v3166
      %v3168 = vpop.f32.mrb[0].mxu0
      %3169 = vmatprep.mubr.f32.mxu0 0.0
      %3170 = vmatmul.mubr.f32.gmra.mrb[0].mxu0 %v3062
      %v3171 = vpop.f32.mrb[0].mxu0
      %v3172 = vadd.f32 0.0, %v3171
      %v3173 = vpop.f32.mrb[0].mxu0
      %3174 = vmatprep.mubr.f32.mxu0 0.0
      %3175 = vmatmul.mubr.f32.gmra.mrb[0].mxu0 %v3065
      %v3176 = vpop.f32.mrb[0].mxu0
      %v3177 = vadd.f32 0.0, %v3176
      %v3178 = vpop.f32.mrb[0].mxu0
      %3179 = vmatprep.mubr.f32.mxu0 0.0
      %3180 = vmatmul.mubr.f32.gmra.mrb[0].mxu0 %v3068
      %v3181 = vpop.f32.mrb[0].mxu0
      %v3182 = vadd.f32 0.0, %v3181
      %v3183 = vpop.f32.mrb[0].mxu0
      %3184 = vdwg.mxu0
      %v3185 = vadd.f32 %v3018, %v3137
      %v3186 = vadd.f32 %v3019, %v3142
      %v3187 = vadd.f32 %v3020, %v3147
      %v3188 = vadd.f32 %v3021, %v3152
      %v3189 = vadd.f32 %v3022, %v3157
      %v3190 = vadd.f32 %v3023, %v3162
      %v3191 = vadd.f32 %v3024, %v3167
      %v3192 = vadd.f32 %v3025, %v3172
      %v3193 = vadd.f32 %v3026, %v3177
      %v3194 = vadd.f32 %v3027, %v3182
      %v3195 = vld [vmem:[#allocation3 + $0x15] sm:$0xff]
      %v3196 = vld [vmem:[#allocation3 + $0x1d] sm:$0xff]
      %v3197 = vld [vmem:[#allocation3 + $0x25] sm:$0xff]
      %v3198 = vld [vmem:[#allocation3 + $0x2d] sm:$0xff]
      %v3199 = vld [vmem:[#allocation3 + $0x35] sm:$0xff]
      %v3200 = vld [vmem:[#allocation3 + $0x3d] sm:$0xff]
      %v3201 = vld [vmem:[#allocation3 + $0x45] sm:$0xff]
      %v3202 = vld [vmem:[#allocation3 + $0x4d] sm:$0xff]
      %v3203 = vld [vmem:[#allocation3 + $0x55] sm:$0xff]
      %v3204 = vld [vmem:[#allocation3 + $0x5d] sm:$0xff]
      %s3205 = scalar_lea.vmem %s5, 56
      %v3206 = vld [vmem:[%s3205] sm:$0xff]
      %v3208 = vsel %vm347, %v3195, 0
      %v3211 = vsel %vm347, %v3196, 0
      %v3214 = vsel %vm347, %v3197, 0
      %v3217 = vsel %vm347, %v3198, 0
      %v3220 = vsel %vm347, %v3199, 0
      %v3223 = vsel %vm347, %v3200, 0
      %v3226 = vsel %vm347, %v3201, 0
      %v3229 = vsel %vm347, %v3202, 0
      %v3232 = vsel %vm347, %v3203, 0
      %v3235 = vsel %vm347, %v3204, 0
      %3237 = vmatprep.subr.mxu0 0.0
      %3238 = vmatpush1.msra.mxu0 %v3206
      %3239 = vmatprep.subr.mxu0 0.0
      %3240 = vmatpush1.msra.mxu0 0.0
      %3241 = vmatprep.subr.mxu0 0.0
      %3242 = vmatpush1.msra.mxu0 0.0
      %3243 = vmatprep.subr.mxu0 0.0
      %3244 = vmatpush1.msra.mxu0 0.0
      %3245 = vmatprep.subr.mxu0 0.0
      %3246 = vmatpush1.msra.mxu0 0.0
      %3247 = vmatprep.subr.mxu0 0.0
      %3248 = vmatpush1.msra.mxu0 0.0
      %3249 = vmatprep.subr.mxu0 0.0
      %3250 = vmatpush1.msra.mxu0 0.0
      %3251 = vmatprep.subr.mxu0 0.0
      %3252 = vmatpush1.msra.mxu0 0.0
      %3253 = vmatprep.subr.mxu0 0.0
      %3254 = vmatpush1.msra.mxu0 0.0
      %3255 = vmatprep.subr.mxu0 0.0
      %3256 = vmatpush1.msra.mxu0 0.0
      %3257 = vmatprep.subr.mxu0 0.0
      %3258 = vmatpush1.msra.mxu0 0.0
      %3259 = vmatprep.subr.mxu0 0.0
      %3260 = vmatpush1.msra.mxu0 0.0
      %3261 = vmatprep.subr.mxu0 0.0
      %3262 = vmatpush1.msra.mxu0 0.0
      %3263 = vmatprep.subr.mxu0 0.0
      %3264 = vmatpush1.msra.mxu0 0.0
      %3265 = vmatprep.subr.mxu0 0.0
      %3266 = vmatpush1.msra.mxu0 0.0
      %3267 = vmatprep.subr.mxu0 0.0
      %3268 = vmatpush1.msra.mxu0 0.0
      %3269 = vmatprep.subr.mxu0 0.0
      %3270 = vmatpush1.msra.mxu0 0.0
      %3271 = vmatprep.subr.mxu0 0.0
      %3272 = vmatpush1.msra.mxu0 0.0
      %3273 = vmatprep.subr.mxu0 0.0
      %3274 = vmatpush1.msra.mxu0 0.0
      %3275 = vmatprep.subr.mxu0 0.0
      %3276 = vmatpush1.msra.mxu0 0.0
      %3277 = vmatprep.subr.mxu0 0.0
      %3278 = vmatpush1.msra.mxu0 0.0
      %3279 = vmatprep.subr.mxu0 0.0
      %3280 = vmatpush1.msra.mxu0 0.0
      %3281 = vmatprep.subr.mxu0 0.0
      %3282 = vmatpush1.msra.mxu0 0.0
      %3283 = vmatprep.subr.mxu0 0.0
      %3284 = vmatpush1.msra.mxu0 0.0
      %3285 = vmatprep.subr.mxu0 0.0
      %3286 = vmatpush1.msra.mxu0 0.0
      %3287 = vmatprep.subr.mxu0 0.0
      %3288 = vmatpush1.msra.mxu0 0.0
      %3289 = vmatprep.subr.mxu0 0.0
      %3290 = vmatpush1.msra.mxu0 0.0
      %3291 = vmatprep.subr.mxu0 0.0
      %3292 = vmatpush1.msra.mxu0 0.0
      %3293 = vmatprep.subr.mxu0 0.0
      %3294 = vmatpush1.msra.mxu0 0.0
      %3295 = vmatprep.subr.mxu0 0.0
      %3296 = vmatpush1.msra.mxu0 0.0
      %3297 = vmatprep.subr.mxu0 0.0
      %3298 = vmatpush1.msra.mxu0 0.0
      %3299 = vmatprep.subr.mxu0 0.0
      %3300 = vmatpush1.msra.mxu0 0.0
      %3301 = vmatprep.mubr.f32.mxu0 0.0
      %3302 = vmatmul.mubr.f32.gmra.mrb[0].mxu0 %v3208
      %v3303 = vpop.f32.mrb[0].mxu0
      %v3304 = vadd.f32 0.0, %v3303
      %v3305 = vpop.f32.mrb[0].mxu0
      %3306 = vmatprep.mubr.f32.mxu0 0.0
      %3307 = vmatmul.mubr.f32.gmra.mrb[0].mxu0 %v3211
      %v3308 = vpop.f32.mrb[0].mxu0
      %v3309 = vadd.f32 0.0, %v3308
      %v3310 = vpop.f32.mrb[0].mxu0
      %3311 = vmatprep.mubr.f32.mxu0 0.0
      %3312 = vmatmul.mubr.f32.gmra.mrb[0].mxu0 %v3214
      %v3313 = vpop.f32.mrb[0].mxu0
      %v3314 = vadd.f32 0.0, %v3313
      %v3315 = vpop.f32.mrb[0].mxu0
      %3316 = vmatprep.mubr.f32.mxu0 0.0
      %3317 = vmatmul.mubr.f32.gmra.mrb[0].mxu0 %v3217
      %v3318 = vpop.f32.mrb[0].mxu0
      %v3319 = vadd.f32 0.0, %v3318
      %v3320 = vpop.f32.mrb[0].mxu0
      %3321 = vmatprep.mubr.f32.mxu0 0.0
      %3322 = vmatmul.mubr.f32.gmra.mrb[0].mxu0 %v3220
      %v3323 = vpop.f32.mrb[0].mxu0
      %v3324 = vadd.f32 0.0, %v3323
      %v3325 = vpop.f32.mrb[0].mxu0
      %3326 = vmatprep.mubr.f32.mxu0 0.0
      %3327 = vmatmul.mubr.f32.gmra.mrb[0].mxu0 %v3223
      %v3328 = vpop.f32.mrb[0].mxu0
      %v3329 = vadd.f32 0.0, %v3328
      %v3330 = vpop.f32.mrb[0].mxu0
      %3331 = vmatprep.mubr.f32.mxu0 0.0
      %3332 = vmatmul.mubr.f32.gmra.mrb[0].mxu0 %v3226
      %v3333 = vpop.f32.mrb[0].mxu0
      %v3334 = vadd.f32 0.0, %v3333
      %v3335 = vpop.f32.mrb[0].mxu0
      %3336 = vmatprep.mubr.f32.mxu0 0.0
      %3337 = vmatmul.mubr.f32.gmra.mrb[0].mxu0 %v3229
      %v3338 = vpop.f32.mrb[0].mxu0
      %v3339 = vadd.f32 0.0, %v3338
      %v3340 = vpop.f32.mrb[0].mxu0
      %3341 = vmatprep.mubr.f32.mxu0 0.0
      %3342 = vmatmul.mubr.f32.gmra.mrb[0].mxu0 %v3232
      %v3343 = vpop.f32.mrb[0].mxu0
      %v3344 = vadd.f32 0.0, %v3343
      %v3345 = vpop.f32.mrb[0].mxu0
      %3346 = vmatprep.mubr.f32.mxu0 0.0
      %3347 = vmatmul.mubr.f32.gmra.mrb[0].mxu0 %v3235
      %v3348 = vpop.f32.mrb[0].mxu0
      %v3349 = vadd.f32 0.0, %v3348
      %v3350 = vpop.f32.mrb[0].mxu0
      %3351 = vdwg.mxu0
      %v3352 = vadd.f32 %v3185, %v3304
      %v3353 = vadd.f32 %v3186, %v3309
      %v3354 = vadd.f32 %v3187, %v3314
      %v3355 = vadd.f32 %v3188, %v3319
      %v3356 = vadd.f32 %v3189, %v3324
      %v3357 = vadd.f32 %v3190, %v3329
      %v3358 = vadd.f32 %v3191, %v3334
      %v3359 = vadd.f32 %v3192, %v3339
      %v3360 = vadd.f32 %v3193, %v3344
      %v3361 = vadd.f32 %v3194, %v3349
      %v3362 = vld [vmem:[#allocation3 + $0x16] sm:$0xff]
      %v3363 = vld [vmem:[#allocation3 + $0x1e] sm:$0xff]
      %v3364 = vld [vmem:[#allocation3 + $0x26] sm:$0xff]
      %v3365 = vld [vmem:[#allocation3 + $0x2e] sm:$0xff]
      %v3366 = vld [vmem:[#allocation3 + $0x36] sm:$0xff]
      %v3367 = vld [vmem:[#allocation3 + $0x3e] sm:$0xff]
      %v3368 = vld [vmem:[#allocation3 + $0x46] sm:$0xff]
      %v3369 = vld [vmem:[#allocation3 + $0x4e] sm:$0xff]
      %v3370 = vld [vmem:[#allocation3 + $0x56] sm:$0xff]
      %v3371 = vld [vmem:[#allocation3 + $0x5e] sm:$0xff]
      %s3372 = scalar_lea.vmem %s5, 64
      %v3373 = vld [vmem:[%s3372] sm:$0xff]
      %v3375 = vsel %vm347, %v3362, 0
      %v3378 = vsel %vm347, %v3363, 0
      %v3381 = vsel %vm347, %v3364, 0
      %v3384 = vsel %vm347, %v3365, 0
      %v3387 = vsel %vm347, %v3366, 0
      %v3390 = vsel %vm347, %v3367, 0
      %v3393 = vsel %vm347, %v3368, 0
      %v3396 = vsel %vm347, %v3369, 0
      %v3399 = vsel %vm347, %v3370, 0
      %v3402 = vsel %vm347, %v3371, 0
      %3404 = vmatprep.subr.mxu0 0.0
      %3405 = vmatpush1.msra.mxu0 %v3373
      %3406 = vmatprep.subr.mxu0 0.0
      %3407 = vmatpush1.msra.mxu0 0.0
      %3408 = vmatprep.subr.mxu0 0.0
      %3409 = vmatpush1.msra.mxu0 0.0
      %3410 = vmatprep.subr.mxu0 0.0
      %3411 = vmatpush1.msra.mxu0 0.0
      %3412 = vmatprep.subr.mxu0 0.0
      %3413 = vmatpush1.msra.mxu0 0.0
      %3414 = vmatprep.subr.mxu0 0.0
      %3415 = vmatpush1.msra.mxu0 0.0
      %3416 = vmatprep.subr.mxu0 0.0
      %3417 = vmatpush1.msra.mxu0 0.0
      %3418 = vmatprep.subr.mxu0 0.0
      %3419 = vmatpush1.msra.mxu0 0.0
      %3420 = vmatprep.subr.mxu0 0.0
      %3421 = vmatpush1.msra.mxu0 0.0
      %3422 = vmatprep.subr.mxu0 0.0
      %3423 = vmatpush1.msra.mxu0 0.0
      %3424 = vmatprep.subr.mxu0 0.0
      %3425 = vmatpush1.msra.mxu0 0.0
      %3426 = vmatprep.subr.mxu0 0.0
      %3427 = vmatpush1.msra.mxu0 0.0
      %3428 = vmatprep.subr.mxu0 0.0
      %3429 = vmatpush1.msra.mxu0 0.0
      %3430 = vmatprep.subr.mxu0 0.0
      %3431 = vmatpush1.msra.mxu0 0.0
      %3432 = vmatprep.subr.mxu0 0.0
      %3433 = vmatpush1.msra.mxu0 0.0
      %3434 = vmatprep.subr.mxu0 0.0
      %3435 = vmatpush1.msra.mxu0 0.0
      %3436 = vmatprep.subr.mxu0 0.0
      %3437 = vmatpush1.msra.mxu0 0.0
      %3438 = vmatprep.subr.mxu0 0.0
      %3439 = vmatpush1.msra.mxu0 0.0
      %3440 = vmatprep.subr.mxu0 0.0
      %3441 = vmatpush1.msra.mxu0 0.0
      %3442 = vmatprep.subr.mxu0 0.0
      %3443 = vmatpush1.msra.mxu0 0.0
      %3444 = vmatprep.subr.mxu0 0.0
      %3445 = vmatpush1.msra.mxu0 0.0
      %3446 = vmatprep.subr.mxu0 0.0
      %3447 = vmatpush1.msra.mxu0 0.0
      %3448 = vmatprep.subr.mxu0 0.0
      %3449 = vmatpush1.msra.mxu0 0.0
      %3450 = vmatprep.subr.mxu0 0.0
      %3451 = vmatpush1.msra.mxu0 0.0
      %3452 = vmatprep.subr.mxu0 0.0
      %3453 = vmatpush1.msra.mxu0 0.0
      %3454 = vmatprep.subr.mxu0 0.0
      %3455 = vmatpush1.msra.mxu0 0.0
      %3456 = vmatprep.subr.mxu0 0.0
      %3457 = vmatpush1.msra.mxu0 0.0
      %3458 = vmatprep.subr.mxu0 0.0
      %3459 = vmatpush1.msra.mxu0 0.0
      %3460 = vmatprep.subr.mxu0 0.0
      %3461 = vmatpush1.msra.mxu0 0.0
      %3462 = vmatprep.subr.mxu0 0.0
      %3463 = vmatpush1.msra.mxu0 0.0
      %3464 = vmatprep.subr.mxu0 0.0
      %3465 = vmatpush1.msra.mxu0 0.0
      %3466 = vmatprep.subr.mxu0 0.0
      %3467 = vmatpush1.msra.mxu0 0.0
      %3468 = vmatprep.mubr.f32.mxu0 0.0
      %3469 = vmatmul.mubr.f32.gmra.mrb[0].mxu0 %v3375
      %v3470 = vpop.f32.mrb[0].mxu0
      %v3471 = vadd.f32 0.0, %v3470
      %v3472 = vpop.f32.mrb[0].mxu0
      %3473 = vmatprep.mubr.f32.mxu0 0.0
      %3474 = vmatmul.mubr.f32.gmra.mrb[0].mxu0 %v3378
      %v3475 = vpop.f32.mrb[0].mxu0
      %v3476 = vadd.f32 0.0, %v3475
      %v3477 = vpop.f32.mrb[0].mxu0
      %3478 = vmatprep.mubr.f32.mxu0 0.0
      %3479 = vmatmul.mubr.f32.gmra.mrb[0].mxu0 %v3381
      %v3480 = vpop.f32.mrb[0].mxu0
      %v3481 = vadd.f32 0.0, %v3480
      %v3482 = vpop.f32.mrb[0].mxu0
      %3483 = vmatprep.mubr.f32.mxu0 0.0
      %3484 = vmatmul.mubr.f32.gmra.mrb[0].mxu0 %v3384
      %v3485 = vpop.f32.mrb[0].mxu0
      %v3486 = vadd.f32 0.0, %v3485
      %v3487 = vpop.f32.mrb[0].mxu0
      %3488 = vmatprep.mubr.f32.mxu0 0.0
      %3489 = vmatmul.mubr.f32.gmra.mrb[0].mxu0 %v3387
      %v3490 = vpop.f32.mrb[0].mxu0
      %v3491 = vadd.f32 0.0, %v3490
      %v3492 = vpop.f32.mrb[0].mxu0
      %3493 = vmatprep.mubr.f32.mxu0 0.0
      %3494 = vmatmul.mubr.f32.gmra.mrb[0].mxu0 %v3390
      %v3495 = vpop.f32.mrb[0].mxu0
      %v3496 = vadd.f32 0.0, %v3495
      %v3497 = vpop.f32.mrb[0].mxu0
      %3498 = vmatprep.mubr.f32.mxu0 0.0
      %3499 = vmatmul.mubr.f32.gmra.mrb[0].mxu0 %v3393
      %v3500 = vpop.f32.mrb[0].mxu0
      %v3501 = vadd.f32 0.0, %v3500
      %v3502 = vpop.f32.mrb[0].mxu0
      %3503 = vmatprep.mubr.f32.mxu0 0.0
      %3504 = vmatmul.mubr.f32.gmra.mrb[0].mxu0 %v3396
      %v3505 = vpop.f32.mrb[0].mxu0
      %v3506 = vadd.f32 0.0, %v3505
      %v3507 = vpop.f32.mrb[0].mxu0
      %3508 = vmatprep.mubr.f32.mxu0 0.0
      %3509 = vmatmul.mubr.f32.gmra.mrb[0].mxu0 %v3399
      %v3510 = vpop.f32.mrb[0].mxu0
      %v3511 = vadd.f32 0.0, %v3510
      %v3512 = vpop.f32.mrb[0].mxu0
      %3513 = vmatprep.mubr.f32.mxu0 0.0
      %3514 = vmatmul.mubr.f32.gmra.mrb[0].mxu0 %v3402
      %v3515 = vpop.f32.mrb[0].mxu0
      %v3516 = vadd.f32 0.0, %v3515
      %v3517 = vpop.f32.mrb[0].mxu0
      %3518 = vdwg.mxu0
      %v3519 = vadd.f32 %v3352, %v3471
      %v3520 = vadd.f32 %v3353, %v3476
      %v3521 = vadd.f32 %v3354, %v3481
      %v3522 = vadd.f32 %v3355, %v3486
      %v3523 = vadd.f32 %v3356, %v3491
      %v3524 = vadd.f32 %v3357, %v3496
      %v3525 = vadd.f32 %v3358, %v3501
      %v3526 = vadd.f32 %v3359, %v3506
      %v3527 = vadd.f32 %v3360, %v3511
      %v3528 = vadd.f32 %v3361, %v3516
      %v3529 = vld [vmem:[%s6] sm:$0x1]
      %v3531 = vlaneseq
      %v3532 = vshrl.u32 %v3531, 7
      %v3533 = vsub.s32 0, %v3532
      %v3534 = vrot.slane %v3529, %v3533
      %v3536 = vadd.f32 %v3519, %v3534
      %v3537 = vadd.f32 %v3520, %v3534
      %v3538 = vadd.f32 %v3521, %v3534
      %v3539 = vadd.f32 %v3522, %v3534
      %v3540 = vadd.f32 %v3523, %v3534
      %v3541 = vadd.f32 %v3524, %v3534
      %v3542 = vadd.f32 %v3525, %v3534
      %v3543 = vadd.f32 %v3526, %v3534
      %v3544 = vadd.f32 %v3527, %v3534
      %v3545 = vadd.f32 %v3528, %v3534
      %v3546 = vmax.f32 %v3536, 0.0
      %v3547 = vmax.f32 %v3537, 0.0
      %v3548 = vmax.f32 %v3538, 0.0
      %v3549 = vmax.f32 %v3539, 0.0
      %v3550 = vmax.f32 %v3540, 0.0
      %v3551 = vmax.f32 %v3541, 0.0
      %v3552 = vmax.f32 %v3542, 0.0
      %v3553 = vmax.f32 %v3543, 0.0
      %v3554 = vmax.f32 %v3544, 0.0
      %v3555 = vmax.f32 %v3545, 0.0
      %v3556 = vld [vmem:[%s7] sm:$0x1]
      %v3558 = vlaneseq
      %v3559 = vshrl.u32 %v3558, 7
      %v3560 = vsub.s32 0, %v3559
      %v3561 = vrot.slane %v3556, %v3560
      %v3563 = vmul.f32 %v3546, %v3561
      %v3564 = vmul.f32 %v3547, %v3561
      %v3565 = vmul.f32 %v3548, %v3561
      %v3566 = vmul.f32 %v3549, %v3561
      %v3567 = vmul.f32 %v3550, %v3561
      %v3568 = vmul.f32 %v3551, %v3561
      %v3569 = vmul.f32 %v3552, %v3561
      %v3570 = vmul.f32 %v3553, %v3561
      %v3571 = vmul.f32 %v3554, %v3561
      %v3572 = vmul.f32 %v3555, %v3561
      %v3573 = vld [vmem:[%s8] sm:$0x1]
      %v3575 = vlaneseq
      %v3576 = vshrl.u32 %v3575, 7
      %v3577 = vsub.s32 0, %v3576
      %v3578 = vrot.slane %v3573, %v3577
      %v3580 = vadd.f32 %v3563, %v3578
      %v3581 = vadd.f32 %v3564, %v3578
      %v3582 = vadd.f32 %v3565, %v3578
      %v3583 = vadd.f32 %v3566, %v3578
      %v3584 = vadd.f32 %v3567, %v3578
      %v3585 = vadd.f32 %v3568, %v3578
      %v3586 = vadd.f32 %v3569, %v3578
      %v3587 = vadd.f32 %v3570, %v3578
      %v3588 = vadd.f32 %v3571, %v3578
      %v3589 = vadd.f32 %v3572, %v3578
      %3590 = vst.msk [vmem:[%s332] sm:$0xff] %vm347, %v3580
      %3591 = vst.msk [vmem:[%s332 + $0x8] sm:$0xff] %vm347, %v3581
      %3592 = vst.msk [vmem:[%s332 + $0x10] sm:$0xff] %vm347, %v3582
      %3593 = vst.msk [vmem:[%s332 + $0x18] sm:$0xff] %vm347, %v3583
      %3594 = vst.msk [vmem:[%s332 + $0x20] sm:$0xff] %vm347, %v3584
      %3595 = vst.msk [vmem:[%s332 + $0x28] sm:$0xff] %vm347, %v3585
      %3596 = vst.msk [vmem:[%s332 + $0x30] sm:$0xff] %vm347, %v3586
      %3597 = vst.msk [vmem:[%s332 + $0x38] sm:$0xff] %vm347, %v3587
      %3598 = vst.msk [vmem:[%s332 + $0x40] sm:$0xff] %vm347, %v3588
      %3599 = vst.msk [vmem:[%s332 + $0x48] sm:$0xff] %vm347, %v3589
      %p3600 = scmp.lt.s32.totalorder %s20, 1
      %s3601 = scalar_select %p3600, %s20, 1
      %s3602 = smul.addr %s3601, 10
      %s3603 = smul.addr %s3602, 8
      %s3604 = scalar_lea.vmem %s9, %s3603
      // Predicated region
      $region57: #{tpu_custom_call.1} parent=55 // pred_check
        %p3605 = pneg %p232
      $region58: #{tpu_custom_call.1} parent=55 // pred_check_branch
        %3607 = sbr.rel (%p3605) target = $region60
      $region59: #{tpu_custom_call.1} parent=55 // pred_region
        _
      $region60: #{tpu_custom_call.1} parent=55 // pred_fallthru
        _
    $region56: #{tpu_custom_call.1} parent=5 // pred_fallthru
      _
    %p3608 = scmp.le.s32.totalorder 2, %s15
    // Predicated region
    $region61: #{tpu_custom_call.1} parent=5 // pred_check
      %p3609 = pneg %p3608
    $region62: #{tpu_custom_call.1} parent=5 // pred_check_branch
      %3611 = sbr.rel (%p3609) target = $region64
    $region63: #{tpu_custom_call.1} parent=5 // pred_region
      %s3612 = ssub.s32 %s15, 2
      // Predicated region
      $region65: #{tpu_custom_call.1} parent=63 // pred_check
        %p3613 = pneg %p238
      $region66: #{tpu_custom_call.1} parent=63 // pred_check_branch
        %3615 = sbr.rel (%p3613) target = $region68
      $region67: #{tpu_custom_call.1} parent=63 // pred_region
        %p3616 = scmp.lt.s32.totalorder %s21, 1
        %s3617 = scalar_select %p3616, %s21, 1
        %s3618 = smul.addr %s3617, 10
        %s3619 = smul.addr %s3618, 8
        %s3620 = scalar_lea.vmem %s9, %s3619
      $region68: #{tpu_custom_call.1} parent=63 // pred_fallthru
        _
    $region64: #{tpu_custom_call.1} parent=5 // pred_fallthru
      _
  $region6: #{tpu_custom_call.1} parent=0 // loop_footer
    %s19 = sadd.s32 1, %s15
  $region7: #{tpu_custom_call.1} parent=0 // loop_footer_branch
    %14 = sbr.rel target = $region3
  $region8: #{tpu_custom_call.1} parent=0 // loop_exit
    _

</llo_original>
